<compile_context>
chip_gen: v6e
topology: v6e:2x2x1
jax: 0.10.0
libtpu: 0.0.40
codegen_flags: <defaults>
</compile_context>

<pallas_src>
import functools

import jax
import jax.numpy as jnp
from jax.experimental import pallas as pl
from jax.experimental.pallas import tpu as pltpu


_FCN_CONF = [(12, 6, 6), (8, 4, 4), (5, 2, 2), (3, 1, 1)]   # (kernel, stride, pad)
_FCN_CHANS = [64, 128, 256, 128]


def _conv_out(n, k, s, p):
  return (n + 2 * p - k) // s + 1


# ----------------------------------------------------------------------------
# Fused Pallas kernel: both FCN heads (4 conv+ReLU layers each) + shared SE
# attention + global pool, entirely in VMEM/vregs, single invocation.
# ----------------------------------------------------------------------------
def _fused_fcn_se_kernel(
    p0_ref, w0_ref, b0_ref, w1_ref, b1_ref, w2_ref, b2_ref, w3_ref, b3_ref,
    sew1_ref, sew2_ref,
    o_ref,
    pad1_ref, pad2_ref, pad3_ref,
    *, batch, sp_final, geoms, pool):
  f32 = jnp.float32
  bf16 = jnp.bfloat16

  # Zero the conv-padding scratches once; interior rows are overwritten per
  # head, the padding rows stay zero (they realize the convs' zero padding).
  pad1_ref[...] = jnp.zeros_like(pad1_ref)
  pad2_ref[...] = jnp.zeros_like(pad2_ref)
  pad3_ref[...] = jnp.zeros_like(pad3_ref)

  layer_refs = ((pad1_ref, w1_ref, b1_ref),
                (pad2_ref, w2_ref, b2_ref),
                (pad3_ref, w3_ref, b3_ref))

  feats = []   # final-layer (f32) features per head
  means = []   # per-(head, item) channel means (SE squeeze)
  for h in range(2):                                   # unrolled head loop
    # -- conv layer 0: precomputed im2col @ packed weight, ONE matmul --------
    acc = jnp.dot(p0_ref[h], w0_ref[h], preferred_element_type=f32)
    feat = jnp.maximum(acc + b0_ref[h], 0.0)           # (batch*S0, 64) f32

    # -- conv layers 1..3: strided-slice im2col + ONE big-K matmul per layer --
    for (scr_ref, w_ref, b_ref), (s_in, s_pad, s_out, kk, st, pd) in zip(
        layer_refs, geoms):
      # Stage previous features into the zero-padded scratch, per batch item.
      for b in range(batch):
        scr_ref[pl.ds(b * s_pad + pd, s_in), :] = feat[b * s_in:(b + 1) * s_in, :]
      # Gather the kk kernel taps with strided sublane reads and lane-concat
      # them into the (S_out, kk*Cin) im2col tile (width is degenerate: ow==1).
      item_rows = []
      for b in range(batch):
        cols = []
        for d in range(kk):
          start = b * s_pad + d
          if st == 1:
            cols.append(scr_ref[pl.ds(start, s_out), :])
          else:
            cols.append(scr_ref[pl.ds(start, s_out, stride=st), :])
        item_rows.append(jnp.concatenate(cols, axis=1))
      gathered = jnp.concatenate(item_rows, axis=0).astype(bf16)
      acc = jnp.dot(gathered, w_ref[h], preferred_element_type=f32)
      feat = jnp.maximum(acc + b_ref[h], 0.0)          # (batch*S_out, Cout) f32

    feats.append(feat)                                 # (batch*sp_final, 128)
    for b in range(batch):
      means.append(jnp.mean(feat[b * sp_final:(b + 1) * sp_final, :],
                            axis=0, keepdims=True))    # (1, 128)

  # -- SE attention (shared sa_attn0) for both heads: two tiny bf16 matmuls ---
  sq = jnp.concatenate(means, axis=0).astype(bf16)                  # (2*batch, C)
  hid = jnp.maximum(jnp.dot(sq, sew1_ref[...], preferred_element_type=f32), 0.0)
  gates = jax.nn.sigmoid(
      jnp.dot(hid.astype(bf16), sew2_ref[...], preferred_element_type=f32))

  # -- channel-gate the features and global-pool, per (item, head) -----------
  rows = []
  for b in range(batch):
    parts = []
    for h in range(2):
      g = gates[h * batch + b:h * batch + b + 1, :]                 # (1, C)
      scaled = feats[h][b * sp_final:(b + 1) * sp_final, :] * g
      if pool == "maxpool":
        parts.append(jnp.max(scaled, axis=0, keepdims=True))
      else:                                                         # 'avgpool'
        parts.append(jnp.mean(scaled, axis=0, keepdims=True))
    rows.append(jnp.concatenate(parts, axis=1))                     # (1, 2*C)
  o_ref[...] = jnp.concatenate(rows, axis=0)                        # (batch, 2*C)


# ----------------------------------------------------------------------------
# Plain-JAX glue: layer-0 im2col for all (head, item) streams in one fused op.
# ----------------------------------------------------------------------------
def _layer0_patches(x, nc, patch_size, slide_window):
  """x: (batch, 2, nc*T) -> (heads=2, batch*oh*ow, nc*k*k) layer-0 im2col."""
  batch = x.shape[0]
  ph, pw = patch_size
  hw = ph * pw
  window, stride = int(slide_window[0]), int(slide_window[1])
  t = x.shape[-1] // nc
  xr = x.reshape(batch, 2, nc, t)
  need = hw - (t % hw)                 # PyTorch pads a full block even if divisible
  xp = jnp.pad(xr, ((0, 0), (0, 0), (0, 0), (0, need)))
  nw = (t + need - window) // stride + 1
  wins = jnp.stack([xp[..., i * stride:i * stride + window] for i in range(nw)],
                   axis=3)                             # (B, 2, nc, nw, ws) == unfold
  # torch: (1, c, nw, ws).reshape(nw, c, h, w) is a RAW row-major reshape
  # (it interleaves channels and windows); then rearrange 't c h w -> 1 c (h w) t'.
  grid = wins.reshape(batch, 2, nw, nc, ph, pw)        # raw per-(item, head) reshape
  fcn_in = jnp.transpose(grid, (1, 0, 3, 4, 5, 2)).reshape(2 * batch, nc, hw, nw)

  k, s, p = _FCN_CONF[0]
  patches = jax.lax.conv_general_dilated_patches(
      fcn_in, filter_shape=(k, k), window_strides=(s, s),
      padding=((p, p), (p, p)),
      dimension_numbers=("NCHW", "OIHW", "NCHW"))      # (2B, nc*k*k, oh, ow)
  oh, ow = _conv_out(hw, k, s, p), _conv_out(nw, k, s, p)
  pt = patches.reshape(2, batch, nc * k * k, oh, ow)
  pt = jnp.transpose(pt, (0, 1, 3, 4, 2))              # (2, B, oh, ow, nc*k*k)
  return pt.reshape(2, batch * oh * ow, nc * k * k), oh, ow   # K order = (cin, di, dj)


# ----------------------------------------------------------------------------
# Parameters (PyTorch-layout conv weights, SE FC weights, classifier Linear)
# ----------------------------------------------------------------------------
def init_params(key, nc, nclass, se_reduction=16):
  def fcn_params(key):
    p = {}
    cin = nc
    for li, ((k, _, _), cout) in enumerate(zip(_FCN_CONF, _FCN_CHANS)):
      key, k1, k2 = jax.random.split(key, 3)
      fan_in = cin * k * k
      p[f"conv{li}_w"] = (jax.random.normal(k1, (cout, cin, k, k), jnp.float32)
                          / jnp.sqrt(float(fan_in)))
      p[f"conv{li}_b"] = jax.random.normal(k2, (cout,), jnp.float32) * 0.01
      cin = cout
    return p, key

  params = {}
  params["fcn0"], key = fcn_params(key)      # cnn_repre0
  params["fcn1"], key = fcn_params(key)      # cnn_repre1 (multiscale='twoheadfcn')
  C = _FCN_CHANS[-1]
  key, k1, k2, k3, k4 = jax.random.split(key, 5)
  # TODO(synk): SEAttention source not provided; standard squeeze-excite FC
  # weights (no biases) are used and the 'structure' argument is ignored.
  params["se0_w1"] = jax.random.normal(k1, (C, C // se_reduction), jnp.float32) / jnp.sqrt(float(C))
  params["se0_w2"] = jax.random.normal(k2, (C // se_reduction, C), jnp.float32) / jnp.sqrt(float(C // se_reduction))
  params["cls_w"] = jax.random.normal(k3, (2 * C, nclass), jnp.float32) / jnp.sqrt(float(2 * C))
  params["cls_b"] = jax.random.normal(k4, (nclass,), jnp.float32) * 0.01
  return params


# ----------------------------------------------------------------------------
# Full model forward (MIMSFCN_SEA, multiscale='twoheadfcn')
# ----------------------------------------------------------------------------
def mimsfcn_sea_forward(x, params, *, nc, patch_size, slide_window, globalpool):
  batch = x.shape[0]
  c0, c1, c2, c3 = _FCN_CHANS

  patches0, oh, ow = _layer0_patches(x, nc, patch_size, slide_window)
  # TODO(synk): conv layers 1-3 assume the degenerate width (ow == 1) produced
  # by this (patch_size, slide_window, T) config; a wider layer-0 output would
  # need a 2-D im2col inside the kernel.
  assert ow == 1, "fused kernel assumes a width-1 feature map after conv0"

  # Static 1-D conv geometry of layers 1..3 (height axis only; width stays 1).
  geoms = []
  cins = [c0, c1, c2]
  h_in = oh
  for (k, s, p) in _FCN_CONF[1:]:
    h_out = _conv_out(h_in, k, s, p)
    geoms.append((h_in, h_in + 2 * p, h_out, k, s, p))
    h_in = h_out
  sp_final = h_in

  # Re-pack conv weights per head: layer 0 as (K0, C0); layers 1-3 as ONE
  # big-K (k*Cin, Cout) matrix per layer (tap-major K, matching the in-kernel
  # lane-concatenated im2col).  Only the dj == pad column of the width kernel
  # ever touches the width-1 feature map.
  def head_weights(hp):
    ws = [hp["conv0_w"].reshape(c0, -1).T.astype(jnp.bfloat16)]
    bs = [hp["conv0_b"].reshape(1, -1).astype(jnp.float32)]
    for li, (k, s, p) in enumerate(_FCN_CONF[1:], start=1):
      wt = hp[f"conv{li}_w"][:, :, :, p]                       # (Cout, Cin, k)
      wcat = jnp.transpose(wt, (2, 1, 0)).reshape(k * wt.shape[1], wt.shape[0])
      ws.append(wcat.astype(jnp.bfloat16))
      bs.append(hp[f"conv{li}_b"].reshape(1, -1).astype(jnp.float32))
    return ws, bs

  ws0, bs0 = head_weights(params["fcn0"])
  ws1, bs1 = head_weights(params["fcn1"])
  w_all = [jnp.stack([a, b], axis=0) for a, b in zip(ws0, ws1)]
  b_all = [jnp.stack([a, b], axis=0) for a, b in zip(bs0, bs1)]

  pooled = pl.pallas_call(
      functools.partial(_fused_fcn_se_kernel, batch=batch, sp_final=sp_final,
                        geoms=tuple(geoms), pool=globalpool),
      out_shape=jax.ShapeDtypeStruct((batch, 2 * c3), jnp.float32),
      scratch_shapes=[pltpu.VMEM((batch * g[1], cin), jnp.float32)
                      for g, cin in zip(geoms, cins)],
  )(
      patches0.astype(jnp.bfloat16),
      w_all[0], b_all[0], w_all[1], b_all[1],
      w_all[2], b_all[2], w_all[3], b_all[3],
      params["se0_w1"].astype(jnp.bfloat16),
      params["se0_w2"].astype(jnp.bfloat16),
  )                                              # (batch, 2*128): [head0 | head1]

  # TODO(synk): Dropout(0.5) in the classifier is inference-mode identity; the
  # (batch, 256) @ (256, nclass) Linear is too tiny for a kernel launch.
  logits = pooled @ params["cls_w"] + params["cls_b"]
  return logits
  # NOTE: self.dowm / down_sample_input are defined in __init__ but never used
  # in forward for multiscale='twoheadfcn'; they are intentionally omitted.


if __name__ == "__main__":
  nclass = 2
  nc = 4
  patch_size = (16, 16)                 # h*w = 256
  slide_window = (256, 128)             # window = h*w, stride = h*w/2
  globalpool = "maxpool"
  T = 384                               # per-channel sequence length
  batch = 2

  key = jax.random.PRNGKey(0)
  key, pkey, xkey = jax.random.split(key, 3)
  params = init_params(pkey, nc, nclass)

  # x[i] = (flat pair), each flat vector of length nc*T, as in the PyTorch forward.
  x = jax.random.normal(xkey, (batch, 2, nc * T), jnp.float32)

  fwd = jax.jit(functools.partial(
      mimsfcn_sea_forward,
      nc=nc, patch_size=patch_size, slide_window=slide_window,
      globalpool=globalpool))

  logits = fwd(x, params)
  jax.block_until_ready(logits)
  assert logits.shape == (batch, nclass), logits.shape
  assert bool(jnp.all(jnp.isfinite(logits)))
  print("KERNEL_OK")
</pallas_src>

<mosaic_0001>
module attributes {stable_mosaic.version = 11 : i64} {
  func.func @_fused_fcn_se_kernel(%arg0: memref<2x86x576xbf16, #tpu.memory_space<vmem>>, %arg1: memref<2x576x64xbf16, #tpu.memory_space<vmem>>, %arg2: memref<2x1x64xf32, #tpu.memory_space<vmem>>, %arg3: memref<2x512x128xbf16, #tpu.memory_space<vmem>>, %arg4: memref<2x1x128xf32, #tpu.memory_space<vmem>>, %arg5: memref<2x640x256xbf16, #tpu.memory_space<vmem>>, %arg6: memref<2x1x256xf32, #tpu.memory_space<vmem>>, %arg7: memref<2x768x128xbf16, #tpu.memory_space<vmem>>, %arg8: memref<2x1x128xf32, #tpu.memory_space<vmem>>, %arg9: memref<128x8xbf16, #tpu.memory_space<vmem>>, %arg10: memref<8x128xbf16, #tpu.memory_space<vmem>>, %arg11: memref<2x256xf32, #tpu.memory_space<vmem>>, %arg12: memref<102x64xf32, #tpu.memory_space<vmem>>, %arg13: memref<30x128xf32, #tpu.memory_space<vmem>>, %arg14: memref<16x256xf32, #tpu.memory_space<vmem>>) attributes {dimension_semantics = [], scalar_prefetch = 0 : i64, scratch_operands = 3 : i64, tpu.core_type = #tpu.core_type<tc>} {
    %cst = arith.constant 0.000000e+00 : f32
    %0 = vector.broadcast %cst : f32 to vector<102x64xf32>
    %c0 = arith.constant 0 : index
    %c0_0 = arith.constant 0 : index
    %1 = vector.load %arg12[%c0, %c0_0] : memref<102x64xf32, #tpu.memory_space<vmem>>, vector<102x64xf32>
    tpu.vector_store %arg12[%c0, %c0_0], %0 {strides = array<i32>} : memref<102x64xf32, #tpu.memory_space<vmem>>, vector<102x64xf32>,
    %cst_1 = arith.constant 0.000000e+00 : f32
    %2 = vector.broadcast %cst_1 : f32 to vector<30x128xf32>
    %c0_2 = arith.constant 0 : index
    %c0_3 = arith.constant 0 : index
    %3 = vector.load %arg13[%c0_2, %c0_3] : memref<30x128xf32, #tpu.memory_space<vmem>>, vector<30x128xf32>
    tpu.vector_store %arg13[%c0_2, %c0_3], %2 {strides = array<i32>} : memref<30x128xf32, #tpu.memory_space<vmem>>, vector<30x128xf32>,
    %cst_4 = arith.constant 0.000000e+00 : f32
    %4 = vector.broadcast %cst_4 : f32 to vector<16x256xf32>
    %c0_5 = arith.constant 0 : index
    %c0_6 = arith.constant 0 : index
    %5 = vector.load %arg14[%c0_5, %c0_6] : memref<16x256xf32, #tpu.memory_space<vmem>>, vector<16x256xf32>
    tpu.vector_store %arg14[%c0_5, %c0_6], %4 {strides = array<i32>} : memref<16x256xf32, #tpu.memory_space<vmem>>, vector<16x256xf32>,
    %c0_7 = arith.constant 0 : index
    %c0_8 = arith.constant 0 : index
    %c0_9 = arith.constant 0 : index
    %6 = vector.load %arg0[%c0_7, %c0_8, %c0_9] : memref<2x86x576xbf16, #tpu.memory_space<vmem>>, vector<1x86x576xbf16>
    %7 = vector.shape_cast %6 : vector<1x86x576xbf16> to vector<86x576xbf16>
    %c0_10 = arith.constant 0 : index
    %c0_11 = arith.constant 0 : index
    %c0_12 = arith.constant 0 : index
    %8 = vector.load %arg1[%c0_10, %c0_11, %c0_12] : memref<2x576x64xbf16, #tpu.memory_space<vmem>>, vector<1x576x64xbf16>
    %9 = vector.shape_cast %8 : vector<1x576x64xbf16> to vector<576x64xbf16>
    %cst_13 = arith.constant dense<0.000000e+00> : vector<86x64xf32>
    %10 = tpu.matmul %7, %9, %cst_13 {dimension_numbers = #tpu.dot_dimension_numbers<[1], [0], [0], [1], [0, 0, 1, 1], [], []>} : vector<86x576xbf16>, vector<576x64xbf16>, vector<86x64xf32> -> vector<86x64xf32>
    %c0_14 = arith.constant 0 : index
    %c0_15 = arith.constant 0 : index
    %c0_16 = arith.constant 0 : index
    %11 = vector.load %arg2[%c0_14, %c0_15, %c0_16] : memref<2x1x64xf32, #tpu.memory_space<vmem>>, vector<1x1x64xf32>
    %12 = vector.shape_cast %11 : vector<1x1x64xf32> to vector<1x64xf32>
    %13 = vector.broadcast %12 : vector<1x64xf32> to vector<86x64xf32>
    %14 = arith.addf %10, %13 : vector<86x64xf32>
    %cst_17 = arith.constant 0.000000e+00 : f32
    %15 = vector.broadcast %cst_17 : f32 to vector<86x64xf32>
    %16 = arith.maximumf %14, %15 : vector<86x64xf32>
    %17 = vector.extract_strided_slice %16 {offsets = [0, 0], sizes = [43, 64], strides = [1, 1]} : vector<86x64xf32> to vector<43x64xf32>
    %c4 = arith.constant 4 : index
    %c0_18 = arith.constant 0 : index
    %18 = vector.load %arg12[%c4, %c0_18] : memref<102x64xf32, #tpu.memory_space<vmem>>, vector<43x64xf32>
    tpu.vector_store %arg12[%c4, %c0_18], %17 {strides = array<i32>} : memref<102x64xf32, #tpu.memory_space<vmem>>, vector<43x64xf32>,
    %19 = vector.extract_strided_slice %16 {offsets = [43, 0], sizes = [43, 64], strides = [1, 1]} : vector<86x64xf32> to vector<43x64xf32>
    %c55 = arith.constant 55 : index
    %c0_19 = arith.constant 0 : index
    %20 = vector.load %arg12[%c55, %c0_19] : memref<102x64xf32, #tpu.memory_space<vmem>>, vector<43x64xf32>
    tpu.vector_store %arg12[%c55, %c0_19], %19 {strides = array<i32>} : memref<102x64xf32, #tpu.memory_space<vmem>>, vector<43x64xf32>,
    %c0_20 = arith.constant 0 : index
    %c0_21 = arith.constant 0 : index
    %21 = tpu.strided_load %arg12[%c0_20, %c0_21] {strides = array<i32: 4, 1>} : memref<102x64xf32, #tpu.memory_space<vmem>>, vector<11x64xf32>
    %c1 = arith.constant 1 : index
    %c0_22 = arith.constant 0 : index
    %22 = tpu.strided_load %arg12[%c1, %c0_22] {strides = array<i32: 4, 1>} : memref<102x64xf32, #tpu.memory_space<vmem>>, vector<11x64xf32>
    %c2 = arith.constant 2 : index
    %c0_23 = arith.constant 0 : index
    %23 = tpu.strided_load %arg12[%c2, %c0_23] {strides = array<i32: 4, 1>} : memref<102x64xf32, #tpu.memory_space<vmem>>, vector<11x64xf32>
    %c3 = arith.constant 3 : index
    %c0_24 = arith.constant 0 : index
    %24 = tpu.strided_load %arg12[%c3, %c0_24] {strides = array<i32: 4, 1>} : memref<102x64xf32, #tpu.memory_space<vmem>>, vector<11x64xf32>
    %c4_25 = arith.constant 4 : index
    %c0_26 = arith.constant 0 : index
    %25 = tpu.strided_load %arg12[%c4_25, %c0_26] {strides = array<i32: 4, 1>} : memref<102x64xf32, #tpu.memory_space<vmem>>, vector<11x64xf32>
    %c5 = arith.constant 5 : index
    %c0_27 = arith.constant 0 : index
    %26 = tpu.strided_load %arg12[%c5, %c0_27] {strides = array<i32: 4, 1>} : memref<102x64xf32, #tpu.memory_space<vmem>>, vector<11x64xf32>
    %c6 = arith.constant 6 : index
    %c0_28 = arith.constant 0 : index
    %27 = tpu.strided_load %arg12[%c6, %c0_28] {strides = array<i32: 4, 1>} : memref<102x64xf32, #tpu.memory_space<vmem>>, vector<11x64xf32>
    %c7 = arith.constant 7 : index
    %c0_29 = arith.constant 0 : index
    %28 = tpu.strided_load %arg12[%c7, %c0_29] {strides = array<i32: 4, 1>} : memref<102x64xf32, #tpu.memory_space<vmem>>, vector<11x64xf32>
    %29 = tpu.concatenate %21, %22, %23, %24, %25, %26, %27, %28 in 1 : vector<11x64xf32>, vector<11x64xf32>, vector<11x64xf32>, vector<11x64xf32>, vector<11x64xf32>, vector<11x64xf32>, vector<11x64xf32>, vector<11x64xf32> -> vector<11x512xf32>
    %c51 = arith.constant 51 : index
    %c0_30 = arith.constant 0 : index
    %30 = tpu.strided_load %arg12[%c51, %c0_30] {strides = array<i32: 4, 1>} : memref<102x64xf32, #tpu.memory_space<vmem>>, vector<11x64xf32>
    %c52 = arith.constant 52 : index
    %c0_31 = arith.constant 0 : index
    %31 = tpu.strided_load %arg12[%c52, %c0_31] {strides = array<i32: 4, 1>} : memref<102x64xf32, #tpu.memory_space<vmem>>, vector<11x64xf32>
    %c53 = arith.constant 53 : index
    %c0_32 = arith.constant 0 : index
    %32 = tpu.strided_load %arg12[%c53, %c0_32] {strides = array<i32: 4, 1>} : memref<102x64xf32, #tpu.memory_space<vmem>>, vector<11x64xf32>
    %c54 = arith.constant 54 : index
    %c0_33 = arith.constant 0 : index
    %33 = tpu.strided_load %arg12[%c54, %c0_33] {strides = array<i32: 4, 1>} : memref<102x64xf32, #tpu.memory_space<vmem>>, vector<11x64xf32>
    %c55_34 = arith.constant 55 : index
    %c0_35 = arith.constant 0 : index
    %34 = tpu.strided_load %arg12[%c55_34, %c0_35] {strides = array<i32: 4, 1>} : memref<102x64xf32, #tpu.memory_space<vmem>>, vector<11x64xf32>
    %c56 = arith.constant 56 : index
    %c0_36 = arith.constant 0 : index
    %35 = tpu.strided_load %arg12[%c56, %c0_36] {strides = array<i32: 4, 1>} : memref<102x64xf32, #tpu.memory_space<vmem>>, vector<11x64xf32>
    %c57 = arith.constant 57 : index
    %c0_37 = arith.constant 0 : index
    %36 = tpu.strided_load %arg12[%c57, %c0_37] {strides = array<i32: 4, 1>} : memref<102x64xf32, #tpu.memory_space<vmem>>, vector<11x64xf32>
    %c58 = arith.constant 58 : index
    %c0_38 = arith.constant 0 : index
    %37 = tpu.strided_load %arg12[%c58, %c0_38] {strides = array<i32: 4, 1>} : memref<102x64xf32, #tpu.memory_space<vmem>>, vector<11x64xf32>
    %38 = tpu.concatenate %30, %31, %32, %33, %34, %35, %36, %37 in 1 : vector<11x64xf32>, vector<11x64xf32>, vector<11x64xf32>, vector<11x64xf32>, vector<11x64xf32>, vector<11x64xf32>, vector<11x64xf32>, vector<11x64xf32> -> vector<11x512xf32>
    %39 = tpu.concatenate %29, %38 in 0 : vector<11x512xf32>, vector<11x512xf32> -> vector<22x512xf32>
    %40 = arith.truncf %39 : vector<22x512xf32> to vector<22x512xbf16>
    %c0_39 = arith.constant 0 : index
    %c0_40 = arith.constant 0 : index
    %c0_41 = arith.constant 0 : index
    %41 = vector.load %arg3[%c0_39, %c0_40, %c0_41] : memref<2x512x128xbf16, #tpu.memory_space<vmem>>, vector<1x512x128xbf16>
    %42 = vector.shape_cast %41 : vector<1x512x128xbf16> to vector<512x128xbf16>
    %cst_42 = arith.constant dense<0.000000e+00> : vector<22x128xf32>
    %43 = tpu.matmul %40, %42, %cst_42 {dimension_numbers = #tpu.dot_dimension_numbers<[1], [0], [0], [1], [0, 0, 1, 1], [], []>} : vector<22x512xbf16>, vector<512x128xbf16>, vector<22x128xf32> -> vector<22x128xf32>
    %c0_43 = arith.constant 0 : index
    %c0_44 = arith.constant 0 : index
    %c0_45 = arith.constant 0 : index
    %44 = vector.load %arg4[%c0_43, %c0_44, %c0_45] : memref<2x1x128xf32, #tpu.memory_space<vmem>>, vector<1x1x128xf32>
    %45 = vector.shape_cast %44 : vector<1x1x128xf32> to vector<1x128xf32>
    %46 = vector.broadcast %45 : vector<1x128xf32> to vector<22x128xf32>
    %47 = arith.addf %43, %46 : vector<22x128xf32>
    %cst_46 = arith.constant 0.000000e+00 : f32
    %48 = vector.broadcast %cst_46 : f32 to vector<22x128xf32>
    %49 = arith.maximumf %47, %48 : vector<22x128xf32>
    %50 = vector.extract_strided_slice %49 {offsets = [0, 0], sizes = [11, 128], strides = [1, 1]} : vector<22x128xf32> to vector<11x128xf32>
    %c2_47 = arith.constant 2 : index
    %c0_48 = arith.constant 0 : index
    %51 = vector.load %arg13[%c2_47, %c0_48] : memref<30x128xf32, #tpu.memory_space<vmem>>, vector<11x128xf32>
    tpu.vector_store %arg13[%c2_47, %c0_48], %50 {strides = array<i32>} : memref<30x128xf32, #tpu.memory_space<vmem>>, vector<11x128xf32>,
    %52 = vector.extract_strided_slice %49 {offsets = [11, 0], sizes = [11, 128], strides = [1, 1]} : vector<22x128xf32> to vector<11x128xf32>
    %c17 = arith.constant 17 : index
    %c0_49 = arith.constant 0 : index
    %53 = vector.load %arg13[%c17, %c0_49] : memref<30x128xf32, #tpu.memory_space<vmem>>, vector<11x128xf32>
    tpu.vector_store %arg13[%c17, %c0_49], %52 {strides = array<i32>} : memref<30x128xf32, #tpu.memory_space<vmem>>, vector<11x128xf32>,
    %c0_50 = arith.constant 0 : index
    %c0_51 = arith.constant 0 : index
    %54 = tpu.strided_load %arg13[%c0_50, %c0_51] {strides = array<i32: 2, 1>} : memref<30x128xf32, #tpu.memory_space<vmem>>, vector<6x128xf32>
    %c1_52 = arith.constant 1 : index
    %c0_53 = arith.constant 0 : index
    %55 = tpu.strided_load %arg13[%c1_52, %c0_53] {strides = array<i32: 2, 1>} : memref<30x128xf32, #tpu.memory_space<vmem>>, vector<6x128xf32>
    %c2_54 = arith.constant 2 : index
    %c0_55 = arith.constant 0 : index
    %56 = tpu.strided_load %arg13[%c2_54, %c0_55] {strides = array<i32: 2, 1>} : memref<30x128xf32, #tpu.memory_space<vmem>>, vector<6x128xf32>
    %c3_56 = arith.constant 3 : index
    %c0_57 = arith.constant 0 : index
    %57 = tpu.strided_load %arg13[%c3_56, %c0_57] {strides = array<i32: 2, 1>} : memref<30x128xf32, #tpu.memory_space<vmem>>, vector<6x128xf32>
    %c4_58 = arith.constant 4 : index
    %c0_59 = arith.constant 0 : index
    %58 = tpu.strided_load %arg13[%c4_58, %c0_59] {strides = array<i32: 2, 1>} : memref<30x128xf32, #tpu.memory_space<vmem>>, vector<6x128xf32>
    %59 = tpu.concatenate %54, %55, %56, %57, %58 in 1 : vector<6x128xf32>, vector<6x128xf32>, vector<6x128xf32>, vector<6x128xf32>, vector<6x128xf32> -> vector<6x640xf32>
    %c15 = arith.constant 15 : index
    %c0_60 = arith.constant 0 : index
    %60 = tpu.strided_load %arg13[%c15, %c0_60] {strides = array<i32: 2, 1>} : memref<30x128xf32, #tpu.memory_space<vmem>>, vector<6x128xf32>
    %c16 = arith.constant 16 : index
    %c0_61 = arith.constant 0 : index
    %61 = tpu.strided_load %arg13[%c16, %c0_61] {strides = array<i32: 2, 1>} : memref<30x128xf32, #tpu.memory_space<vmem>>, vector<6x128xf32>
    %c17_62 = arith.constant 17 : index
    %c0_63 = arith.constant 0 : index
    %62 = tpu.strided_load %arg13[%c17_62, %c0_63] {strides = array<i32: 2, 1>} : memref<30x128xf32, #tpu.memory_space<vmem>>, vector<6x128xf32>
    %c18 = arith.constant 18 : index
    %c0_64 = arith.constant 0 : index
    %63 = tpu.strided_load %arg13[%c18, %c0_64] {strides = array<i32: 2, 1>} : memref<30x128xf32, #tpu.memory_space<vmem>>, vector<6x128xf32>
    %c19 = arith.constant 19 : index
    %c0_65 = arith.constant 0 : index
    %64 = tpu.strided_load %arg13[%c19, %c0_65] {strides = array<i32: 2, 1>} : memref<30x128xf32, #tpu.memory_space<vmem>>, vector<6x128xf32>
    %65 = tpu.concatenate %60, %61, %62, %63, %64 in 1 : vector<6x128xf32>, vector<6x128xf32>, vector<6x128xf32>, vector<6x128xf32>, vector<6x128xf32> -> vector<6x640xf32>
    %66 = tpu.concatenate %59, %65 in 0 : vector<6x640xf32>, vector<6x640xf32> -> vector<12x640xf32>
    %67 = arith.truncf %66 : vector<12x640xf32> to vector<12x640xbf16>
    %c0_66 = arith.constant 0 : index
    %c0_67 = arith.constant 0 : index
    %c0_68 = arith.constant 0 : index
    %68 = vector.load %arg5[%c0_66, %c0_67, %c0_68] : memref<2x640x256xbf16, #tpu.memory_space<vmem>>, vector<1x640x256xbf16>
    %69 = vector.shape_cast %68 : vector<1x640x256xbf16> to vector<640x256xbf16>
    %cst_69 = arith.constant dense<0.000000e+00> : vector<12x256xf32>
    %70 = tpu.matmul %67, %69, %cst_69 {dimension_numbers = #tpu.dot_dimension_numbers<[1], [0], [0], [1], [0, 0, 1, 1], [], []>} : vector<12x640xbf16>, vector<640x256xbf16>, vector<12x256xf32> -> vector<12x256xf32>
    %c0_70 = arith.constant 0 : index
    %c0_71 = arith.constant 0 : index
    %c0_72 = arith.constant 0 : index
    %71 = vector.load %arg6[%c0_70, %c0_71, %c0_72] : memref<2x1x256xf32, #tpu.memory_space<vmem>>, vector<1x1x256xf32>
    %72 = vector.shape_cast %71 : vector<1x1x256xf32> to vector<1x256xf32>
    %73 = vector.broadcast %72 : vector<1x256xf32> to vector<12x256xf32>
    %74 = arith.addf %70, %73 : vector<12x256xf32>
    %cst_73 = arith.constant 0.000000e+00 : f32
    %75 = vector.broadcast %cst_73 : f32 to vector<12x256xf32>
    %76 = arith.maximumf %74, %75 : vector<12x256xf32>
    %77 = vector.extract_strided_slice %76 {offsets = [0, 0], sizes = [6, 256], strides = [1, 1]} : vector<12x256xf32> to vector<6x256xf32>
    %c1_74 = arith.constant 1 : index
    %c0_75 = arith.constant 0 : index
    %78 = vector.load %arg14[%c1_74, %c0_75] : memref<16x256xf32, #tpu.memory_space<vmem>>, vector<6x256xf32>
    tpu.vector_store %arg14[%c1_74, %c0_75], %77 {strides = array<i32>} : memref<16x256xf32, #tpu.memory_space<vmem>>, vector<6x256xf32>,
    %79 = vector.extract_strided_slice %76 {offsets = [6, 0], sizes = [6, 256], strides = [1, 1]} : vector<12x256xf32> to vector<6x256xf32>
    %c9 = arith.constant 9 : index
    %c0_76 = arith.constant 0 : index
    %80 = vector.load %arg14[%c9, %c0_76] : memref<16x256xf32, #tpu.memory_space<vmem>>, vector<6x256xf32>
    tpu.vector_store %arg14[%c9, %c0_76], %79 {strides = array<i32>} : memref<16x256xf32, #tpu.memory_space<vmem>>, vector<6x256xf32>,
    %c0_77 = arith.constant 0 : index
    %c0_78 = arith.constant 0 : index
    %81 = vector.load %arg14[%c0_77, %c0_78] : memref<16x256xf32, #tpu.memory_space<vmem>>, vector<6x256xf32>
    %c1_79 = arith.constant 1 : index
    %c0_80 = arith.constant 0 : index
    %82 = vector.load %arg14[%c1_79, %c0_80] : memref<16x256xf32, #tpu.memory_space<vmem>>, vector<6x256xf32>
    %c2_81 = arith.constant 2 : index
    %c0_82 = arith.constant 0 : index
    %83 = vector.load %arg14[%c2_81, %c0_82] : memref<16x256xf32, #tpu.memory_space<vmem>>, vector<6x256xf32>
    %84 = tpu.concatenate %81, %82, %83 in 1 : vector<6x256xf32>, vector<6x256xf32>, vector<6x256xf32> -> vector<6x768xf32>
    %c8 = arith.constant 8 : index
    %c0_83 = arith.constant 0 : index
    %85 = vector.load %arg14[%c8, %c0_83] : memref<16x256xf32, #tpu.memory_space<vmem>>, vector<6x256xf32>
    %c9_84 = arith.constant 9 : index
    %c0_85 = arith.constant 0 : index
    %86 = vector.load %arg14[%c9_84, %c0_85] : memref<16x256xf32, #tpu.memory_space<vmem>>, vector<6x256xf32>
    %c10 = arith.constant 10 : index
    %c0_86 = arith.constant 0 : index
    %87 = vector.load %arg14[%c10, %c0_86] : memref<16x256xf32, #tpu.memory_space<vmem>>, vector<6x256xf32>
    %88 = tpu.concatenate %85, %86, %87 in 1 : vector<6x256xf32>, vector<6x256xf32>, vector<6x256xf32> -> vector<6x768xf32>
    %89 = tpu.concatenate %84, %88 in 0 : vector<6x768xf32>, vector<6x768xf32> -> vector<12x768xf32>
    %90 = arith.truncf %89 : vector<12x768xf32> to vector<12x768xbf16>
    %c0_87 = arith.constant 0 : index
    %c0_88 = arith.constant 0 : index
    %c0_89 = arith.constant 0 : index
    %91 = vector.load %arg7[%c0_87, %c0_88, %c0_89] : memref<2x768x128xbf16, #tpu.memory_space<vmem>>, vector<1x768x128xbf16>
    %92 = vector.shape_cast %91 : vector<1x768x128xbf16> to vector<768x128xbf16>
    %cst_90 = arith.constant dense<0.000000e+00> : vector<12x128xf32>
    %93 = tpu.matmul %90, %92, %cst_90 {dimension_numbers = #tpu.dot_dimension_numbers<[1], [0], [0], [1], [0, 0, 1, 1], [], []>} : vector<12x768xbf16>, vector<768x128xbf16>, vector<12x128xf32> -> vector<12x128xf32>
    %c0_91 = arith.constant 0 : index
    %c0_92 = arith.constant 0 : index
    %c0_93 = arith.constant 0 : index
    %94 = vector.load %arg8[%c0_91, %c0_92, %c0_93] : memref<2x1x128xf32, #tpu.memory_space<vmem>>, vector<1x1x128xf32>
    %95 = vector.shape_cast %94 : vector<1x1x128xf32> to vector<1x128xf32>
    %96 = vector.broadcast %95 : vector<1x128xf32> to vector<12x128xf32>
    %97 = arith.addf %93, %96 : vector<12x128xf32>
    %cst_94 = arith.constant 0.000000e+00 : f32
    %98 = vector.broadcast %cst_94 : f32 to vector<12x128xf32>
    %99 = arith.maximumf %97, %98 : vector<12x128xf32>
    %100 = vector.extract_strided_slice %99 {offsets = [0, 0], sizes = [6, 128], strides = [1, 1]} : vector<12x128xf32> to vector<6x128xf32>
    %cst_95 = arith.constant dense<0.000000e+00> : vector<128xf32>
    %101 = vector.multi_reduction <add>, %100, %cst_95 [0] : vector<6x128xf32> to vector<128xf32>
    %102 = vector.shape_cast %101 : vector<128xf32> to vector<1x128xf32>
    %cst_96 = arith.constant 6.000000e+00 : f32
    %103 = vector.broadcast %cst_96 : f32 to vector<1x128xf32>
    %104 = arith.divf %102, %103 : vector<1x128xf32>
    %105 = vector.extract_strided_slice %99 {offsets = [6, 0], sizes = [6, 128], strides = [1, 1]} : vector<12x128xf32> to vector<6x128xf32>
    %cst_97 = arith.constant dense<0.000000e+00> : vector<128xf32>
    %106 = vector.multi_reduction <add>, %105, %cst_97 [0] : vector<6x128xf32> to vector<128xf32>
    %107 = vector.shape_cast %106 : vector<128xf32> to vector<1x128xf32>
    %cst_98 = arith.constant 6.000000e+00 : f32
    %108 = vector.broadcast %cst_98 : f32 to vector<1x128xf32>
    %109 = arith.divf %107, %108 : vector<1x128xf32>
    %c1_99 = arith.constant 1 : index
    %c0_100 = arith.constant 0 : index
    %c0_101 = arith.constant 0 : index
    %110 = vector.load %arg0[%c1_99, %c0_100, %c0_101] : memref<2x86x576xbf16, #tpu.memory_space<vmem>>, vector<1x86x576xbf16>
    %111 = vector.shape_cast %110 : vector<1x86x576xbf16> to vector<86x576xbf16>
    %c1_102 = arith.constant 1 : index
    %c0_103 = arith.constant 0 : index
    %c0_104 = arith.constant 0 : index
    %112 = vector.load %arg1[%c1_102, %c0_103, %c0_104] : memref<2x576x64xbf16, #tpu.memory_space<vmem>>, vector<1x576x64xbf16>
    %113 = vector.shape_cast %112 : vector<1x576x64xbf16> to vector<576x64xbf16>
    %cst_105 = arith.constant dense<0.000000e+00> : vector<86x64xf32>
    %114 = tpu.matmul %111, %113, %cst_105 {dimension_numbers = #tpu.dot_dimension_numbers<[1], [0], [0], [1], [0, 0, 1, 1], [], []>} : vector<86x576xbf16>, vector<576x64xbf16>, vector<86x64xf32> -> vector<86x64xf32>
    %c1_106 = arith.constant 1 : index
    %c0_107 = arith.constant 0 : index
    %c0_108 = arith.constant 0 : index
    %115 = vector.load %arg2[%c1_106, %c0_107, %c0_108] : memref<2x1x64xf32, #tpu.memory_space<vmem>>, vector<1x1x64xf32>
    %116 = vector.shape_cast %115 : vector<1x1x64xf32> to vector<1x64xf32>
    %117 = vector.broadcast %116 : vector<1x64xf32> to vector<86x64xf32>
    %118 = arith.addf %114, %117 : vector<86x64xf32>
    %cst_109 = arith.constant 0.000000e+00 : f32
    %119 = vector.broadcast %cst_109 : f32 to vector<86x64xf32>
    %120 = arith.maximumf %118, %119 : vector<86x64xf32>
    %121 = vector.extract_strided_slice %120 {offsets = [0, 0], sizes = [43, 64], strides = [1, 1]} : vector<86x64xf32> to vector<43x64xf32>
    %c4_110 = arith.constant 4 : index
    %c0_111 = arith.constant 0 : index
    %122 = vector.load %arg12[%c4_110, %c0_111] : memref<102x64xf32, #tpu.memory_space<vmem>>, vector<43x64xf32>
    tpu.vector_store %arg12[%c4_110, %c0_111], %121 {strides = array<i32>} : memref<102x64xf32, #tpu.memory_space<vmem>>, vector<43x64xf32>,
    %123 = vector.extract_strided_slice %120 {offsets = [43, 0], sizes = [43, 64], strides = [1, 1]} : vector<86x64xf32> to vector<43x64xf32>
    %c55_112 = arith.constant 55 : index
    %c0_113 = arith.constant 0 : index
    %124 = vector.load %arg12[%c55_112, %c0_113] : memref<102x64xf32, #tpu.memory_space<vmem>>, vector<43x64xf32>
    tpu.vector_store %arg12[%c55_112, %c0_113], %123 {strides = array<i32>} : memref<102x64xf32, #tpu.memory_space<vmem>>, vector<43x64xf32>,
    %c0_114 = arith.constant 0 : index
    %c0_115 = arith.constant 0 : index
    %125 = tpu.strided_load %arg12[%c0_114, %c0_115] {strides = array<i32: 4, 1>} : memref<102x64xf32, #tpu.memory_space<vmem>>, vector<11x64xf32>
    %c1_116 = arith.constant 1 : index
    %c0_117 = arith.constant 0 : index
    %126 = tpu.strided_load %arg12[%c1_116, %c0_117] {strides = array<i32: 4, 1>} : memref<102x64xf32, #tpu.memory_space<vmem>>, vector<11x64xf32>
    %c2_118 = arith.constant 2 : index
    %c0_119 = arith.constant 0 : index
    %127 = tpu.strided_load %arg12[%c2_118, %c0_119] {strides = array<i32: 4, 1>} : memref<102x64xf32, #tpu.memory_space<vmem>>, vector<11x64xf32>
    %c3_120 = arith.constant 3 : index
    %c0_121 = arith.constant 0 : index
    %128 = tpu.strided_load %arg12[%c3_120, %c0_121] {strides = array<i32: 4, 1>} : memref<102x64xf32, #tpu.memory_space<vmem>>, vector<11x64xf32>
    %c4_122 = arith.constant 4 : index
    %c0_123 = arith.constant 0 : index
    %129 = tpu.strided_load %arg12[%c4_122, %c0_123] {strides = array<i32: 4, 1>} : memref<102x64xf32, #tpu.memory_space<vmem>>, vector<11x64xf32>
    %c5_124 = arith.constant 5 : index
    %c0_125 = arith.constant 0 : index
    %130 = tpu.strided_load %arg12[%c5_124, %c0_125] {strides = array<i32: 4, 1>} : memref<102x64xf32, #tpu.memory_space<vmem>>, vector<11x64xf32>
    %c6_126 = arith.constant 6 : index
    %c0_127 = arith.constant 0 : index
    %131 = tpu.strided_load %arg12[%c6_126, %c0_127] {strides = array<i32: 4, 1>} : memref<102x64xf32, #tpu.memory_space<vmem>>, vector<11x64xf32>
    %c7_128 = arith.constant 7 : index
    %c0_129 = arith.constant 0 : index
    %132 = tpu.strided_load %arg12[%c7_128, %c0_129] {strides = array<i32: 4, 1>} : memref<102x64xf32, #tpu.memory_space<vmem>>, vector<11x64xf32>
    %133 = tpu.concatenate %125, %126, %127, %128, %129, %130, %131, %132 in 1 : vector<11x64xf32>, vector<11x64xf32>, vector<11x64xf32>, vector<11x64xf32>, vector<11x64xf32>, vector<11x64xf32>, vector<11x64xf32>, vector<11x64xf32> -> vector<11x512xf32>
    %c51_130 = arith.constant 51 : index
    %c0_131 = arith.constant 0 : index
    %134 = tpu.strided_load %arg12[%c51_130, %c0_131] {strides = array<i32: 4, 1>} : memref<102x64xf32, #tpu.memory_space<vmem>>, vector<11x64xf32>
    %c52_132 = arith.constant 52 : index
    %c0_133 = arith.constant 0 : index
    %135 = tpu.strided_load %arg12[%c52_132, %c0_133] {strides = array<i32: 4, 1>} : memref<102x64xf32, #tpu.memory_space<vmem>>, vector<11x64xf32>
    %c53_134 = arith.constant 53 : index
    %c0_135 = arith.constant 0 : index
    %136 = tpu.strided_load %arg12[%c53_134, %c0_135] {strides = array<i32: 4, 1>} : memref<102x64xf32, #tpu.memory_space<vmem>>, vector<11x64xf32>
    %c54_136 = arith.constant 54 : index
    %c0_137 = arith.constant 0 : index
    %137 = tpu.strided_load %arg12[%c54_136, %c0_137] {strides = array<i32: 4, 1>} : memref<102x64xf32, #tpu.memory_space<vmem>>, vector<11x64xf32>
    %c55_138 = arith.constant 55 : index
    %c0_139 = arith.constant 0 : index
    %138 = tpu.strided_load %arg12[%c55_138, %c0_139] {strides = array<i32: 4, 1>} : memref<102x64xf32, #tpu.memory_space<vmem>>, vector<11x64xf32>
    %c56_140 = arith.constant 56 : index
    %c0_141 = arith.constant 0 : index
    %139 = tpu.strided_load %arg12[%c56_140, %c0_141] {strides = array<i32: 4, 1>} : memref<102x64xf32, #tpu.memory_space<vmem>>, vector<11x64xf32>
    %c57_142 = arith.constant 57 : index
    %c0_143 = arith.constant 0 : index
    %140 = tpu.strided_load %arg12[%c57_142, %c0_143] {strides = array<i32: 4, 1>} : memref<102x64xf32, #tpu.memory_space<vmem>>, vector<11x64xf32>
    %c58_144 = arith.constant 58 : index
    %c0_145 = arith.constant 0 : index
    %141 = tpu.strided_load %arg12[%c58_144, %c0_145] {strides = array<i32: 4, 1>} : memref<102x64xf32, #tpu.memory_space<vmem>>, vector<11x64xf32>
    %142 = tpu.concatenate %134, %135, %136, %137, %138, %139, %140, %141 in 1 : vector<11x64xf32>, vector<11x64xf32>, vector<11x64xf32>, vector<11x64xf32>, vector<11x64xf32>, vector<11x64xf32>, vector<11x64xf32>, vector<11x64xf32> -> vector<11x512xf32>
    %143 = tpu.concatenate %133, %142 in 0 : vector<11x512xf32>, vector<11x512xf32> -> vector<22x512xf32>
    %144 = arith.truncf %143 : vector<22x512xf32> to vector<22x512xbf16>
    %c1_146 = arith.constant 1 : index
    %c0_147 = arith.constant 0 : index
    %c0_148 = arith.constant 0 : index
    %145 = vector.load %arg3[%c1_146, %c0_147, %c0_148] : memref<2x512x128xbf16, #tpu.memory_space<vmem>>, vector<1x512x128xbf16>
    %146 = vector.shape_cast %145 : vector<1x512x128xbf16> to vector<512x128xbf16>
    %cst_149 = arith.constant dense<0.000000e+00> : vector<22x128xf32>
    %147 = tpu.matmul %144, %146, %cst_149 {dimension_numbers = #tpu.dot_dimension_numbers<[1], [0], [0], [1], [0, 0, 1, 1], [], []>} : vector<22x512xbf16>, vector<512x128xbf16>, vector<22x128xf32> -> vector<22x128xf32>
    %c1_150 = arith.constant 1 : index
    %c0_151 = arith.constant 0 : index
    %c0_152 = arith.constant 0 : index
    %148 = vector.load %arg4[%c1_150, %c0_151, %c0_152] : memref<2x1x128xf32, #tpu.memory_space<vmem>>, vector<1x1x128xf32>
    %149 = vector.shape_cast %148 : vector<1x1x128xf32> to vector<1x128xf32>
    %150 = vector.broadcast %149 : vector<1x128xf32> to vector<22x128xf32>
    %151 = arith.addf %147, %150 : vector<22x128xf32>
    %cst_153 = arith.constant 0.000000e+00 : f32
    %152 = vector.broadcast %cst_153 : f32 to vector<22x128xf32>
    %153 = arith.maximumf %151, %152 : vector<22x128xf32>
    %154 = vector.extract_strided_slice %153 {offsets = [0, 0], sizes = [11, 128], strides = [1, 1]} : vector<22x128xf32> to vector<11x128xf32>
    %c2_154 = arith.constant 2 : index
    %c0_155 = arith.constant 0 : index
    %155 = vector.load %arg13[%c2_154, %c0_155] : memref<30x128xf32, #tpu.memory_space<vmem>>, vector<11x128xf32>
    tpu.vector_store %arg13[%c2_154, %c0_155], %154 {strides = array<i32>} : memref<30x128xf32, #tpu.memory_space<vmem>>, vector<11x128xf32>,
    %156 = vector.extract_strided_slice %153 {offsets = [11, 0], sizes = [11, 128], strides = [1, 1]} : vector<22x128xf32> to vector<11x128xf32>
    %c17_156 = arith.constant 17 : index
    %c0_157 = arith.constant 0 : index
    %157 = vector.load %arg13[%c17_156, %c0_157] : memref<30x128xf32, #tpu.memory_space<vmem>>, vector<11x128xf32>
    tpu.vector_store %arg13[%c17_156, %c0_157], %156 {strides = array<i32>} : memref<30x128xf32, #tpu.memory_space<vmem>>, vector<11x128xf32>,
    %c0_158 = arith.constant 0 : index
    %c0_159 = arith.constant 0 : index
    %158 = tpu.strided_load %arg13[%c0_158, %c0_159] {strides = array<i32: 2, 1>} : memref<30x128xf32, #tpu.memory_space<vmem>>, vector<6x128xf32>
    %c1_160 = arith.constant 1 : index
    %c0_161 = arith.constant 0 : index
    %159 = tpu.strided_load %arg13[%c1_160, %c0_161] {strides = array<i32: 2, 1>} : memref<30x128xf32, #tpu.memory_space<vmem>>, vector<6x128xf32>
    %c2_162 = arith.constant 2 : index
    %c0_163 = arith.constant 0 : index
    %160 = tpu.strided_load %arg13[%c2_162, %c0_163] {strides = array<i32: 2, 1>} : memref<30x128xf32, #tpu.memory_space<vmem>>, vector<6x128xf32>
    %c3_164 = arith.constant 3 : index
    %c0_165 = arith.constant 0 : index
    %161 = tpu.strided_load %arg13[%c3_164, %c0_165] {strides = array<i32: 2, 1>} : memref<30x128xf32, #tpu.memory_space<vmem>>, vector<6x128xf32>
    %c4_166 = arith.constant 4 : index
    %c0_167 = arith.constant 0 : index
    %162 = tpu.strided_load %arg13[%c4_166, %c0_167] {strides = array<i32: 2, 1>} : memref<30x128xf32, #tpu.memory_space<vmem>>, vector<6x128xf32>
    %163 = tpu.concatenate %158, %159, %160, %161, %162 in 1 : vector<6x128xf32>, vector<6x128xf32>, vector<6x128xf32>, vector<6x128xf32>, vector<6x128xf32> -> vector<6x640xf32>
    %c15_168 = arith.constant 15 : index
    %c0_169 = arith.constant 0 : index
    %164 = tpu.strided_load %arg13[%c15_168, %c0_169] {strides = array<i32: 2, 1>} : memref<30x128xf32, #tpu.memory_space<vmem>>, vector<6x128xf32>
    %c16_170 = arith.constant 16 : index
    %c0_171 = arith.constant 0 : index
    %165 = tpu.strided_load %arg13[%c16_170, %c0_171] {strides = array<i32: 2, 1>} : memref<30x128xf32, #tpu.memory_space<vmem>>, vector<6x128xf32>
    %c17_172 = arith.constant 17 : index
    %c0_173 = arith.constant 0 : index
    %166 = tpu.strided_load %arg13[%c17_172, %c0_173] {strides = array<i32: 2, 1>} : memref<30x128xf32, #tpu.memory_space<vmem>>, vector<6x128xf32>
    %c18_174 = arith.constant 18 : index
    %c0_175 = arith.constant 0 : index
    %167 = tpu.strided_load %arg13[%c18_174, %c0_175] {strides = array<i32: 2, 1>} : memref<30x128xf32, #tpu.memory_space<vmem>>, vector<6x128xf32>
    %c19_176 = arith.constant 19 : index
    %c0_177 = arith.constant 0 : index
    %168 = tpu.strided_load %arg13[%c19_176, %c0_177] {strides = array<i32: 2, 1>} : memref<30x128xf32, #tpu.memory_space<vmem>>, vector<6x128xf32>
    %169 = tpu.concatenate %164, %165, %166, %167, %168 in 1 : vector<6x128xf32>, vector<6x128xf32>, vector<6x128xf32>, vector<6x128xf32>, vector<6x128xf32> -> vector<6x640xf32>
    %170 = tpu.concatenate %163, %169 in 0 : vector<6x640xf32>, vector<6x640xf32> -> vector<12x640xf32>
    %171 = arith.truncf %170 : vector<12x640xf32> to vector<12x640xbf16>
    %c1_178 = arith.constant 1 : index
    %c0_179 = arith.constant 0 : index
    %c0_180 = arith.constant 0 : index
    %172 = vector.load %arg5[%c1_178, %c0_179, %c0_180] : memref<2x640x256xbf16, #tpu.memory_space<vmem>>, vector<1x640x256xbf16>
    %173 = vector.shape_cast %172 : vector<1x640x256xbf16> to vector<640x256xbf16>
    %cst_181 = arith.constant dense<0.000000e+00> : vector<12x256xf32>
    %174 = tpu.matmul %171, %173, %cst_181 {dimension_numbers = #tpu.dot_dimension_numbers<[1], [0], [0], [1], [0, 0, 1, 1], [], []>} : vector<12x640xbf16>, vector<640x256xbf16>, vector<12x256xf32> -> vector<12x256xf32>
    %c1_182 = arith.constant 1 : index
    %c0_183 = arith.constant 0 : index
    %c0_184 = arith.constant 0 : index
    %175 = vector.load %arg6[%c1_182, %c0_183, %c0_184] : memref<2x1x256xf32, #tpu.memory_space<vmem>>, vector<1x1x256xf32>
    %176 = vector.shape_cast %175 : vector<1x1x256xf32> to vector<1x256xf32>
    %177 = vector.broadcast %176 : vector<1x256xf32> to vector<12x256xf32>
    %178 = arith.addf %174, %177 : vector<12x256xf32>
    %cst_185 = arith.constant 0.000000e+00 : f32
    %179 = vector.broadcast %cst_185 : f32 to vector<12x256xf32>
    %180 = arith.maximumf %178, %179 : vector<12x256xf32>
    %181 = vector.extract_strided_slice %180 {offsets = [0, 0], sizes = [6, 256], strides = [1, 1]} : vector<12x256xf32> to vector<6x256xf32>
    %c1_186 = arith.constant 1 : index
    %c0_187 = arith.constant 0 : index
    %182 = vector.load %arg14[%c1_186, %c0_187] : memref<16x256xf32, #tpu.memory_space<vmem>>, vector<6x256xf32>
    tpu.vector_store %arg14[%c1_186, %c0_187], %181 {strides = array<i32>} : memref<16x256xf32, #tpu.memory_space<vmem>>, vector<6x256xf32>,
    %183 = vector.extract_strided_slice %180 {offsets = [6, 0], sizes = [6, 256], strides = [1, 1]} : vector<12x256xf32> to vector<6x256xf32>
    %c9_188 = arith.constant 9 : index
    %c0_189 = arith.constant 0 : index
    %184 = vector.load %arg14[%c9_188, %c0_189] : memref<16x256xf32, #tpu.memory_space<vmem>>, vector<6x256xf32>
    tpu.vector_store %arg14[%c9_188, %c0_189], %183 {strides = array<i32>} : memref<16x256xf32, #tpu.memory_space<vmem>>, vector<6x256xf32>,
    %c0_190 = arith.constant 0 : index
    %c0_191 = arith.constant 0 : index
    %185 = vector.load %arg14[%c0_190, %c0_191] : memref<16x256xf32, #tpu.memory_space<vmem>>, vector<6x256xf32>
    %c1_192 = arith.constant 1 : index
    %c0_193 = arith.constant 0 : index
    %186 = vector.load %arg14[%c1_192, %c0_193] : memref<16x256xf32, #tpu.memory_space<vmem>>, vector<6x256xf32>
    %c2_194 = arith.constant 2 : index
    %c0_195 = arith.constant 0 : index
    %187 = vector.load %arg14[%c2_194, %c0_195] : memref<16x256xf32, #tpu.memory_space<vmem>>, vector<6x256xf32>
    %188 = tpu.concatenate %185, %186, %187 in 1 : vector<6x256xf32>, vector<6x256xf32>, vector<6x256xf32> -> vector<6x768xf32>
    %c8_196 = arith.constant 8 : index
    %c0_197 = arith.constant 0 : index
    %189 = vector.load %arg14[%c8_196, %c0_197] : memref<16x256xf32, #tpu.memory_space<vmem>>, vector<6x256xf32>
    %c9_198 = arith.constant 9 : index
    %c0_199 = arith.constant 0 : index
    %190 = vector.load %arg14[%c9_198, %c0_199] : memref<16x256xf32, #tpu.memory_space<vmem>>, vector<6x256xf32>
    %c10_200 = arith.constant 10 : index
    %c0_201 = arith.constant 0 : index
    %191 = vector.load %arg14[%c10_200, %c0_201] : memref<16x256xf32, #tpu.memory_space<vmem>>, vector<6x256xf32>
    %192 = tpu.concatenate %189, %190, %191 in 1 : vector<6x256xf32>, vector<6x256xf32>, vector<6x256xf32> -> vector<6x768xf32>
    %193 = tpu.concatenate %188, %192 in 0 : vector<6x768xf32>, vector<6x768xf32> -> vector<12x768xf32>
    %194 = arith.truncf %193 : vector<12x768xf32> to vector<12x768xbf16>
    %c1_202 = arith.constant 1 : index
    %c0_203 = arith.constant 0 : index
    %c0_204 = arith.constant 0 : index
    %195 = vector.load %arg7[%c1_202, %c0_203, %c0_204] : memref<2x768x128xbf16, #tpu.memory_space<vmem>>, vector<1x768x128xbf16>
    %196 = vector.shape_cast %195 : vector<1x768x128xbf16> to vector<768x128xbf16>
    %cst_205 = arith.constant dense<0.000000e+00> : vector<12x128xf32>
    %197 = tpu.matmul %194, %196, %cst_205 {dimension_numbers = #tpu.dot_dimension_numbers<[1], [0], [0], [1], [0, 0, 1, 1], [], []>} : vector<12x768xbf16>, vector<768x128xbf16>, vector<12x128xf32> -> vector<12x128xf32>
    %c1_206 = arith.constant 1 : index
    %c0_207 = arith.constant 0 : index
    %c0_208 = arith.constant 0 : index
    %198 = vector.load %arg8[%c1_206, %c0_207, %c0_208] : memref<2x1x128xf32, #tpu.memory_space<vmem>>, vector<1x1x128xf32>
    %199 = vector.shape_cast %198 : vector<1x1x128xf32> to vector<1x128xf32>
    %200 = vector.broadcast %199 : vector<1x128xf32> to vector<12x128xf32>
    %201 = arith.addf %197, %200 : vector<12x128xf32>
    %cst_209 = arith.constant 0.000000e+00 : f32
    %202 = vector.broadcast %cst_209 : f32 to vector<12x128xf32>
    %203 = arith.maximumf %201, %202 : vector<12x128xf32>
    %204 = vector.extract_strided_slice %203 {offsets = [0, 0], sizes = [6, 128], strides = [1, 1]} : vector<12x128xf32> to vector<6x128xf32>
    %cst_210 = arith.constant dense<0.000000e+00> : vector<128xf32>
    %205 = vector.multi_reduction <add>, %204, %cst_210 [0] : vector<6x128xf32> to vector<128xf32>
    %206 = vector.shape_cast %205 : vector<128xf32> to vector<1x128xf32>
    %cst_211 = arith.constant 6.000000e+00 : f32
    %207 = vector.broadcast %cst_211 : f32 to vector<1x128xf32>
    %208 = arith.divf %206, %207 : vector<1x128xf32>
    %209 = vector.extract_strided_slice %203 {offsets = [6, 0], sizes = [6, 128], strides = [1, 1]} : vector<12x128xf32> to vector<6x128xf32>
    %cst_212 = arith.constant dense<0.000000e+00> : vector<128xf32>
    %210 = vector.multi_reduction <add>, %209, %cst_212 [0] : vector<6x128xf32> to vector<128xf32>
    %211 = vector.shape_cast %210 : vector<128xf32> to vector<1x128xf32>
    %cst_213 = arith.constant 6.000000e+00 : f32
    %212 = vector.broadcast %cst_213 : f32 to vector<1x128xf32>
    %213 = arith.divf %211, %212 : vector<1x128xf32>
    %214 = tpu.concatenate %104, %109, %208, %213 in 0 : vector<1x128xf32>, vector<1x128xf32>, vector<1x128xf32>, vector<1x128xf32> -> vector<4x128xf32>
    %215 = arith.truncf %214 : vector<4x128xf32> to vector<4x128xbf16>
    %c0_214 = arith.constant 0 : index
    %c0_215 = arith.constant 0 : index
    %216 = vector.load %arg9[%c0_214, %c0_215] : memref<128x8xbf16, #tpu.memory_space<vmem>>, vector<128x8xbf16>
    %cst_216 = arith.constant dense<0.000000e+00> : vector<4x8xf32>
    %217 = tpu.matmul %215, %216, %cst_216 {dimension_numbers = #tpu.dot_dimension_numbers<[1], [0], [0], [1], [0, 0, 1, 1], [], []>} : vector<4x128xbf16>, vector<128x8xbf16>, vector<4x8xf32> -> vector<4x8xf32>
    %cst_217 = arith.constant 0.000000e+00 : f32
    %218 = vector.broadcast %cst_217 : f32 to vector<4x8xf32>
    %219 = arith.maximumf %217, %218 : vector<4x8xf32>
    %220 = arith.truncf %219 : vector<4x8xf32> to vector<4x8xbf16>
    %c0_218 = arith.constant 0 : index
    %c0_219 = arith.constant 0 : index
    %221 = vector.load %arg10[%c0_218, %c0_219] : memref<8x128xbf16, #tpu.memory_space<vmem>>, vector<8x128xbf16>
    %cst_220 = arith.constant dense<0.000000e+00> : vector<4x128xf32>
    %222 = tpu.matmul %220, %221, %cst_220 {dimension_numbers = #tpu.dot_dimension_numbers<[1], [0], [0], [1], [0, 0, 1, 1], [], []>} : vector<4x8xbf16>, vector<8x128xbf16>, vector<4x128xf32> -> vector<4x128xf32>
    %223 = arith.negf %222 : vector<4x128xf32>
    %224 = math.exp %223 : vector<4x128xf32>
    %cst_221 = arith.constant 1.000000e+00 : f32
    %225 = vector.broadcast %cst_221 : f32 to vector<4x128xf32>
    %226 = arith.addf %225, %224 : vector<4x128xf32>
    %227 = arith.divf %225, %226 : vector<4x128xf32>
    %228 = vector.extract_strided_slice %227 {offsets = [0, 0], sizes = [1, 128], strides = [1, 1]} : vector<4x128xf32> to vector<1x128xf32>
    %229 = vector.extract_strided_slice %99 {offsets = [0, 0], sizes = [6, 128], strides = [1, 1]} : vector<12x128xf32> to vector<6x128xf32>
    %230 = vector.broadcast %228 : vector<1x128xf32> to vector<6x128xf32>
    %231 = arith.mulf %229, %230 : vector<6x128xf32>
    %cst_222 = arith.constant dense<0xFF800000> : vector<128xf32>
    %232 = vector.multi_reduction <maximumf>, %231, %cst_222 [0] : vector<6x128xf32> to vector<128xf32>
    %233 = vector.shape_cast %232 : vector<128xf32> to vector<1x128xf32>
    %234 = vector.extract_strided_slice %227 {offsets = [2, 0], sizes = [1, 128], strides = [1, 1]} : vector<4x128xf32> to vector<1x128xf32>
    %235 = vector.extract_strided_slice %203 {offsets = [0, 0], sizes = [6, 128], strides = [1, 1]} : vector<12x128xf32> to vector<6x128xf32>
    %236 = vector.broadcast %234 : vector<1x128xf32> to vector<6x128xf32>
    %237 = arith.mulf %235, %236 : vector<6x128xf32>
    %cst_223 = arith.constant dense<0xFF800000> : vector<128xf32>
    %238 = vector.multi_reduction <maximumf>, %237, %cst_223 [0] : vector<6x128xf32> to vector<128xf32>
    %239 = vector.shape_cast %238 : vector<128xf32> to vector<1x128xf32>
    %240 = tpu.concatenate %233, %239 in 1 : vector<1x128xf32>, vector<1x128xf32> -> vector<1x256xf32>
    %241 = vector.extract_strided_slice %227 {offsets = [1, 0], sizes = [1, 128], strides = [1, 1]} : vector<4x128xf32> to vector<1x128xf32>
    %242 = vector.extract_strided_slice %99 {offsets = [6, 0], sizes = [6, 128], strides = [1, 1]} : vector<12x128xf32> to vector<6x128xf32>
    %243 = vector.broadcast %241 : vector<1x128xf32> to vector<6x128xf32>
    %244 = arith.mulf %242, %243 : vector<6x128xf32>
    %cst_224 = arith.constant dense<0xFF800000> : vector<128xf32>
    %245 = vector.multi_reduction <maximumf>, %244, %cst_224 [0] : vector<6x128xf32> to vector<128xf32>
    %246 = vector.shape_cast %245 : vector<128xf32> to vector<1x128xf32>
    %247 = vector.extract_strided_slice %227 {offsets = [3, 0], sizes = [1, 128], strides = [1, 1]} : vector<4x128xf32> to vector<1x128xf32>
    %248 = vector.extract_strided_slice %203 {offsets = [6, 0], sizes = [6, 128], strides = [1, 1]} : vector<12x128xf32> to vector<6x128xf32>
    %249 = vector.broadcast %247 : vector<1x128xf32> to vector<6x128xf32>
    %250 = arith.mulf %248, %249 : vector<6x128xf32>
    %cst_225 = arith.constant dense<0xFF800000> : vector<128xf32>
    %251 = vector.multi_reduction <maximumf>, %250, %cst_225 [0] : vector<6x128xf32> to vector<128xf32>
    %252 = vector.shape_cast %251 : vector<128xf32> to vector<1x128xf32>
    %253 = tpu.concatenate %246, %252 in 1 : vector<1x128xf32>, vector<1x128xf32> -> vector<1x256xf32>
    %254 = tpu.concatenate %240, %253 in 0 : vector<1x256xf32>, vector<1x256xf32> -> vector<2x256xf32>
    %c0_226 = arith.constant 0 : index
    %c0_227 = arith.constant 0 : index
    %255 = vector.load %arg11[%c0_226, %c0_227] : memref<2x256xf32, #tpu.memory_space<vmem>>, vector<2x256xf32>
    tpu.vector_store %arg11[%c0_226, %c0_227], %254 {strides = array<i32>} : memref<2x256xf32, #tpu.memory_space<vmem>>, vector<2x256xf32>,
    return
  }
}

</mosaic_0001>

<llo_original>
// kernel: mimsfcn_sea_forward.1
$region0: #{mimsfcn_sea_forward.1}
  #allocation0 [shape = 'u32[]', space=smem, size = 0x4, offset = 0x4, fixed_abs, tag = 'smem constant byte address 0x4 - core index']
  #allocation1 [shape = 'u32[144,128]{1,0:T(1,128)}', space=vmem, size = 0x12000, scoped, tag = 'internal scratch']
  #allocation2 [shape = 'f32[102,64]{1,0:T(8,128)}', space=vmem, size = 0xd000, scoped, tag = 'scratch operand']
  #allocation3 [shape = 'f32[30,128]{1,0:T(8,128)}', space=vmem, size = 0x4000, scoped, tag = 'scratch operand']
  #allocation4 [shape = 'f32[16,256]{1,0:T(8,128)}', space=vmem, size = 0x4000, scoped, tag = 'scratch operand']
  %s0 = inlined_call_operand.vmem [shape: bf16[2,86,576], index: 0, kind: input, shape index: {}]
  %s1 = inlined_call_operand.vmem [shape: bf16[2,576,64], index: 1, kind: input, shape index: {}]
  %s2 = inlined_call_operand.vmem [shape: f32[2,1,64], index: 2, kind: input, shape index: {}]
  %s3 = inlined_call_operand.vmem [shape: bf16[2,512,128], index: 3, kind: input, shape index: {}]
  %s4 = inlined_call_operand.vmem [shape: f32[2,1,128], index: 4, kind: input, shape index: {}]
  %s5 = inlined_call_operand.vmem [shape: bf16[2,640,256], index: 5, kind: input, shape index: {}]
  %s6 = inlined_call_operand.vmem [shape: f32[2,1,256], index: 6, kind: input, shape index: {}]
  %s7 = inlined_call_operand.vmem [shape: bf16[2,768,128], index: 7, kind: input, shape index: {}]
  %s8 = inlined_call_operand.vmem [shape: f32[2,1,128], index: 8, kind: input, shape index: {}]
  %s9 = inlined_call_operand.vmem [shape: bf16[128,8], index: 9, kind: input, shape index: {}]
  %s10 = inlined_call_operand.vmem [shape: bf16[8,128], index: 10, kind: input, shape index: {}]
  %s11 = inlined_call_operand.vmem [shape: f32[2,256], index: 11, kind: output, shape index: {}]
  %s12 = sld [smem:[#allocation0]]
  $region54: #{mimsfcn_sea_forward.1} parent=0
    _
  %s14 = ssub.s32 1, %s12
  %s15 = scalar_select 0, %s14, %s12
  // Predicated region
  $region2: #{mimsfcn_sea_forward.1} parent=0 // pred_check
    _
  $region3: #{mimsfcn_sea_forward.1} parent=0 // pred_check_branch
    %17 = sbr.rel (0) target = $region5
  $region4: #{mimsfcn_sea_forward.1} parent=0 // pred_region
    _
  $region5: #{mimsfcn_sea_forward.1} parent=0 // pred_fallthru
    _
  // Predicated region
  $region6: #{mimsfcn_sea_forward.1} parent=0 // pred_check
    _
  $region7: #{mimsfcn_sea_forward.1} parent=0 // pred_check_branch
    %19 = sbr.rel (0) target = $region9
  $region8: #{mimsfcn_sea_forward.1} parent=0 // pred_region
    _
  $region9: #{mimsfcn_sea_forward.1} parent=0 // pred_fallthru
    _
  // Predicated region
  $region10: #{mimsfcn_sea_forward.1} parent=0 // pred_check
    _
  $region11: #{mimsfcn_sea_forward.1} parent=0 // pred_check_branch
    %21 = sbr.rel (0) target = $region13
  $region12: #{mimsfcn_sea_forward.1} parent=0 // pred_region
    _
  $region13: #{mimsfcn_sea_forward.1} parent=0 // pred_fallthru
    _
  // Predicated region
  $region14: #{mimsfcn_sea_forward.1} parent=0 // pred_check
    _
  $region15: #{mimsfcn_sea_forward.1} parent=0 // pred_check_branch
    %23 = sbr.rel (0) target = $region17
  $region16: #{mimsfcn_sea_forward.1} parent=0 // pred_region
    _
  $region17: #{mimsfcn_sea_forward.1} parent=0 // pred_fallthru
    _
  // Predicated region
  $region18: #{mimsfcn_sea_forward.1} parent=0 // pred_check
    _
  $region19: #{mimsfcn_sea_forward.1} parent=0 // pred_check_branch
    %25 = sbr.rel (0) target = $region21
  $region20: #{mimsfcn_sea_forward.1} parent=0 // pred_region
    _
  $region21: #{mimsfcn_sea_forward.1} parent=0 // pred_fallthru
    _
  // Predicated region
  $region22: #{mimsfcn_sea_forward.1} parent=0 // pred_check
    _
  $region23: #{mimsfcn_sea_forward.1} parent=0 // pred_check_branch
    %27 = sbr.rel (0) target = $region25
  $region24: #{mimsfcn_sea_forward.1} parent=0 // pred_region
    _
  $region25: #{mimsfcn_sea_forward.1} parent=0 // pred_fallthru
    _
  // Predicated region
  $region26: #{mimsfcn_sea_forward.1} parent=0 // pred_check
    _
  $region27: #{mimsfcn_sea_forward.1} parent=0 // pred_check_branch
    %29 = sbr.rel (0) target = $region29
  $region28: #{mimsfcn_sea_forward.1} parent=0 // pred_region
    _
  $region29: #{mimsfcn_sea_forward.1} parent=0 // pred_fallthru
    _
  // Predicated region
  $region30: #{mimsfcn_sea_forward.1} parent=0 // pred_check
    _
  $region31: #{mimsfcn_sea_forward.1} parent=0 // pred_check_branch
    %31 = sbr.rel (0) target = $region33
  $region32: #{mimsfcn_sea_forward.1} parent=0 // pred_region
    _
  $region33: #{mimsfcn_sea_forward.1} parent=0 // pred_fallthru
    _
  // Predicated region
  $region34: #{mimsfcn_sea_forward.1} parent=0 // pred_check
    _
  $region35: #{mimsfcn_sea_forward.1} parent=0 // pred_check_branch
    %33 = sbr.rel (0) target = $region37
  $region36: #{mimsfcn_sea_forward.1} parent=0 // pred_region
    _
  $region37: #{mimsfcn_sea_forward.1} parent=0 // pred_fallthru
    _
  // Predicated region
  $region38: #{mimsfcn_sea_forward.1} parent=0 // pred_check
    _
  $region39: #{mimsfcn_sea_forward.1} parent=0 // pred_check_branch
    %35 = sbr.rel (0) target = $region41
  $region40: #{mimsfcn_sea_forward.1} parent=0 // pred_region
    _
  $region41: #{mimsfcn_sea_forward.1} parent=0 // pred_fallthru
    _
  // Predicated region
  $region42: #{mimsfcn_sea_forward.1} parent=0 // pred_check
    _
  $region43: #{mimsfcn_sea_forward.1} parent=0 // pred_check_branch
    %37 = sbr.rel (0) target = $region45
  $region44: #{mimsfcn_sea_forward.1} parent=0 // pred_region
    _
  $region45: #{mimsfcn_sea_forward.1} parent=0 // pred_fallthru
    _
  %vm39 = vcmask 523264
  %40 = vst.msk [vmem:[#allocation2] sm:$0xff] %vm39, 0.0
  %41 = vst.msk [vmem:[#allocation2 + $0x8] sm:$0xff] %vm39, 0.0
  %42 = vst.msk [vmem:[#allocation2 + $0x10] sm:$0xff] %vm39, 0.0
  %43 = vst.msk [vmem:[#allocation2 + $0x18] sm:$0xff] %vm39, 0.0
  %44 = vst.msk [vmem:[#allocation2 + $0x20] sm:$0xff] %vm39, 0.0
  %45 = vst.msk [vmem:[#allocation2 + $0x28] sm:$0xff] %vm39, 0.0
  %46 = vst.msk [vmem:[#allocation2 + $0x30] sm:$0xff] %vm39, 0.0
  %47 = vst.msk [vmem:[#allocation2 + $0x38] sm:$0xff] %vm39, 0.0
  %48 = vst.msk [vmem:[#allocation2 + $0x40] sm:$0xff] %vm39, 0.0
  %49 = vst.msk [vmem:[#allocation2 + $0x48] sm:$0xff] %vm39, 0.0
  %50 = vst.msk [vmem:[#allocation2 + $0x50] sm:$0xff] %vm39, 0.0
  %51 = vst.msk [vmem:[#allocation2 + $0x58] sm:$0xff] %vm39, 0.0
  %vm52 = vcmask 521216
  %53 = vst.msk [vmem:[#allocation2 + $0x60] sm:$0x3f] %vm52, 0.0
  %54 = vst [vmem:[#allocation3] sm:$0xff] 0.0
  %55 = vst [vmem:[#allocation3 + $0x8] sm:$0xff] 0.0
  %56 = vst [vmem:[#allocation3 + $0x10] sm:$0xff] 0.0
  %57 = vst [vmem:[#allocation3 + $0x18] sm:$0x3f] 0.0
  %58 = vst [vmem:[#allocation4] sm:$0xff] 0.0
  %59 = vst [vmem:[#allocation4 + $0x8] sm:$0xff] 0.0
  %60 = vst [vmem:[#allocation4 + $0x10] sm:$0xff] 0.0
  %61 = vst [vmem:[#allocation4 + $0x18] sm:$0xff] 0.0
  %v62 = vld [vmem:[%s0] sm:$0xff]
  %v63 = vld [vmem:[%s0 + $0x8] sm:$0xff]
  %v64 = vld [vmem:[%s0 + $0x10] sm:$0xf]
  %v65 = vld [vmem:[%s0 + $0x14] sm:$0xff]
  %v66 = vld [vmem:[%s0 + $0x1c] sm:$0xff]
  %v67 = vld [vmem:[%s0 + $0x24] sm:$0xf]
  %v68 = vld [vmem:[%s0 + $0x28] sm:$0xff]
  %v69 = vld [vmem:[%s0 + $0x30] sm:$0xff]
  %v70 = vld [vmem:[%s0 + $0x38] sm:$0xf]
  %v71 = vld [vmem:[%s0 + $0x3c] sm:$0xff]
  %v72 = vld [vmem:[%s0 + $0x44] sm:$0xff]
  %v73 = vld [vmem:[%s0 + $0x4c] sm:$0xf]
  %v74 = vld [vmem:[%s0 + $0x50] sm:$0xff]
  %v75 = vld [vmem:[%s0 + $0x58] sm:$0xff]
  %v76 = vld [vmem:[%s0 + $0x60] sm:$0xf]
  %v77 = vld [vmem:[%s0 + $0x64] sm:$0xff]
  %v78 = vld [vmem:[%s0 + $0x6c] sm:$0xff]
  %v79 = vld [vmem:[%s0 + $0x74] sm:$0xf]
  %v80 = vld [vmem:[%s0 + $0x78] sm:$0xff]
  %v81 = vld [vmem:[%s0 + $0x80] sm:$0xff]
  %v82 = vld [vmem:[%s0 + $0x88] sm:$0xf]
  %v83 = vld [vmem:[%s0 + $0x8c] sm:$0xff]
  %v84 = vld [vmem:[%s0 + $0x94] sm:$0xff]
  %v85 = vld [vmem:[%s0 + $0x9c] sm:$0xf]
  %v86 = vld [vmem:[%s0 + $0xa0] sm:$0xff]
  %v87 = vld [vmem:[%s0 + $0xa8] sm:$0xff]
  %v88 = vld [vmem:[%s0 + $0xb0] sm:$0xf]
  %v89 = vld [vmem:[%s0 + $0xb4] sm:$0xff]
  %v90 = vld [vmem:[%s0 + $0xbc] sm:$0xff]
  %v91 = vld [vmem:[%s0 + $0xc4] sm:$0xf]
  %v92 = vld [vmem:[%s0 + $0xc8] sm:$0x77]
  %v93 = vld [vmem:[%s0 + $0xd0] sm:$0x77]
  %v94 = vld [vmem:[%s0 + $0xd8] sm:$0x7]
  %v95 = vld [vmem:[%s1] sm:$0xf]
  %v96 = vld [vmem:[%s1 + $0x4] sm:$0xf]
  %v97 = vld [vmem:[%s1 + $0x8] sm:$0xf]
  %v98 = vld [vmem:[%s1 + $0xc] sm:$0xf]
  %v99 = vld [vmem:[%s1 + $0x10] sm:$0xf]
  %v100 = vld [vmem:[%s1 + $0x14] sm:$0xf]
  %v101 = vld [vmem:[%s1 + $0x18] sm:$0xf]
  %v102 = vld [vmem:[%s1 + $0x1c] sm:$0xf]
  %v103 = vld [vmem:[%s1 + $0x20] sm:$0xf]
  %v104 = vld [vmem:[%s1 + $0x24] sm:$0xf]
  %v105 = vld [vmem:[%s1 + $0x28] sm:$0xf]
  %v106 = vld [vmem:[%s1 + $0x2c] sm:$0xf]
  %v107 = vld [vmem:[%s1 + $0x30] sm:$0xf]
  %v108 = vld [vmem:[%s1 + $0x34] sm:$0xf]
  %v109 = vld [vmem:[%s1 + $0x38] sm:$0xf]
  %v110 = vld [vmem:[%s1 + $0x3c] sm:$0xf]
  %v111 = vld [vmem:[%s1 + $0x40] sm:$0xf]
  %v112 = vld [vmem:[%s1 + $0x44] sm:$0xf]
  %v113 = vld [vmem:[%s1 + $0x48] sm:$0xf]
  %v114 = vld [vmem:[%s1 + $0x4c] sm:$0xf]
  %v115 = vld [vmem:[%s1 + $0x50] sm:$0xf]
  %v116 = vld [vmem:[%s1 + $0x54] sm:$0xf]
  %v117 = vld [vmem:[%s1 + $0x58] sm:$0xf]
  %v118 = vld [vmem:[%s1 + $0x5c] sm:$0xf]
  %v119 = vld [vmem:[%s1 + $0x60] sm:$0xf]
  %v120 = vld [vmem:[%s1 + $0x64] sm:$0xf]
  %v121 = vld [vmem:[%s1 + $0x68] sm:$0xf]
  %v122 = vld [vmem:[%s1 + $0x6c] sm:$0xf]
  %v123 = vld [vmem:[%s1 + $0x70] sm:$0xf]
  %v124 = vld [vmem:[%s1 + $0x74] sm:$0xf]
  %v125 = vld [vmem:[%s1 + $0x78] sm:$0xf]
  %v126 = vld [vmem:[%s1 + $0x7c] sm:$0xf]
  %v127 = vld [vmem:[%s1 + $0x80] sm:$0xf]
  %v128 = vld [vmem:[%s1 + $0x84] sm:$0xf]
  %v129 = vld [vmem:[%s1 + $0x88] sm:$0xf]
  %v130 = vld [vmem:[%s1 + $0x8c] sm:$0xf]
  %v131 = vld [vmem:[%s1 + $0x90] sm:$0xf]
  %v132 = vld [vmem:[%s1 + $0x94] sm:$0xf]
  %v133 = vld [vmem:[%s1 + $0x98] sm:$0xf]
  %v134 = vld [vmem:[%s1 + $0x9c] sm:$0xf]
  %v135 = vld [vmem:[%s1 + $0xa0] sm:$0xf]
  %v136 = vld [vmem:[%s1 + $0xa4] sm:$0xf]
  %v137 = vld [vmem:[%s1 + $0xa8] sm:$0xf]
  %v138 = vld [vmem:[%s1 + $0xac] sm:$0xf]
  %v139 = vld [vmem:[%s1 + $0xb0] sm:$0xf]
  %v140 = vld [vmem:[%s1 + $0xb4] sm:$0xf]
  %v141 = vld [vmem:[%s1 + $0xb8] sm:$0xf]
  %v142 = vld [vmem:[%s1 + $0xbc] sm:$0xf]
  %v143 = vld [vmem:[%s1 + $0xc0] sm:$0xf]
  %v144 = vld [vmem:[%s1 + $0xc4] sm:$0xf]
  %v145 = vld [vmem:[%s1 + $0xc8] sm:$0xf]
  %v146 = vld [vmem:[%s1 + $0xcc] sm:$0xf]
  %v147 = vld [vmem:[%s1 + $0xd0] sm:$0xf]
  %v148 = vld [vmem:[%s1 + $0xd4] sm:$0xf]
  %v149 = vld [vmem:[%s1 + $0xd8] sm:$0xf]
  %v150 = vld [vmem:[%s1 + $0xdc] sm:$0xf]
  %v151 = vld [vmem:[%s1 + $0xe0] sm:$0xf]
  %v152 = vld [vmem:[%s1 + $0xe4] sm:$0xf]
  %v153 = vld [vmem:[%s1 + $0xe8] sm:$0xf]
  %v154 = vld [vmem:[%s1 + $0xec] sm:$0xf]
  %v155 = vld [vmem:[%s1 + $0xf0] sm:$0xf]
  %v156 = vld [vmem:[%s1 + $0xf4] sm:$0xf]
  %v157 = vld [vmem:[%s1 + $0xf8] sm:$0xf]
  %v158 = vld [vmem:[%s1 + $0xfc] sm:$0xf]
  %v159 = vld [vmem:[%s1 + $0x100] sm:$0xf]
  %v160 = vld [vmem:[%s1 + $0x104] sm:$0xf]
  %v161 = vld [vmem:[%s1 + $0x108] sm:$0xf]
  %v162 = vld [vmem:[%s1 + $0x10c] sm:$0xf]
  %v163 = vld [vmem:[%s1 + $0x110] sm:$0xf]
  %v164 = vld [vmem:[%s1 + $0x114] sm:$0xf]
  %v165 = vld [vmem:[%s1 + $0x118] sm:$0xf]
  %v166 = vld [vmem:[%s1 + $0x11c] sm:$0xf]
  %v167 = vld [vmem:[%s2] sm:$0x1]
  %v169 = vlaneseq
  %v170 = vshrl.u32 %v169, 7
  %v171 = vsub.s32 0, %v170
  %v172 = vrot.slane %v167, %v171
  %v207 = vunpack.c.l.b16 %v62
  %v208 = vunpack.c.h.b16 %v62
  %v209 = vunpack.c.l.b16 %v63
  %v210 = vunpack.c.h.b16 %v63
  %v211 = vunpack.c.l.b16 %v64
  %v212 = vunpack.c.l.b16 %v65
  %v213 = vunpack.c.h.b16 %v65
  %v214 = vunpack.c.l.b16 %v66
  %v215 = vunpack.c.h.b16 %v66
  %v216 = vunpack.c.l.b16 %v67
  %v217 = vunpack.c.l.b16 %v68
  %v218 = vunpack.c.h.b16 %v68
  %v219 = vunpack.c.l.b16 %v69
  %v220 = vunpack.c.h.b16 %v69
  %v221 = vunpack.c.l.b16 %v70
  %v222 = vunpack.c.l.b16 %v71
  %v223 = vunpack.c.h.b16 %v71
  %v224 = vunpack.c.l.b16 %v72
  %v225 = vunpack.c.h.b16 %v72
  %v226 = vunpack.c.l.b16 %v73
  %v227 = vunpack.c.l.b16 %v74
  %v228 = vunpack.c.h.b16 %v74
  %v229 = vunpack.c.l.b16 %v75
  %v230 = vunpack.c.h.b16 %v75
  %v231 = vunpack.c.l.b16 %v76
  %v232 = vunpack.c.l.b16 %v77
  %v233 = vunpack.c.h.b16 %v77
  %v234 = vunpack.c.l.b16 %v78
  %v235 = vunpack.c.h.b16 %v78
  %v236 = vunpack.c.l.b16 %v79
  %v237 = vunpack.c.l.b16 %v80
  %v238 = vunpack.c.h.b16 %v80
  %v239 = vunpack.c.l.b16 %v81
  %v240 = vunpack.c.h.b16 %v81
  %v241 = vunpack.c.l.b16 %v82
  %v242 = vunpack.c.l.b16 %v83
  %v243 = vunpack.c.h.b16 %v83
  %v244 = vunpack.c.l.b16 %v84
  %v245 = vunpack.c.h.b16 %v84
  %v246 = vunpack.c.l.b16 %v85
  %v247 = vunpack.c.l.b16 %v86
  %v248 = vunpack.c.h.b16 %v86
  %v249 = vunpack.c.l.b16 %v87
  %v250 = vunpack.c.h.b16 %v87
  %v251 = vunpack.c.l.b16 %v88
  %v252 = vunpack.c.l.b16 %v89
  %v253 = vunpack.c.h.b16 %v89
  %v254 = vunpack.c.l.b16 %v90
  %v255 = vunpack.c.h.b16 %v90
  %v256 = vunpack.c.l.b16 %v91
  %v257 = vunpack.c.l.b16 %v92
  %v258 = vunpack.c.h.b16 %v92
  %v259 = vunpack.c.l.b16 %v93
  %v260 = vunpack.c.h.b16 %v93
  %v261 = vunpack.c.l.b16 %v94
  %v262 = vpack.c.b16 %v212, %v207
  %v263 = vpack.c.b16 %v213, %v208
  %v264 = vpack.c.b16 %v214, %v209
  %v265 = vpack.c.b16 %v215, %v210
  %v266 = vpack.c.b16 %v216, %v211
  %v267 = vpack.c.b16 %v222, %v217
  %v268 = vpack.c.b16 %v223, %v218
  %v269 = vpack.c.b16 %v224, %v219
  %v270 = vpack.c.b16 %v225, %v220
  %v271 = vpack.c.b16 %v226, %v221
  %v272 = vpack.c.b16 %v232, %v227
  %v273 = vpack.c.b16 %v233, %v228
  %v274 = vpack.c.b16 %v234, %v229
  %v275 = vpack.c.b16 %v235, %v230
  %v276 = vpack.c.b16 %v236, %v231
  %v277 = vpack.c.b16 %v242, %v237
  %v278 = vpack.c.b16 %v243, %v238
  %v279 = vpack.c.b16 %v244, %v239
  %v280 = vpack.c.b16 %v245, %v240
  %v281 = vpack.c.b16 %v246, %v241
  %v282 = vpack.c.b16 %v252, %v247
  %v283 = vpack.c.b16 %v253, %v248
  %v284 = vpack.c.b16 %v254, %v249
  %v285 = vpack.c.b16 %v255, %v250
  %v286 = vpack.c.b16 %v256, %v251
  %v287 = vpack.c.b16 %v257, %v257
  %v288 = vpack.c.b16 %v258, %v258
  %v289 = vpack.c.b16 %v259, %v259
  %v290 = vpack.c.b16 %v260, %v260
  %v291 = vpack.c.b16 %v261, %v261
  %v388 = vunpack.c.l.b16 %v95
  %v389 = vunpack.c.l.b16 %v96
  %v390 = vunpack.c.l.b16 %v97
  %v391 = vunpack.c.l.b16 %v98
  %v392 = vunpack.c.l.b16 %v99
  %v393 = vunpack.c.l.b16 %v100
  %v394 = vunpack.c.l.b16 %v101
  %v395 = vunpack.c.l.b16 %v102
  %v396 = vunpack.c.l.b16 %v103
  %v397 = vunpack.c.l.b16 %v104
  %v398 = vunpack.c.l.b16 %v105
  %v399 = vunpack.c.l.b16 %v106
  %v400 = vunpack.c.l.b16 %v107
  %v401 = vunpack.c.l.b16 %v108
  %v402 = vunpack.c.l.b16 %v109
  %v403 = vunpack.c.l.b16 %v110
  %v404 = vunpack.c.l.b16 %v111
  %v405 = vunpack.c.l.b16 %v112
  %v406 = vunpack.c.l.b16 %v113
  %v407 = vunpack.c.l.b16 %v114
  %v408 = vunpack.c.l.b16 %v115
  %v409 = vunpack.c.l.b16 %v116
  %v410 = vunpack.c.l.b16 %v117
  %v411 = vunpack.c.l.b16 %v118
  %v412 = vunpack.c.l.b16 %v119
  %v413 = vunpack.c.l.b16 %v120
  %v414 = vunpack.c.l.b16 %v121
  %v415 = vunpack.c.l.b16 %v122
  %v416 = vunpack.c.l.b16 %v123
  %v417 = vunpack.c.l.b16 %v124
  %v418 = vunpack.c.l.b16 %v125
  %v419 = vunpack.c.l.b16 %v126
  %v420 = vunpack.c.l.b16 %v127
  %v421 = vunpack.c.l.b16 %v128
  %v422 = vunpack.c.l.b16 %v129
  %v423 = vunpack.c.l.b16 %v130
  %v424 = vunpack.c.l.b16 %v131
  %v425 = vunpack.c.l.b16 %v132
  %v426 = vunpack.c.l.b16 %v133
  %v427 = vunpack.c.l.b16 %v134
  %v428 = vunpack.c.l.b16 %v135
  %v429 = vunpack.c.l.b16 %v136
  %v430 = vunpack.c.l.b16 %v137
  %v431 = vunpack.c.l.b16 %v138
  %v432 = vunpack.c.l.b16 %v139
  %v433 = vunpack.c.l.b16 %v140
  %v434 = vunpack.c.l.b16 %v141
  %v435 = vunpack.c.l.b16 %v142
  %v436 = vunpack.c.l.b16 %v143
  %v437 = vunpack.c.l.b16 %v144
  %v438 = vunpack.c.l.b16 %v145
  %v439 = vunpack.c.l.b16 %v146
  %v440 = vunpack.c.l.b16 %v147
  %v441 = vunpack.c.l.b16 %v148
  %v442 = vunpack.c.l.b16 %v149
  %v443 = vunpack.c.l.b16 %v150
  %v444 = vunpack.c.l.b16 %v151
  %v445 = vunpack.c.l.b16 %v152
  %v446 = vunpack.c.l.b16 %v153
  %v447 = vunpack.c.l.b16 %v154
  %v448 = vunpack.c.l.b16 %v155
  %v449 = vunpack.c.l.b16 %v156
  %v450 = vunpack.c.l.b16 %v157
  %v451 = vunpack.c.l.b16 %v158
  %v452 = vunpack.c.l.b16 %v159
  %v453 = vunpack.c.l.b16 %v160
  %v454 = vunpack.c.l.b16 %v161
  %v455 = vunpack.c.l.b16 %v162
  %v456 = vunpack.c.l.b16 %v163
  %v457 = vunpack.c.l.b16 %v164
  %v458 = vunpack.c.l.b16 %v165
  %v459 = vunpack.c.l.b16 %v166
  %v460 = vpack.c.b16 %v389, %v388
  %v461 = vpack.c.b16 %v391, %v390
  %v462 = vpack.c.b16 %v393, %v392
  %v463 = vpack.c.b16 %v395, %v394
  %v464 = vpack.c.b16 %v397, %v396
  %v465 = vpack.c.b16 %v399, %v398
  %v466 = vpack.c.b16 %v401, %v400
  %v467 = vpack.c.b16 %v403, %v402
  %v468 = vpack.c.b16 %v405, %v404
  %v469 = vpack.c.b16 %v407, %v406
  %v470 = vpack.c.b16 %v409, %v408
  %v471 = vpack.c.b16 %v411, %v410
  %v472 = vpack.c.b16 %v413, %v412
  %v473 = vpack.c.b16 %v415, %v414
  %v474 = vpack.c.b16 %v417, %v416
  %v475 = vpack.c.b16 %v419, %v418
  %v476 = vpack.c.b16 %v421, %v420
  %v477 = vpack.c.b16 %v423, %v422
  %v478 = vpack.c.b16 %v425, %v424
  %v479 = vpack.c.b16 %v427, %v426
  %v480 = vpack.c.b16 %v429, %v428
  %v481 = vpack.c.b16 %v431, %v430
  %v482 = vpack.c.b16 %v433, %v432
  %v483 = vpack.c.b16 %v435, %v434
  %v484 = vpack.c.b16 %v437, %v436
  %v485 = vpack.c.b16 %v439, %v438
  %v486 = vpack.c.b16 %v441, %v440
  %v487 = vpack.c.b16 %v443, %v442
  %v488 = vpack.c.b16 %v445, %v444
  %v489 = vpack.c.b16 %v447, %v446
  %v490 = vpack.c.b16 %v449, %v448
  %v491 = vpack.c.b16 %v451, %v450
  %v492 = vpack.c.b16 %v453, %v452
  %v493 = vpack.c.b16 %v455, %v454
  %v494 = vpack.c.b16 %v457, %v456
  %v495 = vpack.c.b16 %v459, %v458
  %v533 = vsel %vm39, %v266, 0
  %v536 = vsel %vm39, %v271, 0
  %v539 = vsel %vm39, %v276, 0
  %v542 = vsel %vm39, %v281, 0
  %v545 = vsel %vm39, %v286, 0
  %v548 = vsel %vm39, %v291, 0
  %550 = vmatprep.subr.bf16.mxu0 0
  %551 = vmatpush1.bf16.msra.mxu0 %v467
  %552 = vmatprep.subr.bf16.mxu0 0
  %553 = vmatpush1.bf16.msra.mxu0 %v466
  %554 = vmatprep.subr.bf16.mxu0 0
  %555 = vmatpush1.bf16.msra.mxu0 %v465
  %556 = vmatprep.subr.bf16.mxu0 0
  %557 = vmatpush1.bf16.msra.mxu0 %v464
  %558 = vmatprep.subr.bf16.mxu0 0
  %559 = vmatpush1.bf16.msra.mxu0 %v463
  %560 = vmatprep.subr.bf16.mxu0 0
  %561 = vmatpush1.bf16.msra.mxu0 %v462
  %562 = vmatprep.subr.bf16.mxu0 0
  %563 = vmatpush1.bf16.msra.mxu0 %v461
  %564 = vmatprep.subr.bf16.mxu0 0
  %565 = vmatpush1.bf16.msra.mxu0 %v460
  %566 = vmatprep.subr.bf16.mxu0 0
  %567 = vmatpush2.bf16.msra.mxu0 %v475
  %568 = vmatprep.subr.bf16.mxu0 0
  %569 = vmatpush2.bf16.msra.mxu0 %v474
  %570 = vmatprep.subr.bf16.mxu0 0
  %571 = vmatpush2.bf16.msra.mxu0 %v473
  %572 = vmatprep.subr.bf16.mxu0 0
  %573 = vmatpush2.bf16.msra.mxu0 %v472
  %574 = vmatprep.subr.bf16.mxu0 0
  %575 = vmatpush2.bf16.msra.mxu0 %v471
  %576 = vmatprep.subr.bf16.mxu0 0
  %577 = vmatpush2.bf16.msra.mxu0 %v470
  %578 = vmatprep.subr.bf16.mxu0 0
  %579 = vmatpush2.bf16.msra.mxu0 %v469
  %580 = vmatprep.subr.bf16.mxu0 0
  %581 = vmatpush2.bf16.msra.mxu0 %v468
  %582 = vmatprep.mubr.bf16.mxu0 %v263
  %583 = vmatmul.mubr.bf16.gmra.mxu0 %v262
  %v584 = vpop.f32.mrf.mxu0
  %v585 = vadd.f32 %v172, %v584
  %v586 = vpop.f32.mrf.mxu0
  %v587 = vpop.f32.mrf.mxu0
  %v588 = vadd.f32 %v172, %v587
  %v589 = vpop.f32.mrf.mxu0
  %590 = vmatprep.mubr.bf16.mxu0 %v268
  %591 = vmatmul.mubr.bf16.gmra.mxu0 %v267
  %v592 = vpop.f32.mrf.mxu0
  %v593 = vadd.f32 %v172, %v592
  %v594 = vpop.f32.mrf.mxu0
  %v595 = vpop.f32.mrf.mxu0
  %v596 = vadd.f32 %v172, %v595
  %v597 = vpop.f32.mrf.mxu0
  %598 = vmatprep.mubr.bf16.mxu0 %v273
  %599 = vmatmul.mubr.bf16.gmra.mxu0 %v272
  %v600 = vpop.f32.mrf.mxu0
  %v601 = vadd.f32 %v172, %v600
  %v602 = vpop.f32.mrf.mxu0
  %v603 = vpop.f32.mrf.mxu0
  %v604 = vadd.f32 %v172, %v603
  %v605 = vpop.f32.mrf.mxu0
  %606 = vmatprep.mubr.bf16.mxu0 %v278
  %607 = vmatmul.mubr.bf16.gmra.mxu0 %v277
  %v608 = vpop.f32.mrf.mxu0
  %v609 = vadd.f32 %v172, %v608
  %v610 = vpop.f32.mrf.mxu0
  %v611 = vpop.f32.mrf.mxu0
  %v612 = vadd.f32 %v172, %v611
  %v613 = vpop.f32.mrf.mxu0
  %614 = vmatprep.mubr.bf16.mxu0 %v283
  %615 = vmatmul.mubr.bf16.gmra.mxu0 %v282
  %v616 = vpop.f32.mrf.mxu0
  %v617 = vadd.f32 %v172, %v616
  %v618 = vpop.f32.mrf.mxu0
  %v619 = vpop.f32.mrf.mxu0
  %v620 = vadd.f32 %v172, %v619
  %v621 = vpop.f32.mrf.mxu0
  %622 = vmatprep.mubr.bf16.mxu0 %v288
  %623 = vmatmul.mubr.bf16.gmra.mxu0 %v287
  %v624 = vpop.f32.mrf.mxu0
  %v625 = vadd.f32 %v172, %v624
  %v626 = vpop.f32.mrf.mxu0
  %v627 = vpop.f32.mrf.mxu0
  %v628 = vpop.f32.mrf.mxu0
  %629 = vdwg.mxu0
  %630 = vmatprep.subr.bf16.mxu0 0
  %631 = vmatpush1.bf16.msra.mxu0 %v483
  %632 = vmatprep.subr.bf16.mxu0 0
  %633 = vmatpush1.bf16.msra.mxu0 %v482
  %634 = vmatprep.subr.bf16.mxu0 0
  %635 = vmatpush1.bf16.msra.mxu0 %v481
  %636 = vmatprep.subr.bf16.mxu0 0
  %637 = vmatpush1.bf16.msra.mxu0 %v480
  %638 = vmatprep.subr.bf16.mxu0 0
  %639 = vmatpush1.bf16.msra.mxu0 %v479
  %640 = vmatprep.subr.bf16.mxu0 0
  %641 = vmatpush1.bf16.msra.mxu0 %v478
  %642 = vmatprep.subr.bf16.mxu0 0
  %643 = vmatpush1.bf16.msra.mxu0 %v477
  %644 = vmatprep.subr.bf16.mxu0 0
  %645 = vmatpush1.bf16.msra.mxu0 %v476
  %646 = vmatprep.subr.bf16.mxu0 0
  %647 = vmatpush2.bf16.msra.mxu0 %v491
  %648 = vmatprep.subr.bf16.mxu0 0
  %649 = vmatpush2.bf16.msra.mxu0 %v490
  %650 = vmatprep.subr.bf16.mxu0 0
  %651 = vmatpush2.bf16.msra.mxu0 %v489
  %652 = vmatprep.subr.bf16.mxu0 0
  %653 = vmatpush2.bf16.msra.mxu0 %v488
  %654 = vmatprep.subr.bf16.mxu0 0
  %655 = vmatpush2.bf16.msra.mxu0 %v487
  %656 = vmatprep.subr.bf16.mxu0 0
  %657 = vmatpush2.bf16.msra.mxu0 %v486
  %658 = vmatprep.subr.bf16.mxu0 0
  %659 = vmatpush2.bf16.msra.mxu0 %v485
  %660 = vmatprep.subr.bf16.mxu0 0
  %661 = vmatpush2.bf16.msra.mxu0 %v484
  %662 = vmatprep.mubr.bf16.mxu0 %v265
  %663 = vmatmul.mubr.bf16.gmra.mxu0 %v264
  %v664 = vpop.f32.mrf.mxu0
  %v665 = vadd.f32 %v585, %v664
  %v666 = vpop.f32.mrf.mxu0
  %v667 = vpop.f32.mrf.mxu0
  %v668 = vadd.f32 %v588, %v667
  %v669 = vpop.f32.mrf.mxu0
  %670 = vmatprep.mubr.bf16.mxu0 %v270
  %671 = vmatmul.mubr.bf16.gmra.mxu0 %v269
  %v672 = vpop.f32.mrf.mxu0
  %v673 = vadd.f32 %v593, %v672
  %v674 = vpop.f32.mrf.mxu0
  %v675 = vpop.f32.mrf.mxu0
  %v676 = vadd.f32 %v596, %v675
  %v677 = vpop.f32.mrf.mxu0
  %678 = vmatprep.mubr.bf16.mxu0 %v275
  %679 = vmatmul.mubr.bf16.gmra.mxu0 %v274
  %v680 = vpop.f32.mrf.mxu0
  %v681 = vadd.f32 %v601, %v680
  %v682 = vpop.f32.mrf.mxu0
  %v683 = vpop.f32.mrf.mxu0
  %v684 = vadd.f32 %v604, %v683
  %v685 = vpop.f32.mrf.mxu0
  %686 = vmatprep.mubr.bf16.mxu0 %v280
  %687 = vmatmul.mubr.bf16.gmra.mxu0 %v279
  %v688 = vpop.f32.mrf.mxu0
  %v689 = vadd.f32 %v609, %v688
  %v690 = vpop.f32.mrf.mxu0
  %v691 = vpop.f32.mrf.mxu0
  %v692 = vadd.f32 %v612, %v691
  %v693 = vpop.f32.mrf.mxu0
  %694 = vmatprep.mubr.bf16.mxu0 %v285
  %695 = vmatmul.mubr.bf16.gmra.mxu0 %v284
  %v696 = vpop.f32.mrf.mxu0
  %v697 = vadd.f32 %v617, %v696
  %v698 = vpop.f32.mrf.mxu0
  %v699 = vpop.f32.mrf.mxu0
  %v700 = vadd.f32 %v620, %v699
  %v701 = vpop.f32.mrf.mxu0
  %702 = vmatprep.mubr.bf16.mxu0 %v290
  %703 = vmatmul.mubr.bf16.gmra.mxu0 %v289
  %v704 = vpop.f32.mrf.mxu0
  %v705 = vadd.f32 %v625, %v704
  %v706 = vpop.f32.mrf.mxu0
  %v707 = vpop.f32.mrf.mxu0
  %v708 = vpop.f32.mrf.mxu0
  %709 = vdwg.mxu0
  %710 = vmatprep.subr.bf16.mxu0 0
  %711 = vmatpush1.bf16.msra.mxu0 0
  %712 = vmatprep.subr.bf16.mxu0 0
  %713 = vmatpush1.bf16.msra.mxu0 0
  %714 = vmatprep.subr.bf16.mxu0 0
  %715 = vmatpush1.bf16.msra.mxu0 0
  %716 = vmatprep.subr.bf16.mxu0 0
  %717 = vmatpush1.bf16.msra.mxu0 0
  %718 = vmatprep.subr.bf16.mxu0 0
  %719 = vmatpush1.bf16.msra.mxu0 %v495
  %720 = vmatprep.subr.bf16.mxu0 0
  %721 = vmatpush1.bf16.msra.mxu0 %v494
  %722 = vmatprep.subr.bf16.mxu0 0
  %723 = vmatpush1.bf16.msra.mxu0 %v493
  %724 = vmatprep.subr.bf16.mxu0 0
  %725 = vmatpush1.bf16.msra.mxu0 %v492
  %726 = vmatprep.subr.bf16.mxu0 0
  %727 = vmatpush2.bf16.msra.mxu0 0
  %728 = vmatprep.subr.bf16.mxu0 0
  %729 = vmatpush2.bf16.msra.mxu0 0
  %730 = vmatprep.subr.bf16.mxu0 0
  %731 = vmatpush2.bf16.msra.mxu0 0
  %732 = vmatprep.subr.bf16.mxu0 0
  %733 = vmatpush2.bf16.msra.mxu0 0
  %734 = vmatprep.subr.bf16.mxu0 0
  %735 = vmatpush2.bf16.msra.mxu0 0
  %736 = vmatprep.subr.bf16.mxu0 0
  %737 = vmatpush2.bf16.msra.mxu0 0
  %738 = vmatprep.subr.bf16.mxu0 0
  %739 = vmatpush2.bf16.msra.mxu0 0
  %740 = vmatprep.subr.bf16.mxu0 0
  %741 = vmatpush2.bf16.msra.mxu0 0
  %742 = vmatprep.mubr.bf16.mxu0 0
  %743 = vmatmul.mubr.bf16.gmra.mxu0 %v533
  %v744 = vpop.f32.mrf.mxu0
  %v745 = vadd.f32 %v665, %v744
  %v746 = vpop.f32.mrf.mxu0
  %v747 = vpop.f32.mrf.mxu0
  %v748 = vadd.f32 %v668, %v747
  %v749 = vpop.f32.mrf.mxu0
  %750 = vmatprep.mubr.bf16.mxu0 0
  %751 = vmatmul.mubr.bf16.gmra.mxu0 %v536
  %v752 = vpop.f32.mrf.mxu0
  %v753 = vadd.f32 %v673, %v752
  %v754 = vpop.f32.mrf.mxu0
  %v755 = vpop.f32.mrf.mxu0
  %v756 = vadd.f32 %v676, %v755
  %v757 = vpop.f32.mrf.mxu0
  %758 = vmatprep.mubr.bf16.mxu0 0
  %759 = vmatmul.mubr.bf16.gmra.mxu0 %v539
  %v760 = vpop.f32.mrf.mxu0
  %v761 = vadd.f32 %v681, %v760
  %v762 = vpop.f32.mrf.mxu0
  %v763 = vpop.f32.mrf.mxu0
  %v764 = vadd.f32 %v684, %v763
  %v765 = vpop.f32.mrf.mxu0
  %766 = vmatprep.mubr.bf16.mxu0 0
  %767 = vmatmul.mubr.bf16.gmra.mxu0 %v542
  %v768 = vpop.f32.mrf.mxu0
  %v769 = vadd.f32 %v689, %v768
  %v770 = vpop.f32.mrf.mxu0
  %v771 = vpop.f32.mrf.mxu0
  %v772 = vadd.f32 %v692, %v771
  %v773 = vpop.f32.mrf.mxu0
  %774 = vmatprep.mubr.bf16.mxu0 0
  %775 = vmatmul.mubr.bf16.gmra.mxu0 %v545
  %v776 = vpop.f32.mrf.mxu0
  %v777 = vadd.f32 %v697, %v776
  %v778 = vpop.f32.mrf.mxu0
  %v779 = vpop.f32.mrf.mxu0
  %v780 = vadd.f32 %v700, %v779
  %v781 = vpop.f32.mrf.mxu0
  %782 = vmatprep.mubr.bf16.mxu0 0
  %783 = vmatmul.mubr.bf16.gmra.mxu0 %v548
  %v784 = vpop.f32.mrf.mxu0
  %v785 = vadd.f32 %v705, %v784
  %v786 = vpop.f32.mrf.mxu0
  %v787 = vpop.f32.mrf.mxu0
  %v788 = vpop.f32.mrf.mxu0
  %789 = vdwg.mxu0
  %v790 = vmax.f32 %v745, 0.0
  %v791 = vmax.f32 %v748, 0.0
  %v792 = vmax.f32 %v753, 0.0
  %v793 = vmax.f32 %v756, 0.0
  %v794 = vmax.f32 %v761, 0.0
  %v795 = vmax.f32 %v764, 0.0
  %v796 = vmax.f32 %v769, 0.0
  %v797 = vmax.f32 %v772, 0.0
  %v798 = vmax.f32 %v777, 0.0
  %v799 = vmax.f32 %v780, 0.0
  %v800 = vmax.f32 %v785, 0.0
  %801 = vst.msk [vmem:[#allocation2 + $0x4] sm:$0xff] %vm39, %v790
  %802 = vst.msk [vmem:[#allocation2 + $0xc] sm:$0xff] %vm39, %v791
  %803 = vst.msk [vmem:[#allocation2 + $0x14] sm:$0xff] %vm39, %v792
  %804 = vst.msk [vmem:[#allocation2 + $0x1c] sm:$0xff] %vm39, %v793
  %805 = vst.msk [vmem:[#allocation2 + $0x24] sm:$0xff] %vm39, %v794
  %vm806 = vcmask 518144
  %807 = vst.msk [vmem:[#allocation2 + $0x2c] sm:$0x7] %vm806, %v795
  %vm808 = vcmask 523267
  %809 = vst.msk [vmem:[#allocation2 + $0x34] sm:$0xf8] %vm808, %v795
  %810 = vst.msk [vmem:[#allocation2 + $0x3c] sm:$0xff] %vm39, %v796
  %811 = vst.msk [vmem:[#allocation2 + $0x44] sm:$0xff] %vm39, %v797
  %812 = vst.msk [vmem:[#allocation2 + $0x4c] sm:$0xff] %vm39, %v798
  %813 = vst.msk [vmem:[#allocation2 + $0x54] sm:$0xff] %vm39, %v799
  %814 = vst.msk [vmem:[#allocation2 + $0x5c] sm:$0x3f] %vm52, %v800
  %v815 = vld [vmem:[#allocation2] ss:$4 sm:$0xff]
  %s816 = scalar_lea.vmem [#allocation2], 32
  %v817 = vld [vmem:[%s816] ss:$4 sm:$0x7]
  %s818 = scalar_lea.vmem [#allocation2], 1
  %v819 = vld [vmem:[%s818] ss:$4 sm:$0xff]
  %s820 = scalar_lea.vmem [#allocation2], 33
  %v821 = vld [vmem:[%s820] ss:$4 sm:$0x7]
  %s822 = scalar_lea.vmem [#allocation2], 2
  %v823 = vld [vmem:[%s822] ss:$4 sm:$0xff]
  %s824 = scalar_lea.vmem [#allocation2], 34
  %v825 = vld [vmem:[%s824] ss:$4 sm:$0x7]
  %s826 = scalar_lea.vmem [#allocation2], 3
  %v827 = vld [vmem:[%s826] ss:$4 sm:$0xff]
  %s828 = scalar_lea.vmem [#allocation2], 35
  %v829 = vld [vmem:[%s828] ss:$4 sm:$0x7]
  %s830 = scalar_lea.vmem [#allocation2], 4
  %v831 = vld [vmem:[%s830] ss:$4 sm:$0xff]
  %s832 = scalar_lea.vmem [#allocation2], 36
  %v833 = vld [vmem:[%s832] ss:$4 sm:$0x7]
  %s834 = scalar_lea.vmem [#allocation2], 5
  %v835 = vld [vmem:[%s834] ss:$4 sm:$0xff]
  %s836 = scalar_lea.vmem [#allocation2], 37
  %v837 = vld [vmem:[%s836] ss:$4 sm:$0x7]
  %s838 = scalar_lea.vmem [#allocation2], 6
  %v839 = vld [vmem:[%s838] ss:$4 sm:$0xff]
  %s840 = scalar_lea.vmem [#allocation2], 38
  %v841 = vld [vmem:[%s840] ss:$4 sm:$0x7]
  %s842 = scalar_lea.vmem [#allocation2], 7
  %v843 = vld [vmem:[%s842] ss:$4 sm:$0xff]
  %s844 = scalar_lea.vmem [#allocation2], 39
  %v845 = vld [vmem:[%s844] ss:$4 sm:$0x7]
  %848 = vrot.lane.b32.xlu0 %v819, 64
  %v849 = vpop.permute.xlu0 %848
  %850 = vrot.lane.b32.xlu0 %v821, 64
  %v851 = vpop.permute.xlu0 %850
  %856 = vrot.lane.b32.xlu0 %v827, 64
  %v857 = vpop.permute.xlu0 %856
  %858 = vrot.lane.b32.xlu0 %v829, 64
  %v859 = vpop.permute.xlu0 %858
  %864 = vrot.lane.b32.xlu0 %v835, 64
  %v865 = vpop.permute.xlu0 %864
  %866 = vrot.lane.b32.xlu0 %v837, 64
  %v867 = vpop.permute.xlu0 %866
  %872 = vrot.lane.b32.xlu0 %v843, 64
  %v873 = vpop.permute.xlu0 %872
  %874 = vrot.lane.b32.xlu0 %v845, 64
  %v875 = vpop.permute.xlu0 %874
  %v878 = vsel %vm39, %v815, %v849
  %v879 = vsel %vm39, %v817, %v851
  %v880 = vsel %vm39, %v823, %v857
  %v881 = vsel %vm39, %v825, %v859
  %v882 = vsel %vm39, %v831, %v865
  %v883 = vsel %vm39, %v833, %v867
  %v884 = vsel %vm39, %v839, %v873
  %v885 = vsel %vm39, %v841, %v875
  %s886 = scalar_lea.vmem [#allocation2], 51
  %v887 = vld [vmem:[%s886] ss:$4 sm:$0xff]
  %s888 = scalar_lea.vmem [#allocation2], 83
  %v889 = vld [vmem:[%s888] ss:$4 sm:$0x7]
  %s890 = scalar_lea.vmem [#allocation2], 52
  %v891 = vld [vmem:[%s890] ss:$4 sm:$0xff]
  %s892 = scalar_lea.vmem [#allocation2], 84
  %v893 = vld [vmem:[%s892] ss:$4 sm:$0x7]
  %s894 = scalar_lea.vmem [#allocation2], 53
  %v895 = vld [vmem:[%s894] ss:$4 sm:$0xff]
  %s896 = scalar_lea.vmem [#allocation2], 85
  %v897 = vld [vmem:[%s896] ss:$4 sm:$0x7]
  %s898 = scalar_lea.vmem [#allocation2], 54
  %v899 = vld [vmem:[%s898] ss:$4 sm:$0xff]
  %s900 = scalar_lea.vmem [#allocation2], 86
  %v901 = vld [vmem:[%s900] ss:$4 sm:$0x7]
  %s902 = scalar_lea.vmem [#allocation2], 55
  %v903 = vld [vmem:[%s902] ss:$4 sm:$0xff]
  %s904 = scalar_lea.vmem [#allocation2], 87
  %v905 = vld [vmem:[%s904] ss:$4 sm:$0x7]
  %s906 = scalar_lea.vmem [#allocation2], 56
  %v907 = vld [vmem:[%s906] ss:$4 sm:$0xff]
  %s908 = scalar_lea.vmem [#allocation2], 88
  %v909 = vld [vmem:[%s908] ss:$4 sm:$0x7]
  %s910 = scalar_lea.vmem [#allocation2], 57
  %v911 = vld [vmem:[%s910] ss:$4 sm:$0xff]
  %s912 = scalar_lea.vmem [#allocation2], 89
  %v913 = vld [vmem:[%s912] ss:$4 sm:$0x7]
  %s914 = scalar_lea.vmem [#allocation2], 58
  %v915 = vld [vmem:[%s914] ss:$4 sm:$0xff]
  %s916 = scalar_lea.vmem [#allocation2], 90
  %v917 = vld [vmem:[%s916] ss:$4 sm:$0x7]
  %920 = vrot.lane.b32.xlu0 %v891, 64
  %v921 = vpop.permute.xlu0 %920
  %922 = vrot.lane.b32.xlu0 %v893, 64
  %v923 = vpop.permute.xlu0 %922
  %928 = vrot.lane.b32.xlu0 %v899, 64
  %v929 = vpop.permute.xlu0 %928
  %930 = vrot.lane.b32.xlu0 %v901, 64
  %v931 = vpop.permute.xlu0 %930
  %936 = vrot.lane.b32.xlu0 %v907, 64
  %v937 = vpop.permute.xlu0 %936
  %938 = vrot.lane.b32.xlu0 %v909, 64
  %v939 = vpop.permute.xlu0 %938
  %944 = vrot.lane.b32.xlu0 %v915, 64
  %v945 = vpop.permute.xlu0 %944
  %946 = vrot.lane.b32.xlu0 %v917, 64
  %v947 = vpop.permute.xlu0 %946
  %v950 = vsel %vm39, %v887, %v921
  %v951 = vsel %vm39, %v889, %v923
  %v952 = vsel %vm39, %v895, %v929
  %v953 = vsel %vm39, %v897, %v931
  %v954 = vsel %vm39, %v903, %v937
  %v955 = vsel %vm39, %v905, %v939
  %v956 = vsel %vm39, %v911, %v945
  %v957 = vsel %vm39, %v913, %v947
  %vm966 = vcmask 1042432
  %v967 = vrot.slane %v950, 5
  %v968 = vrot.slane %v952, 5
  %v969 = vrot.slane %v954, 5
  %v970 = vrot.slane %v956, 5
  %v971 = vrot.slane %v951, 5
  %v972 = vsel %vm966, %v967, %v971
  %v973 = vrot.slane %v953, 5
  %v974 = vsel %vm966, %v968, %v973
  %v975 = vrot.slane %v955, 5
  %v976 = vsel %vm966, %v969, %v975
  %v977 = vrot.slane %v957, 5
  %v978 = vsel %vm966, %v970, %v977
  %v987 = vsel %vm966, %v879, %v967
  %v988 = vsel %vm966, %v881, %v968
  %v989 = vsel %vm966, %v883, %v969
  %v990 = vsel %vm966, %v885, %v970
  %v991 = vpack.c.bf16 %v987, %v878
  %v992 = vpack.c.bf16 %v988, %v880
  %v993 = vpack.c.bf16 %v989, %v882
  %v994 = vpack.c.bf16 %v990, %v884
  %v995 = vpack.c.bf16 %v972, %v972
  %v996 = vpack.c.bf16 %v974, %v974
  %v997 = vpack.c.bf16 %v976, %v976
  %v998 = vpack.c.bf16 %v978, %v978
  %v999 = vld [vmem:[%s3] sm:$0xf]
  %v1000 = vld [vmem:[%s3 + $0x4] sm:$0xf]
  %v1001 = vld [vmem:[%s3 + $0x8] sm:$0xf]
  %v1002 = vld [vmem:[%s3 + $0xc] sm:$0xf]
  %v1003 = vld [vmem:[%s3 + $0x10] sm:$0xf]
  %v1004 = vld [vmem:[%s3 + $0x14] sm:$0xf]
  %v1005 = vld [vmem:[%s3 + $0x18] sm:$0xf]
  %v1006 = vld [vmem:[%s3 + $0x1c] sm:$0xf]
  %v1007 = vld [vmem:[%s3 + $0x20] sm:$0xf]
  %v1008 = vld [vmem:[%s3 + $0x24] sm:$0xf]
  %v1009 = vld [vmem:[%s3 + $0x28] sm:$0xf]
  %v1010 = vld [vmem:[%s3 + $0x2c] sm:$0xf]
  %v1011 = vld [vmem:[%s3 + $0x30] sm:$0xf]
  %v1012 = vld [vmem:[%s3 + $0x34] sm:$0xf]
  %v1013 = vld [vmem:[%s3 + $0x38] sm:$0xf]
  %v1014 = vld [vmem:[%s3 + $0x3c] sm:$0xf]
  %v1015 = vld [vmem:[%s3 + $0x40] sm:$0xf]
  %v1016 = vld [vmem:[%s3 + $0x44] sm:$0xf]
  %v1017 = vld [vmem:[%s3 + $0x48] sm:$0xf]
  %v1018 = vld [vmem:[%s3 + $0x4c] sm:$0xf]
  %v1019 = vld [vmem:[%s3 + $0x50] sm:$0xf]
  %v1020 = vld [vmem:[%s3 + $0x54] sm:$0xf]
  %v1021 = vld [vmem:[%s3 + $0x58] sm:$0xf]
  %v1022 = vld [vmem:[%s3 + $0x5c] sm:$0xf]
  %v1023 = vld [vmem:[%s3 + $0x60] sm:$0xf]
  %v1024 = vld [vmem:[%s3 + $0x64] sm:$0xf]
  %v1025 = vld [vmem:[%s3 + $0x68] sm:$0xf]
  %v1026 = vld [vmem:[%s3 + $0x6c] sm:$0xf]
  %v1027 = vld [vmem:[%s3 + $0x70] sm:$0xf]
  %v1028 = vld [vmem:[%s3 + $0x74] sm:$0xf]
  %v1029 = vld [vmem:[%s3 + $0x78] sm:$0xf]
  %v1030 = vld [vmem:[%s3 + $0x7c] sm:$0xf]
  %v1031 = vld [vmem:[%s3 + $0x80] sm:$0xf]
  %v1032 = vld [vmem:[%s3 + $0x84] sm:$0xf]
  %v1033 = vld [vmem:[%s3 + $0x88] sm:$0xf]
  %v1034 = vld [vmem:[%s3 + $0x8c] sm:$0xf]
  %v1035 = vld [vmem:[%s3 + $0x90] sm:$0xf]
  %v1036 = vld [vmem:[%s3 + $0x94] sm:$0xf]
  %v1037 = vld [vmem:[%s3 + $0x98] sm:$0xf]
  %v1038 = vld [vmem:[%s3 + $0x9c] sm:$0xf]
  %v1039 = vld [vmem:[%s3 + $0xa0] sm:$0xf]
  %v1040 = vld [vmem:[%s3 + $0xa4] sm:$0xf]
  %v1041 = vld [vmem:[%s3 + $0xa8] sm:$0xf]
  %v1042 = vld [vmem:[%s3 + $0xac] sm:$0xf]
  %v1043 = vld [vmem:[%s3 + $0xb0] sm:$0xf]
  %v1044 = vld [vmem:[%s3 + $0xb4] sm:$0xf]
  %v1045 = vld [vmem:[%s3 + $0xb8] sm:$0xf]
  %v1046 = vld [vmem:[%s3 + $0xbc] sm:$0xf]
  %v1047 = vld [vmem:[%s3 + $0xc0] sm:$0xf]
  %v1048 = vld [vmem:[%s3 + $0xc4] sm:$0xf]
  %v1049 = vld [vmem:[%s3 + $0xc8] sm:$0xf]
  %v1050 = vld [vmem:[%s3 + $0xcc] sm:$0xf]
  %v1051 = vld [vmem:[%s3 + $0xd0] sm:$0xf]
  %v1052 = vld [vmem:[%s3 + $0xd4] sm:$0xf]
  %v1053 = vld [vmem:[%s3 + $0xd8] sm:$0xf]
  %v1054 = vld [vmem:[%s3 + $0xdc] sm:$0xf]
  %v1055 = vld [vmem:[%s3 + $0xe0] sm:$0xf]
  %v1056 = vld [vmem:[%s3 + $0xe4] sm:$0xf]
  %v1057 = vld [vmem:[%s3 + $0xe8] sm:$0xf]
  %v1058 = vld [vmem:[%s3 + $0xec] sm:$0xf]
  %v1059 = vld [vmem:[%s3 + $0xf0] sm:$0xf]
  %v1060 = vld [vmem:[%s3 + $0xf4] sm:$0xf]
  %v1061 = vld [vmem:[%s3 + $0xf8] sm:$0xf]
  %v1062 = vld [vmem:[%s3 + $0xfc] sm:$0xf]
  %v1063 = vld [vmem:[%s4] sm:$0x1]
  %v1065 = vlaneseq
  %v1066 = vshrl.u32 %v1065, 7
  %v1067 = vsub.s32 0, %v1066
  %v1068 = vrot.slane %v1063, %v1067
  %v1134 = vunpack.c.l.b16 %v999
  %v1135 = vunpack.c.l.b16 %v1000
  %v1136 = vunpack.c.l.b16 %v1001
  %v1137 = vunpack.c.l.b16 %v1002
  %v1138 = vunpack.c.l.b16 %v1003
  %v1139 = vunpack.c.l.b16 %v1004
  %v1140 = vunpack.c.l.b16 %v1005
  %v1141 = vunpack.c.l.b16 %v1006
  %v1142 = vunpack.c.l.b16 %v1007
  %v1143 = vunpack.c.l.b16 %v1008
  %v1144 = vunpack.c.l.b16 %v1009
  %v1145 = vunpack.c.l.b16 %v1010
  %v1146 = vunpack.c.l.b16 %v1011
  %v1147 = vunpack.c.l.b16 %v1012
  %v1148 = vunpack.c.l.b16 %v1013
  %v1149 = vunpack.c.l.b16 %v1014
  %v1150 = vunpack.c.l.b16 %v1015
  %v1151 = vunpack.c.l.b16 %v1016
  %v1152 = vunpack.c.l.b16 %v1017
  %v1153 = vunpack.c.l.b16 %v1018
  %v1154 = vunpack.c.l.b16 %v1019
  %v1155 = vunpack.c.l.b16 %v1020
  %v1156 = vunpack.c.l.b16 %v1021
  %v1157 = vunpack.c.l.b16 %v1022
  %v1158 = vunpack.c.l.b16 %v1023
  %v1159 = vunpack.c.l.b16 %v1024
  %v1160 = vunpack.c.l.b16 %v1025
  %v1161 = vunpack.c.l.b16 %v1026
  %v1162 = vunpack.c.l.b16 %v1027
  %v1163 = vunpack.c.l.b16 %v1028
  %v1164 = vunpack.c.l.b16 %v1029
  %v1165 = vunpack.c.l.b16 %v1030
  %v1166 = vunpack.c.l.b16 %v1031
  %v1167 = vunpack.c.l.b16 %v1032
  %v1168 = vunpack.c.l.b16 %v1033
  %v1169 = vunpack.c.l.b16 %v1034
  %v1170 = vunpack.c.l.b16 %v1035
  %v1171 = vunpack.c.l.b16 %v1036
  %v1172 = vunpack.c.l.b16 %v1037
  %v1173 = vunpack.c.l.b16 %v1038
  %v1174 = vunpack.c.l.b16 %v1039
  %v1175 = vunpack.c.l.b16 %v1040
  %v1176 = vunpack.c.l.b16 %v1041
  %v1177 = vunpack.c.l.b16 %v1042
  %v1178 = vunpack.c.l.b16 %v1043
  %v1179 = vunpack.c.l.b16 %v1044
  %v1180 = vunpack.c.l.b16 %v1045
  %v1181 = vunpack.c.l.b16 %v1046
  %v1182 = vunpack.c.l.b16 %v1047
  %v1183 = vunpack.c.l.b16 %v1048
  %v1184 = vunpack.c.l.b16 %v1049
  %v1185 = vunpack.c.l.b16 %v1050
  %v1186 = vunpack.c.l.b16 %v1051
  %v1187 = vunpack.c.l.b16 %v1052
  %v1188 = vunpack.c.l.b16 %v1053
  %v1189 = vunpack.c.l.b16 %v1054
  %v1190 = vunpack.c.l.b16 %v1055
  %v1191 = vunpack.c.l.b16 %v1056
  %v1192 = vunpack.c.l.b16 %v1057
  %v1193 = vunpack.c.l.b16 %v1058
  %v1194 = vunpack.c.l.b16 %v1059
  %v1195 = vunpack.c.l.b16 %v1060
  %v1196 = vunpack.c.l.b16 %v1061
  %v1197 = vunpack.c.l.b16 %v1062
  %v1198 = vpack.c.b16 %v1135, %v1134
  %v1199 = vpack.c.b16 %v1137, %v1136
  %v1200 = vpack.c.b16 %v1139, %v1138
  %v1201 = vpack.c.b16 %v1141, %v1140
  %v1202 = vpack.c.b16 %v1143, %v1142
  %v1203 = vpack.c.b16 %v1145, %v1144
  %v1204 = vpack.c.b16 %v1147, %v1146
  %v1205 = vpack.c.b16 %v1149, %v1148
  %v1206 = vpack.c.b16 %v1151, %v1150
  %v1207 = vpack.c.b16 %v1153, %v1152
  %v1208 = vpack.c.b16 %v1155, %v1154
  %v1209 = vpack.c.b16 %v1157, %v1156
  %v1210 = vpack.c.b16 %v1159, %v1158
  %v1211 = vpack.c.b16 %v1161, %v1160
  %v1212 = vpack.c.b16 %v1163, %v1162
  %v1213 = vpack.c.b16 %v1165, %v1164
  %v1214 = vpack.c.b16 %v1167, %v1166
  %v1215 = vpack.c.b16 %v1169, %v1168
  %v1216 = vpack.c.b16 %v1171, %v1170
  %v1217 = vpack.c.b16 %v1173, %v1172
  %v1218 = vpack.c.b16 %v1175, %v1174
  %v1219 = vpack.c.b16 %v1177, %v1176
  %v1220 = vpack.c.b16 %v1179, %v1178
  %v1221 = vpack.c.b16 %v1181, %v1180
  %v1222 = vpack.c.b16 %v1183, %v1182
  %v1223 = vpack.c.b16 %v1185, %v1184
  %v1224 = vpack.c.b16 %v1187, %v1186
  %v1225 = vpack.c.b16 %v1189, %v1188
  %v1226 = vpack.c.b16 %v1191, %v1190
  %v1227 = vpack.c.b16 %v1193, %v1192
  %v1228 = vpack.c.b16 %v1195, %v1194
  %v1229 = vpack.c.b16 %v1197, %v1196
  %1262 = vmatprep.subr.bf16.mxu0 0
  %1263 = vmatpush1.bf16.msra.mxu0 %v1205
  %1264 = vmatprep.subr.bf16.mxu0 0
  %1265 = vmatpush1.bf16.msra.mxu0 %v1204
  %1266 = vmatprep.subr.bf16.mxu0 0
  %1267 = vmatpush1.bf16.msra.mxu0 %v1203
  %1268 = vmatprep.subr.bf16.mxu0 0
  %1269 = vmatpush1.bf16.msra.mxu0 %v1202
  %1270 = vmatprep.subr.bf16.mxu0 0
  %1271 = vmatpush1.bf16.msra.mxu0 %v1201
  %1272 = vmatprep.subr.bf16.mxu0 0
  %1273 = vmatpush1.bf16.msra.mxu0 %v1200
  %1274 = vmatprep.subr.bf16.mxu0 0
  %1275 = vmatpush1.bf16.msra.mxu0 %v1199
  %1276 = vmatprep.subr.bf16.mxu0 0
  %1277 = vmatpush1.bf16.msra.mxu0 %v1198
  %1278 = vmatprep.subr.bf16.mxu0 0
  %1279 = vmatpush2.bf16.msra.mxu0 %v1213
  %1280 = vmatprep.subr.bf16.mxu0 0
  %1281 = vmatpush2.bf16.msra.mxu0 %v1212
  %1282 = vmatprep.subr.bf16.mxu0 0
  %1283 = vmatpush2.bf16.msra.mxu0 %v1211
  %1284 = vmatprep.subr.bf16.mxu0 0
  %1285 = vmatpush2.bf16.msra.mxu0 %v1210
  %1286 = vmatprep.subr.bf16.mxu0 0
  %1287 = vmatpush2.bf16.msra.mxu0 %v1209
  %1288 = vmatprep.subr.bf16.mxu0 0
  %1289 = vmatpush2.bf16.msra.mxu0 %v1208
  %1290 = vmatprep.subr.bf16.mxu0 0
  %1291 = vmatpush2.bf16.msra.mxu0 %v1207
  %1292 = vmatprep.subr.bf16.mxu0 0
  %1293 = vmatpush2.bf16.msra.mxu0 %v1206
  %1294 = vmatprep.mubr.bf16.mxu0 %v992
  %1295 = vmatmul.mubr.bf16.gmra.mxu0 %v991
  %v1296 = vpop.f32.mrf.mxu0
  %v1297 = vadd.f32 %v1068, %v1296
  %v1298 = vpop.f32.mrf.mxu0
  %v1299 = vpop.f32.mrf.mxu0
  %v1300 = vadd.f32 %v1068, %v1299
  %v1301 = vpop.f32.mrf.mxu0
  %1302 = vmatprep.mubr.bf16.mxu0 %v996
  %1303 = vmatmul.mubr.bf16.gmra.mxu0 %v995
  %v1304 = vpop.f32.mrf.mxu0
  %v1305 = vadd.f32 %v1068, %v1304
  %v1306 = vpop.f32.mrf.mxu0
  %v1307 = vpop.f32.mrf.mxu0
  %v1308 = vpop.f32.mrf.mxu0
  %1309 = vdwg.mxu0
  %1310 = vmatprep.subr.bf16.mxu0 0
  %1311 = vmatpush1.bf16.msra.mxu0 %v1221
  %1312 = vmatprep.subr.bf16.mxu0 0
  %1313 = vmatpush1.bf16.msra.mxu0 %v1220
  %1314 = vmatprep.subr.bf16.mxu0 0
  %1315 = vmatpush1.bf16.msra.mxu0 %v1219
  %1316 = vmatprep.subr.bf16.mxu0 0
  %1317 = vmatpush1.bf16.msra.mxu0 %v1218
  %1318 = vmatprep.subr.bf16.mxu0 0
  %1319 = vmatpush1.bf16.msra.mxu0 %v1217
  %1320 = vmatprep.subr.bf16.mxu0 0
  %1321 = vmatpush1.bf16.msra.mxu0 %v1216
  %1322 = vmatprep.subr.bf16.mxu0 0
  %1323 = vmatpush1.bf16.msra.mxu0 %v1215
  %1324 = vmatprep.subr.bf16.mxu0 0
  %1325 = vmatpush1.bf16.msra.mxu0 %v1214
  %1326 = vmatprep.subr.bf16.mxu0 0
  %1327 = vmatpush2.bf16.msra.mxu0 %v1229
  %1328 = vmatprep.subr.bf16.mxu0 0
  %1329 = vmatpush2.bf16.msra.mxu0 %v1228
  %1330 = vmatprep.subr.bf16.mxu0 0
  %1331 = vmatpush2.bf16.msra.mxu0 %v1227
  %1332 = vmatprep.subr.bf16.mxu0 0
  %1333 = vmatpush2.bf16.msra.mxu0 %v1226
  %1334 = vmatprep.subr.bf16.mxu0 0
  %1335 = vmatpush2.bf16.msra.mxu0 %v1225
  %1336 = vmatprep.subr.bf16.mxu0 0
  %1337 = vmatpush2.bf16.msra.mxu0 %v1224
  %1338 = vmatprep.subr.bf16.mxu0 0
  %1339 = vmatpush2.bf16.msra.mxu0 %v1223
  %1340 = vmatprep.subr.bf16.mxu0 0
  %1341 = vmatpush2.bf16.msra.mxu0 %v1222
  %1342 = vmatprep.mubr.bf16.mxu0 %v994
  %1343 = vmatmul.mubr.bf16.gmra.mxu0 %v993
  %v1344 = vpop.f32.mrf.mxu0
  %v1345 = vadd.f32 %v1297, %v1344
  %v1346 = vpop.f32.mrf.mxu0
  %v1347 = vpop.f32.mrf.mxu0
  %v1348 = vadd.f32 %v1300, %v1347
  %v1349 = vpop.f32.mrf.mxu0
  %1350 = vmatprep.mubr.bf16.mxu0 %v998
  %1351 = vmatmul.mubr.bf16.gmra.mxu0 %v997
  %v1352 = vpop.f32.mrf.mxu0
  %v1353 = vadd.f32 %v1305, %v1352
  %v1354 = vpop.f32.mrf.mxu0
  %v1355 = vpop.f32.mrf.mxu0
  %v1356 = vpop.f32.mrf.mxu0
  %1357 = vdwg.mxu0
  %v1358 = vmax.f32 %v1345, 0.0
  %v1359 = vmax.f32 %v1348, 0.0
  %v1360 = vmax.f32 %v1353, 0.0
  %1361 = vst [vmem:[#allocation3 + $0x2] sm:$0xff] %v1358
  %1362 = vst [vmem:[#allocation3 + $0xa] sm:$0x7] %v1359
  %1363 = vst [vmem:[#allocation3 + $0xe] sm:$0xf8] %v1359
  %1364 = vst [vmem:[#allocation3 + $0x16] sm:$0x3f] %v1360
  %v1365 = vld [vmem:[#allocation3] ss:$2 sm:$0x3f]
  %s1366 = scalar_lea.vmem [#allocation3], 1
  %v1367 = vld [vmem:[%s1366] ss:$2 sm:$0x3f]
  %s1368 = scalar_lea.vmem [#allocation3], 2
  %v1369 = vld [vmem:[%s1368] ss:$2 sm:$0x3f]
  %s1370 = scalar_lea.vmem [#allocation3], 3
  %v1371 = vld [vmem:[%s1370] ss:$2 sm:$0x3f]
  %s1372 = scalar_lea.vmem [#allocation3], 4
  %v1373 = vld [vmem:[%s1372] ss:$2 sm:$0x3f]
  %s1374 = scalar_lea.vmem [#allocation3], 15
  %v1375 = vld [vmem:[%s1374] ss:$2 sm:$0x3f]
  %s1376 = scalar_lea.vmem [#allocation3], 16
  %v1377 = vld [vmem:[%s1376] ss:$2 sm:$0x3f]
  %s1378 = scalar_lea.vmem [#allocation3], 17
  %v1379 = vld [vmem:[%s1378] ss:$2 sm:$0x3f]
  %s1380 = scalar_lea.vmem [#allocation3], 18
  %v1381 = vld [vmem:[%s1380] ss:$2 sm:$0x3f]
  %s1382 = scalar_lea.vmem [#allocation3], 19
  %v1383 = vld [vmem:[%s1382] ss:$2 sm:$0x3f]
  %v1389 = vrot.slane %v1375, 2
  %v1390 = vrot.slane %v1377, 2
  %v1391 = vrot.slane %v1379, 2
  %v1392 = vrot.slane %v1381, 2
  %v1393 = vrot.slane %v1383, 2
  %vm1399 = vcmask 1045504
  %v1400 = vsel %vm1399, %v1365, %v1389
  %v1401 = vsel %vm1399, %v1367, %v1390
  %v1402 = vsel %vm1399, %v1369, %v1391
  %v1403 = vsel %vm1399, %v1371, %v1392
  %v1404 = vsel %vm1399, %v1373, %v1393
  %v1405 = vpack.c.bf16 %v1389, %v1400
  %v1406 = vpack.c.bf16 %v1390, %v1401
  %v1407 = vpack.c.bf16 %v1391, %v1402
  %v1408 = vpack.c.bf16 %v1392, %v1403
  %v1409 = vpack.c.bf16 %v1393, %v1404
  %v1410 = vld [vmem:[%s5] sm:$0xff]
  %v1411 = vld [vmem:[%s5 + $0x8] sm:$0xff]
  %v1412 = vld [vmem:[%s5 + $0x10] sm:$0xff]
  %v1413 = vld [vmem:[%s5 + $0x18] sm:$0xff]
  %v1414 = vld [vmem:[%s5 + $0x20] sm:$0xff]
  %v1415 = vld [vmem:[%s5 + $0x28] sm:$0xff]
  %v1416 = vld [vmem:[%s5 + $0x30] sm:$0xff]
  %v1417 = vld [vmem:[%s5 + $0x38] sm:$0xff]
  %v1418 = vld [vmem:[%s5 + $0x40] sm:$0xff]
  %v1419 = vld [vmem:[%s5 + $0x48] sm:$0xff]
  %v1420 = vld [vmem:[%s5 + $0x50] sm:$0xff]
  %v1421 = vld [vmem:[%s5 + $0x58] sm:$0xff]
  %v1422 = vld [vmem:[%s5 + $0x60] sm:$0xff]
  %v1423 = vld [vmem:[%s5 + $0x68] sm:$0xff]
  %v1424 = vld [vmem:[%s5 + $0x70] sm:$0xff]
  %v1425 = vld [vmem:[%s5 + $0x78] sm:$0xff]
  %v1426 = vld [vmem:[%s5 + $0x80] sm:$0xff]
  %v1427 = vld [vmem:[%s5 + $0x88] sm:$0xff]
  %v1428 = vld [vmem:[%s5 + $0x90] sm:$0xff]
  %v1429 = vld [vmem:[%s5 + $0x98] sm:$0xff]
  %v1430 = vld [vmem:[%s5 + $0xa0] sm:$0xff]
  %v1431 = vld [vmem:[%s5 + $0xa8] sm:$0xff]
  %v1432 = vld [vmem:[%s5 + $0xb0] sm:$0xff]
  %v1433 = vld [vmem:[%s5 + $0xb8] sm:$0xff]
  %v1434 = vld [vmem:[%s5 + $0xc0] sm:$0xff]
  %v1435 = vld [vmem:[%s5 + $0xc8] sm:$0xff]
  %v1436 = vld [vmem:[%s5 + $0xd0] sm:$0xff]
  %v1437 = vld [vmem:[%s5 + $0xd8] sm:$0xff]
  %v1438 = vld [vmem:[%s5 + $0xe0] sm:$0xff]
  %v1439 = vld [vmem:[%s5 + $0xe8] sm:$0xff]
  %v1440 = vld [vmem:[%s5 + $0xf0] sm:$0xff]
  %v1441 = vld [vmem:[%s5 + $0xf8] sm:$0xff]
  %v1442 = vld [vmem:[%s5 + $0x100] sm:$0xff]
  %v1443 = vld [vmem:[%s5 + $0x108] sm:$0xff]
  %v1444 = vld [vmem:[%s5 + $0x110] sm:$0xff]
  %v1445 = vld [vmem:[%s5 + $0x118] sm:$0xff]
  %v1446 = vld [vmem:[%s5 + $0x120] sm:$0xff]
  %v1447 = vld [vmem:[%s5 + $0x128] sm:$0xff]
  %v1448 = vld [vmem:[%s5 + $0x130] sm:$0xff]
  %v1449 = vld [vmem:[%s5 + $0x138] sm:$0xff]
  %v1450 = vld [vmem:[%s5 + $0x140] sm:$0xff]
  %v1451 = vld [vmem:[%s5 + $0x148] sm:$0xff]
  %v1452 = vld [vmem:[%s5 + $0x150] sm:$0xff]
  %v1453 = vld [vmem:[%s5 + $0x158] sm:$0xff]
  %v1454 = vld [vmem:[%s5 + $0x160] sm:$0xff]
  %v1455 = vld [vmem:[%s5 + $0x168] sm:$0xff]
  %v1456 = vld [vmem:[%s5 + $0x170] sm:$0xff]
  %v1457 = vld [vmem:[%s5 + $0x178] sm:$0xff]
  %v1458 = vld [vmem:[%s5 + $0x180] sm:$0xff]
  %v1459 = vld [vmem:[%s5 + $0x188] sm:$0xff]
  %v1460 = vld [vmem:[%s5 + $0x190] sm:$0xff]
  %v1461 = vld [vmem:[%s5 + $0x198] sm:$0xff]
  %v1462 = vld [vmem:[%s5 + $0x1a0] sm:$0xff]
  %v1463 = vld [vmem:[%s5 + $0x1a8] sm:$0xff]
  %v1464 = vld [vmem:[%s5 + $0x1b0] sm:$0xff]
  %v1465 = vld [vmem:[%s5 + $0x1b8] sm:$0xff]
  %v1466 = vld [vmem:[%s5 + $0x1c0] sm:$0xff]
  %v1467 = vld [vmem:[%s5 + $0x1c8] sm:$0xff]
  %v1468 = vld [vmem:[%s5 + $0x1d0] sm:$0xff]
  %v1469 = vld [vmem:[%s5 + $0x1d8] sm:$0xff]
  %v1470 = vld [vmem:[%s5 + $0x1e0] sm:$0xff]
  %v1471 = vld [vmem:[%s5 + $0x1e8] sm:$0xff]
  %v1472 = vld [vmem:[%s5 + $0x1f0] sm:$0xff]
  %v1473 = vld [vmem:[%s5 + $0x1f8] sm:$0xff]
  %v1474 = vld [vmem:[%s5 + $0x200] sm:$0xff]
  %v1475 = vld [vmem:[%s5 + $0x208] sm:$0xff]
  %v1476 = vld [vmem:[%s5 + $0x210] sm:$0xff]
  %v1477 = vld [vmem:[%s5 + $0x218] sm:$0xff]
  %v1478 = vld [vmem:[%s5 + $0x220] sm:$0xff]
  %v1479 = vld [vmem:[%s5 + $0x228] sm:$0xff]
  %v1480 = vld [vmem:[%s5 + $0x230] sm:$0xff]
  %v1481 = vld [vmem:[%s5 + $0x238] sm:$0xff]
  %v1482 = vld [vmem:[%s5 + $0x240] sm:$0xff]
  %v1483 = vld [vmem:[%s5 + $0x248] sm:$0xff]
  %v1484 = vld [vmem:[%s5 + $0x250] sm:$0xff]
  %v1485 = vld [vmem:[%s5 + $0x258] sm:$0xff]
  %v1486 = vld [vmem:[%s5 + $0x260] sm:$0xff]
  %v1487 = vld [vmem:[%s5 + $0x268] sm:$0xff]
  %v1488 = vld [vmem:[%s5 + $0x270] sm:$0xff]
  %v1489 = vld [vmem:[%s5 + $0x278] sm:$0xff]
  %v1490 = vld [vmem:[%s6] sm:$0x3]
  %v1492 = vlaneseq
  %v1493 = vshrl.u32 %v1492, 7
  %v1494 = vsub.s32 0, %v1493
  %v1495 = vrot.slane %v1490, %v1494
  %v1496 = vlaneseq
  %v1497 = vshrl.u32 %v1496, 7
  %v1498 = vsub.s32 1, %v1497
  %v1499 = vrot.slane %v1490, %v1498
  %v1582 = vunpack.c.l.b16 %v1410
  %v1583 = vunpack.c.h.b16 %v1410
  %v1584 = vunpack.c.l.b16 %v1411
  %v1585 = vunpack.c.h.b16 %v1411
  %v1586 = vunpack.c.l.b16 %v1412
  %v1587 = vunpack.c.h.b16 %v1412
  %v1588 = vunpack.c.l.b16 %v1413
  %v1589 = vunpack.c.h.b16 %v1413
  %v1590 = vunpack.c.l.b16 %v1414
  %v1591 = vunpack.c.h.b16 %v1414
  %v1592 = vunpack.c.l.b16 %v1415
  %v1593 = vunpack.c.h.b16 %v1415
  %v1594 = vunpack.c.l.b16 %v1416
  %v1595 = vunpack.c.h.b16 %v1416
  %v1596 = vunpack.c.l.b16 %v1417
  %v1597 = vunpack.c.h.b16 %v1417
  %v1598 = vunpack.c.l.b16 %v1418
  %v1599 = vunpack.c.h.b16 %v1418
  %v1600 = vunpack.c.l.b16 %v1419
  %v1601 = vunpack.c.h.b16 %v1419
  %v1602 = vunpack.c.l.b16 %v1420
  %v1603 = vunpack.c.h.b16 %v1420
  %v1604 = vunpack.c.l.b16 %v1421
  %v1605 = vunpack.c.h.b16 %v1421
  %v1606 = vunpack.c.l.b16 %v1422
  %v1607 = vunpack.c.h.b16 %v1422
  %v1608 = vunpack.c.l.b16 %v1423
  %v1609 = vunpack.c.h.b16 %v1423
  %v1610 = vunpack.c.l.b16 %v1424
  %v1611 = vunpack.c.h.b16 %v1424
  %v1612 = vunpack.c.l.b16 %v1425
  %v1613 = vunpack.c.h.b16 %v1425
  %v1614 = vunpack.c.l.b16 %v1426
  %v1615 = vunpack.c.h.b16 %v1426
  %v1616 = vunpack.c.l.b16 %v1427
  %v1617 = vunpack.c.h.b16 %v1427
  %v1618 = vunpack.c.l.b16 %v1428
  %v1619 = vunpack.c.h.b16 %v1428
  %v1620 = vunpack.c.l.b16 %v1429
  %v1621 = vunpack.c.h.b16 %v1429
  %v1622 = vunpack.c.l.b16 %v1430
  %v1623 = vunpack.c.h.b16 %v1430
  %v1624 = vunpack.c.l.b16 %v1431
  %v1625 = vunpack.c.h.b16 %v1431
  %v1626 = vunpack.c.l.b16 %v1432
  %v1627 = vunpack.c.h.b16 %v1432
  %v1628 = vunpack.c.l.b16 %v1433
  %v1629 = vunpack.c.h.b16 %v1433
  %v1630 = vunpack.c.l.b16 %v1434
  %v1631 = vunpack.c.h.b16 %v1434
  %v1632 = vunpack.c.l.b16 %v1435
  %v1633 = vunpack.c.h.b16 %v1435
  %v1634 = vunpack.c.l.b16 %v1436
  %v1635 = vunpack.c.h.b16 %v1436
  %v1636 = vunpack.c.l.b16 %v1437
  %v1637 = vunpack.c.h.b16 %v1437
  %v1638 = vunpack.c.l.b16 %v1438
  %v1639 = vunpack.c.h.b16 %v1438
  %v1640 = vunpack.c.l.b16 %v1439
  %v1641 = vunpack.c.h.b16 %v1439
  %v1642 = vunpack.c.l.b16 %v1440
  %v1643 = vunpack.c.h.b16 %v1440
  %v1644 = vunpack.c.l.b16 %v1441
  %v1645 = vunpack.c.h.b16 %v1441
  %v1646 = vunpack.c.l.b16 %v1442
  %v1647 = vunpack.c.h.b16 %v1442
  %v1648 = vunpack.c.l.b16 %v1443
  %v1649 = vunpack.c.h.b16 %v1443
  %v1650 = vunpack.c.l.b16 %v1444
  %v1651 = vunpack.c.h.b16 %v1444
  %v1652 = vunpack.c.l.b16 %v1445
  %v1653 = vunpack.c.h.b16 %v1445
  %v1654 = vunpack.c.l.b16 %v1446
  %v1655 = vunpack.c.h.b16 %v1446
  %v1656 = vunpack.c.l.b16 %v1447
  %v1657 = vunpack.c.h.b16 %v1447
  %v1658 = vunpack.c.l.b16 %v1448
  %v1659 = vunpack.c.h.b16 %v1448
  %v1660 = vunpack.c.l.b16 %v1449
  %v1661 = vunpack.c.h.b16 %v1449
  %v1662 = vunpack.c.l.b16 %v1450
  %v1663 = vunpack.c.h.b16 %v1450
  %v1664 = vunpack.c.l.b16 %v1451
  %v1665 = vunpack.c.h.b16 %v1451
  %v1666 = vunpack.c.l.b16 %v1452
  %v1667 = vunpack.c.h.b16 %v1452
  %v1668 = vunpack.c.l.b16 %v1453
  %v1669 = vunpack.c.h.b16 %v1453
  %v1670 = vunpack.c.l.b16 %v1454
  %v1671 = vunpack.c.h.b16 %v1454
  %v1672 = vunpack.c.l.b16 %v1455
  %v1673 = vunpack.c.h.b16 %v1455
  %v1674 = vunpack.c.l.b16 %v1456
  %v1675 = vunpack.c.h.b16 %v1456
  %v1676 = vunpack.c.l.b16 %v1457
  %v1677 = vunpack.c.h.b16 %v1457
  %v1678 = vunpack.c.l.b16 %v1458
  %v1679 = vunpack.c.h.b16 %v1458
  %v1680 = vunpack.c.l.b16 %v1459
  %v1681 = vunpack.c.h.b16 %v1459
  %v1682 = vunpack.c.l.b16 %v1460
  %v1683 = vunpack.c.h.b16 %v1460
  %v1684 = vunpack.c.l.b16 %v1461
  %v1685 = vunpack.c.h.b16 %v1461
  %v1686 = vunpack.c.l.b16 %v1462
  %v1687 = vunpack.c.h.b16 %v1462
  %v1688 = vunpack.c.l.b16 %v1463
  %v1689 = vunpack.c.h.b16 %v1463
  %v1690 = vunpack.c.l.b16 %v1464
  %v1691 = vunpack.c.h.b16 %v1464
  %v1692 = vunpack.c.l.b16 %v1465
  %v1693 = vunpack.c.h.b16 %v1465
  %v1694 = vunpack.c.l.b16 %v1466
  %v1695 = vunpack.c.h.b16 %v1466
  %v1696 = vunpack.c.l.b16 %v1467
  %v1697 = vunpack.c.h.b16 %v1467
  %v1698 = vunpack.c.l.b16 %v1468
  %v1699 = vunpack.c.h.b16 %v1468
  %v1700 = vunpack.c.l.b16 %v1469
  %v1701 = vunpack.c.h.b16 %v1469
  %v1702 = vunpack.c.l.b16 %v1470
  %v1703 = vunpack.c.h.b16 %v1470
  %v1704 = vunpack.c.l.b16 %v1471
  %v1705 = vunpack.c.h.b16 %v1471
  %v1706 = vunpack.c.l.b16 %v1472
  %v1707 = vunpack.c.h.b16 %v1472
  %v1708 = vunpack.c.l.b16 %v1473
  %v1709 = vunpack.c.h.b16 %v1473
  %v1710 = vunpack.c.l.b16 %v1474
  %v1711 = vunpack.c.h.b16 %v1474
  %v1712 = vunpack.c.l.b16 %v1475
  %v1713 = vunpack.c.h.b16 %v1475
  %v1714 = vunpack.c.l.b16 %v1476
  %v1715 = vunpack.c.h.b16 %v1476
  %v1716 = vunpack.c.l.b16 %v1477
  %v1717 = vunpack.c.h.b16 %v1477
  %v1718 = vunpack.c.l.b16 %v1478
  %v1719 = vunpack.c.h.b16 %v1478
  %v1720 = vunpack.c.l.b16 %v1479
  %v1721 = vunpack.c.h.b16 %v1479
  %v1722 = vunpack.c.l.b16 %v1480
  %v1723 = vunpack.c.h.b16 %v1480
  %v1724 = vunpack.c.l.b16 %v1481
  %v1725 = vunpack.c.h.b16 %v1481
  %v1726 = vunpack.c.l.b16 %v1482
  %v1727 = vunpack.c.h.b16 %v1482
  %v1728 = vunpack.c.l.b16 %v1483
  %v1729 = vunpack.c.h.b16 %v1483
  %v1730 = vunpack.c.l.b16 %v1484
  %v1731 = vunpack.c.h.b16 %v1484
  %v1732 = vunpack.c.l.b16 %v1485
  %v1733 = vunpack.c.h.b16 %v1485
  %v1734 = vunpack.c.l.b16 %v1486
  %v1735 = vunpack.c.h.b16 %v1486
  %v1736 = vunpack.c.l.b16 %v1487
  %v1737 = vunpack.c.h.b16 %v1487
  %v1738 = vunpack.c.l.b16 %v1488
  %v1739 = vunpack.c.h.b16 %v1488
  %v1740 = vunpack.c.l.b16 %v1489
  %v1741 = vunpack.c.h.b16 %v1489
  %v1742 = vpack.c.b16 %v1584, %v1582
  %v1743 = vpack.c.b16 %v1585, %v1583
  %v1744 = vpack.c.b16 %v1588, %v1586
  %v1745 = vpack.c.b16 %v1589, %v1587
  %v1746 = vpack.c.b16 %v1592, %v1590
  %v1747 = vpack.c.b16 %v1593, %v1591
  %v1748 = vpack.c.b16 %v1596, %v1594
  %v1749 = vpack.c.b16 %v1597, %v1595
  %v1750 = vpack.c.b16 %v1600, %v1598
  %v1751 = vpack.c.b16 %v1601, %v1599
  %v1752 = vpack.c.b16 %v1604, %v1602
  %v1753 = vpack.c.b16 %v1605, %v1603
  %v1754 = vpack.c.b16 %v1608, %v1606
  %v1755 = vpack.c.b16 %v1609, %v1607
  %v1756 = vpack.c.b16 %v1612, %v1610
  %v1757 = vpack.c.b16 %v1613, %v1611
  %v1758 = vpack.c.b16 %v1616, %v1614
  %v1759 = vpack.c.b16 %v1617, %v1615
  %v1760 = vpack.c.b16 %v1620, %v1618
  %v1761 = vpack.c.b16 %v1621, %v1619
  %v1762 = vpack.c.b16 %v1624, %v1622
  %v1763 = vpack.c.b16 %v1625, %v1623
  %v1764 = vpack.c.b16 %v1628, %v1626
  %v1765 = vpack.c.b16 %v1629, %v1627
  %v1766 = vpack.c.b16 %v1632, %v1630
  %v1767 = vpack.c.b16 %v1633, %v1631
  %v1768 = vpack.c.b16 %v1636, %v1634
  %v1769 = vpack.c.b16 %v1637, %v1635
  %v1770 = vpack.c.b16 %v1640, %v1638
  %v1771 = vpack.c.b16 %v1641, %v1639
  %v1772 = vpack.c.b16 %v1644, %v1642
  %v1773 = vpack.c.b16 %v1645, %v1643
  %v1774 = vpack.c.b16 %v1648, %v1646
  %v1775 = vpack.c.b16 %v1649, %v1647
  %v1776 = vpack.c.b16 %v1652, %v1650
  %v1777 = vpack.c.b16 %v1653, %v1651
  %v1778 = vpack.c.b16 %v1656, %v1654
  %v1779 = vpack.c.b16 %v1657, %v1655
  %v1780 = vpack.c.b16 %v1660, %v1658
  %v1781 = vpack.c.b16 %v1661, %v1659
  %v1782 = vpack.c.b16 %v1664, %v1662
  %v1783 = vpack.c.b16 %v1665, %v1663
  %v1784 = vpack.c.b16 %v1668, %v1666
  %v1785 = vpack.c.b16 %v1669, %v1667
  %v1786 = vpack.c.b16 %v1672, %v1670
  %v1787 = vpack.c.b16 %v1673, %v1671
  %v1788 = vpack.c.b16 %v1676, %v1674
  %v1789 = vpack.c.b16 %v1677, %v1675
  %v1790 = vpack.c.b16 %v1680, %v1678
  %v1791 = vpack.c.b16 %v1681, %v1679
  %v1792 = vpack.c.b16 %v1684, %v1682
  %v1793 = vpack.c.b16 %v1685, %v1683
  %v1794 = vpack.c.b16 %v1688, %v1686
  %v1795 = vpack.c.b16 %v1689, %v1687
  %v1796 = vpack.c.b16 %v1692, %v1690
  %v1797 = vpack.c.b16 %v1693, %v1691
  %v1798 = vpack.c.b16 %v1696, %v1694
  %v1799 = vpack.c.b16 %v1697, %v1695
  %v1800 = vpack.c.b16 %v1700, %v1698
  %v1801 = vpack.c.b16 %v1701, %v1699
  %v1802 = vpack.c.b16 %v1704, %v1702
  %v1803 = vpack.c.b16 %v1705, %v1703
  %v1804 = vpack.c.b16 %v1708, %v1706
  %v1805 = vpack.c.b16 %v1709, %v1707
  %v1806 = vpack.c.b16 %v1712, %v1710
  %v1807 = vpack.c.b16 %v1713, %v1711
  %v1808 = vpack.c.b16 %v1716, %v1714
  %v1809 = vpack.c.b16 %v1717, %v1715
  %v1810 = vpack.c.b16 %v1720, %v1718
  %v1811 = vpack.c.b16 %v1721, %v1719
  %v1812 = vpack.c.b16 %v1724, %v1722
  %v1813 = vpack.c.b16 %v1725, %v1723
  %v1814 = vpack.c.b16 %v1728, %v1726
  %v1815 = vpack.c.b16 %v1729, %v1727
  %v1816 = vpack.c.b16 %v1732, %v1730
  %v1817 = vpack.c.b16 %v1733, %v1731
  %v1818 = vpack.c.b16 %v1736, %v1734
  %v1819 = vpack.c.b16 %v1737, %v1735
  %v1820 = vpack.c.b16 %v1740, %v1738
  %v1821 = vpack.c.b16 %v1741, %v1739
  %1902 = vmatprep.subr.bf16.mxu0 %v1757
  %1903 = vmatpush1.bf16.msra.mxu0 %v1756
  %1904 = vmatprep.subr.bf16.mxu0 %v1755
  %1905 = vmatpush1.bf16.msra.mxu0 %v1754
  %1906 = vmatprep.subr.bf16.mxu0 %v1753
  %1907 = vmatpush1.bf16.msra.mxu0 %v1752
  %1908 = vmatprep.subr.bf16.mxu0 %v1751
  %1909 = vmatpush1.bf16.msra.mxu0 %v1750
  %1910 = vmatprep.subr.bf16.mxu0 %v1749
  %1911 = vmatpush1.bf16.msra.mxu0 %v1748
  %1912 = vmatprep.subr.bf16.mxu0 %v1747
  %1913 = vmatpush1.bf16.msra.mxu0 %v1746
  %1914 = vmatprep.subr.bf16.mxu0 %v1745
  %1915 = vmatpush1.bf16.msra.mxu0 %v1744
  %1916 = vmatprep.subr.bf16.mxu0 %v1743
  %1917 = vmatpush1.bf16.msra.mxu0 %v1742
  %1918 = vmatprep.subr.bf16.mxu0 %v1773
  %1919 = vmatpush2.bf16.msra.mxu0 %v1772
  %1920 = vmatprep.subr.bf16.mxu0 %v1771
  %1921 = vmatpush2.bf16.msra.mxu0 %v1770
  %1922 = vmatprep.subr.bf16.mxu0 %v1769
  %1923 = vmatpush2.bf16.msra.mxu0 %v1768
  %1924 = vmatprep.subr.bf16.mxu0 %v1767
  %1925 = vmatpush2.bf16.msra.mxu0 %v1766
  %1926 = vmatprep.subr.bf16.mxu0 %v1765
  %1927 = vmatpush2.bf16.msra.mxu0 %v1764
  %1928 = vmatprep.subr.bf16.mxu0 %v1763
  %1929 = vmatpush2.bf16.msra.mxu0 %v1762
  %1930 = vmatprep.subr.bf16.mxu0 %v1761
  %1931 = vmatpush2.bf16.msra.mxu0 %v1760
  %1932 = vmatprep.subr.bf16.mxu0 %v1759
  %1933 = vmatpush2.bf16.msra.mxu0 %v1758
  %1934 = vmatprep.mubr.bf16.mxu0 %v1406
  %1935 = vmatmul.mubr.bf16.gmra.mxu0 %v1405
  %v1936 = vpop.f32.mrf.mxu0
  %v1937 = vadd.f32 %v1495, %v1936
  %v1938 = vpop.f32.mrf.mxu0
  %v1939 = vadd.f32 %v1499, %v1938
  %v1940 = vpop.f32.mrf.mxu0
  %v1941 = vadd.f32 %v1495, %v1940
  %v1942 = vpop.f32.mrf.mxu0
  %v1943 = vadd.f32 %v1499, %v1942
  %1944 = vdwg.mxu0
  %1945 = vmatprep.subr.bf16.mxu0 %v1789
  %1946 = vmatpush1.bf16.msra.mxu0 %v1788
  %1947 = vmatprep.subr.bf16.mxu0 %v1787
  %1948 = vmatpush1.bf16.msra.mxu0 %v1786
  %1949 = vmatprep.subr.bf16.mxu0 %v1785
  %1950 = vmatpush1.bf16.msra.mxu0 %v1784
  %1951 = vmatprep.subr.bf16.mxu0 %v1783
  %1952 = vmatpush1.bf16.msra.mxu0 %v1782
  %1953 = vmatprep.subr.bf16.mxu0 %v1781
  %1954 = vmatpush1.bf16.msra.mxu0 %v1780
  %1955 = vmatprep.subr.bf16.mxu0 %v1779
  %1956 = vmatpush1.bf16.msra.mxu0 %v1778
  %1957 = vmatprep.subr.bf16.mxu0 %v1777
  %1958 = vmatpush1.bf16.msra.mxu0 %v1776
  %1959 = vmatprep.subr.bf16.mxu0 %v1775
  %1960 = vmatpush1.bf16.msra.mxu0 %v1774
  %1961 = vmatprep.subr.bf16.mxu0 %v1805
  %1962 = vmatpush2.bf16.msra.mxu0 %v1804
  %1963 = vmatprep.subr.bf16.mxu0 %v1803
  %1964 = vmatpush2.bf16.msra.mxu0 %v1802
  %1965 = vmatprep.subr.bf16.mxu0 %v1801
  %1966 = vmatpush2.bf16.msra.mxu0 %v1800
  %1967 = vmatprep.subr.bf16.mxu0 %v1799
  %1968 = vmatpush2.bf16.msra.mxu0 %v1798
  %1969 = vmatprep.subr.bf16.mxu0 %v1797
  %1970 = vmatpush2.bf16.msra.mxu0 %v1796
  %1971 = vmatprep.subr.bf16.mxu0 %v1795
  %1972 = vmatpush2.bf16.msra.mxu0 %v1794
  %1973 = vmatprep.subr.bf16.mxu0 %v1793
  %1974 = vmatpush2.bf16.msra.mxu0 %v1792
  %1975 = vmatprep.subr.bf16.mxu0 %v1791
  %1976 = vmatpush2.bf16.msra.mxu0 %v1790
  %1977 = vmatprep.mubr.bf16.mxu0 %v1408
  %1978 = vmatmul.mubr.bf16.gmra.mxu0 %v1407
  %v1979 = vpop.f32.mrf.mxu0
  %v1980 = vadd.f32 %v1937, %v1979
  %v1981 = vpop.f32.mrf.mxu0
  %v1982 = vadd.f32 %v1939, %v1981
  %v1983 = vpop.f32.mrf.mxu0
  %v1984 = vadd.f32 %v1941, %v1983
  %v1985 = vpop.f32.mrf.mxu0
  %v1986 = vadd.f32 %v1943, %v1985
  %1987 = vdwg.mxu0
  %1988 = vmatprep.subr.bf16.mxu0 %v1821
  %1989 = vmatpush1.bf16.msra.mxu0 %v1820
  %1990 = vmatprep.subr.bf16.mxu0 %v1819
  %1991 = vmatpush1.bf16.msra.mxu0 %v1818
  %1992 = vmatprep.subr.bf16.mxu0 %v1817
  %1993 = vmatpush1.bf16.msra.mxu0 %v1816
  %1994 = vmatprep.subr.bf16.mxu0 %v1815
  %1995 = vmatpush1.bf16.msra.mxu0 %v1814
  %1996 = vmatprep.subr.bf16.mxu0 %v1813
  %1997 = vmatpush1.bf16.msra.mxu0 %v1812
  %1998 = vmatprep.subr.bf16.mxu0 %v1811
  %1999 = vmatpush1.bf16.msra.mxu0 %v1810
  %2000 = vmatprep.subr.bf16.mxu0 %v1809
  %2001 = vmatpush1.bf16.msra.mxu0 %v1808
  %2002 = vmatprep.subr.bf16.mxu0 %v1807
  %2003 = vmatpush1.bf16.msra.mxu0 %v1806
  %2004 = vmatprep.subr.bf16.mxu0 0
  %2005 = vmatpush2.bf16.msra.mxu0 0
  %2006 = vmatprep.subr.bf16.mxu0 0
  %2007 = vmatpush2.bf16.msra.mxu0 0
  %2008 = vmatprep.subr.bf16.mxu0 0
  %2009 = vmatpush2.bf16.msra.mxu0 0
  %2010 = vmatprep.subr.bf16.mxu0 0
  %2011 = vmatpush2.bf16.msra.mxu0 0
  %2012 = vmatprep.subr.bf16.mxu0 0
  %2013 = vmatpush2.bf16.msra.mxu0 0
  %2014 = vmatprep.subr.bf16.mxu0 0
  %2015 = vmatpush2.bf16.msra.mxu0 0
  %2016 = vmatprep.subr.bf16.mxu0 0
  %2017 = vmatpush2.bf16.msra.mxu0 0
  %2018 = vmatprep.subr.bf16.mxu0 0
  %2019 = vmatpush2.bf16.msra.mxu0 0
  %2020 = vmatprep.mubr.bf16.mxu0 0
  %2021 = vmatmul.mubr.bf16.gmra.mxu0 %v1409
  %v2022 = vpop.f32.mrf.mxu0
  %v2023 = vadd.f32 %v1980, %v2022
  %v2024 = vpop.f32.mrf.mxu0
  %v2025 = vadd.f32 %v1982, %v2024
  %v2026 = vpop.f32.mrf.mxu0
  %v2027 = vadd.f32 %v1984, %v2026
  %v2028 = vpop.f32.mrf.mxu0
  %v2029 = vadd.f32 %v1986, %v2028
  %2030 = vdwg.mxu0
  %v2031 = vmax.f32 %v2023, 0.0
  %v2032 = vmax.f32 %v2025, 0.0
  %v2033 = vmax.f32 %v2027, 0.0
  %v2034 = vmax.f32 %v2029, 0.0
  %v2037 = vrot.slane %v2031, 7
  %v2038 = vrot.slane %v2032, 7
  %2041 = vst [vmem:[#allocation4] sm:$0x7e] %v2037
  %2042 = vst [vmem:[#allocation4 + $0x8] sm:$0x7e] %v2038
  %v2045 = vrot.slane %v2031, 5
  %v2046 = vrot.slane %v2033, 5
  %v2047 = vsel %vm966, %v2045, %v2046
  %v2048 = vrot.slane %v2032, 5
  %v2049 = vrot.slane %v2034, 5
  %v2050 = vsel %vm966, %v2048, %v2049
  %2053 = vst [vmem:[#allocation4 + $0x10] sm:$0x7e] %v2047
  %2054 = vst [vmem:[#allocation4 + $0x18] sm:$0x7e] %v2050
  %v2055 = vld [vmem:[#allocation4] sm:$0x3f]
  %v2056 = vld [vmem:[#allocation4 + $0x8] sm:$0x3f]
  %v2057 = vld [vmem:[#allocation4] sm:$0x7e]
  %v2058 = vld [vmem:[#allocation4 + $0x8] sm:$0x7e]
  %v2059 = vld [vmem:[#allocation4] sm:$0xfc]
  %v2060 = vld [vmem:[#allocation4 + $0x8] sm:$0xfc]
  %v2063 = vrot.slane %v2057, 1
  %v2064 = vrot.slane %v2058, 1
  %v2069 = vrot.slane %v2059, 2
  %v2070 = vrot.slane %v2060, 2
  %v2073 = vld [vmem:[#allocation4 + $0x10] sm:$0x3f]
  %v2074 = vld [vmem:[#allocation4 + $0x18] sm:$0x3f]
  %v2075 = vld [vmem:[#allocation4 + $0x10] sm:$0x7e]
  %v2076 = vld [vmem:[#allocation4 + $0x18] sm:$0x7e]
  %v2077 = vld [vmem:[#allocation4 + $0x10] sm:$0xfc]
  %v2078 = vld [vmem:[#allocation4 + $0x18] sm:$0xfc]
  %v2081 = vrot.slane %v2075, 1
  %v2082 = vrot.slane %v2076, 1
  %v2085 = vrot.slane %v2077, 2
  %v2086 = vrot.slane %v2078, 2
  %v2089 = vrot.slane %v2073, 2
  %v2090 = vrot.slane %v2074, 2
  %v2091 = vrot.slane %v2081, 2
  %v2092 = vrot.slane %v2082, 2
  %v2093 = vrot.slane %v2085, 2
  %v2094 = vrot.slane %v2086, 2
  %v2101 = vsel %vm1399, %v2055, %v2089
  %v2102 = vsel %vm1399, %v2056, %v2090
  %v2103 = vsel %vm1399, %v2063, %v2091
  %v2104 = vsel %vm1399, %v2064, %v2092
  %v2105 = vsel %vm1399, %v2069, %v2093
  %v2106 = vsel %vm1399, %v2070, %v2094
  %v2107 = vpack.c.bf16 %v2089, %v2101
  %v2108 = vpack.c.bf16 %v2090, %v2102
  %v2109 = vpack.c.bf16 %v2091, %v2103
  %v2110 = vpack.c.bf16 %v2092, %v2104
  %v2111 = vpack.c.bf16 %v2093, %v2105
  %v2112 = vpack.c.bf16 %v2094, %v2106
  %v2113 = vld [vmem:[%s7] sm:$0xf]
  %v2114 = vld [vmem:[%s7 + $0x4] sm:$0xf]
  %v2115 = vld [vmem:[%s7 + $0x8] sm:$0xf]
  %v2116 = vld [vmem:[%s7 + $0xc] sm:$0xf]
  %v2117 = vld [vmem:[%s7 + $0x10] sm:$0xf]
  %v2118 = vld [vmem:[%s7 + $0x14] sm:$0xf]
  %v2119 = vld [vmem:[%s7 + $0x18] sm:$0xf]
  %v2120 = vld [vmem:[%s7 + $0x1c] sm:$0xf]
  %v2121 = vld [vmem:[%s7 + $0x20] sm:$0xf]
  %v2122 = vld [vmem:[%s7 + $0x24] sm:$0xf]
  %v2123 = vld [vmem:[%s7 + $0x28] sm:$0xf]
  %v2124 = vld [vmem:[%s7 + $0x2c] sm:$0xf]
  %v2125 = vld [vmem:[%s7 + $0x30] sm:$0xf]
  %v2126 = vld [vmem:[%s7 + $0x34] sm:$0xf]
  %v2127 = vld [vmem:[%s7 + $0x38] sm:$0xf]
  %v2128 = vld [vmem:[%s7 + $0x3c] sm:$0xf]
  %v2129 = vld [vmem:[%s7 + $0x40] sm:$0xf]
  %v2130 = vld [vmem:[%s7 + $0x44] sm:$0xf]
  %v2131 = vld [vmem:[%s7 + $0x48] sm:$0xf]
  %v2132 = vld [vmem:[%s7 + $0x4c] sm:$0xf]
  %v2133 = vld [vmem:[%s7 + $0x50] sm:$0xf]
  %v2134 = vld [vmem:[%s7 + $0x54] sm:$0xf]
  %v2135 = vld [vmem:[%s7 + $0x58] sm:$0xf]
  %v2136 = vld [vmem:[%s7 + $0x5c] sm:$0xf]
  %v2137 = vld [vmem:[%s7 + $0x60] sm:$0xf]
  %v2138 = vld [vmem:[%s7 + $0x64] sm:$0xf]
  %v2139 = vld [vmem:[%s7 + $0x68] sm:$0xf]
  %v2140 = vld [vmem:[%s7 + $0x6c] sm:$0xf]
  %v2141 = vld [vmem:[%s7 + $0x70] sm:$0xf]
  %v2142 = vld [vmem:[%s7 + $0x74] sm:$0xf]
  %v2143 = vld [vmem:[%s7 + $0x78] sm:$0xf]
  %v2144 = vld [vmem:[%s7 + $0x7c] sm:$0xf]
  %v2145 = vld [vmem:[%s7 + $0x80] sm:$0xf]
  %v2146 = vld [vmem:[%s7 + $0x84] sm:$0xf]
  %v2147 = vld [vmem:[%s7 + $0x88] sm:$0xf]
  %v2148 = vld [vmem:[%s7 + $0x8c] sm:$0xf]
  %v2149 = vld [vmem:[%s7 + $0x90] sm:$0xf]
  %v2150 = vld [vmem:[%s7 + $0x94] sm:$0xf]
  %v2151 = vld [vmem:[%s7 + $0x98] sm:$0xf]
  %v2152 = vld [vmem:[%s7 + $0x9c] sm:$0xf]
  %v2153 = vld [vmem:[%s7 + $0xa0] sm:$0xf]
  %v2154 = vld [vmem:[%s7 + $0xa4] sm:$0xf]
  %v2155 = vld [vmem:[%s7 + $0xa8] sm:$0xf]
  %v2156 = vld [vmem:[%s7 + $0xac] sm:$0xf]
  %v2157 = vld [vmem:[%s7 + $0xb0] sm:$0xf]
  %v2158 = vld [vmem:[%s7 + $0xb4] sm:$0xf]
  %v2159 = vld [vmem:[%s7 + $0xb8] sm:$0xf]
  %v2160 = vld [vmem:[%s7 + $0xbc] sm:$0xf]
  %v2161 = vld [vmem:[%s7 + $0xc0] sm:$0xf]
  %v2162 = vld [vmem:[%s7 + $0xc4] sm:$0xf]
  %v2163 = vld [vmem:[%s7 + $0xc8] sm:$0xf]
  %v2164 = vld [vmem:[%s7 + $0xcc] sm:$0xf]
  %v2165 = vld [vmem:[%s7 + $0xd0] sm:$0xf]
  %v2166 = vld [vmem:[%s7 + $0xd4] sm:$0xf]
  %v2167 = vld [vmem:[%s7 + $0xd8] sm:$0xf]
  %v2168 = vld [vmem:[%s7 + $0xdc] sm:$0xf]
  %v2169 = vld [vmem:[%s7 + $0xe0] sm:$0xf]
  %v2170 = vld [vmem:[%s7 + $0xe4] sm:$0xf]
  %v2171 = vld [vmem:[%s7 + $0xe8] sm:$0xf]
  %v2172 = vld [vmem:[%s7 + $0xec] sm:$0xf]
  %v2173 = vld [vmem:[%s7 + $0xf0] sm:$0xf]
  %v2174 = vld [vmem:[%s7 + $0xf4] sm:$0xf]
  %v2175 = vld [vmem:[%s7 + $0xf8] sm:$0xf]
  %v2176 = vld [vmem:[%s7 + $0xfc] sm:$0xf]
  %v2177 = vld [vmem:[%s7 + $0x100] sm:$0xf]
  %v2178 = vld [vmem:[%s7 + $0x104] sm:$0xf]
  %v2179 = vld [vmem:[%s7 + $0x108] sm:$0xf]
  %v2180 = vld [vmem:[%s7 + $0x10c] sm:$0xf]
  %v2181 = vld [vmem:[%s7 + $0x110] sm:$0xf]
  %v2182 = vld [vmem:[%s7 + $0x114] sm:$0xf]
  %v2183 = vld [vmem:[%s7 + $0x118] sm:$0xf]
  %v2184 = vld [vmem:[%s7 + $0x11c] sm:$0xf]
  %v2185 = vld [vmem:[%s7 + $0x120] sm:$0xf]
  %v2186 = vld [vmem:[%s7 + $0x124] sm:$0xf]
  %v2187 = vld [vmem:[%s7 + $0x128] sm:$0xf]
  %v2188 = vld [vmem:[%s7 + $0x12c] sm:$0xf]
  %v2189 = vld [vmem:[%s7 + $0x130] sm:$0xf]
  %v2190 = vld [vmem:[%s7 + $0x134] sm:$0xf]
  %v2191 = vld [vmem:[%s7 + $0x138] sm:$0xf]
  %v2192 = vld [vmem:[%s7 + $0x13c] sm:$0xf]
  %v2193 = vld [vmem:[%s7 + $0x140] sm:$0xf]
  %v2194 = vld [vmem:[%s7 + $0x144] sm:$0xf]
  %v2195 = vld [vmem:[%s7 + $0x148] sm:$0xf]
  %v2196 = vld [vmem:[%s7 + $0x14c] sm:$0xf]
  %v2197 = vld [vmem:[%s7 + $0x150] sm:$0xf]
  %v2198 = vld [vmem:[%s7 + $0x154] sm:$0xf]
  %v2199 = vld [vmem:[%s7 + $0x158] sm:$0xf]
  %v2200 = vld [vmem:[%s7 + $0x15c] sm:$0xf]
  %v2201 = vld [vmem:[%s7 + $0x160] sm:$0xf]
  %v2202 = vld [vmem:[%s7 + $0x164] sm:$0xf]
  %v2203 = vld [vmem:[%s7 + $0x168] sm:$0xf]
  %v2204 = vld [vmem:[%s7 + $0x16c] sm:$0xf]
  %v2205 = vld [vmem:[%s7 + $0x170] sm:$0xf]
  %v2206 = vld [vmem:[%s7 + $0x174] sm:$0xf]
  %v2207 = vld [vmem:[%s7 + $0x178] sm:$0xf]
  %v2208 = vld [vmem:[%s7 + $0x17c] sm:$0xf]
  %v2209 = vld [vmem:[%s8] sm:$0x1]
  %v2211 = vlaneseq
  %v2212 = vshrl.u32 %v2211, 7
  %v2213 = vsub.s32 0, %v2212
  %v2214 = vrot.slane %v2209, %v2213
  %v2312 = vunpack.c.l.b16 %v2113
  %v2313 = vunpack.c.l.b16 %v2114
  %v2314 = vunpack.c.l.b16 %v2115
  %v2315 = vunpack.c.l.b16 %v2116
  %v2316 = vunpack.c.l.b16 %v2117
  %v2317 = vunpack.c.l.b16 %v2118
  %v2318 = vunpack.c.l.b16 %v2119
  %v2319 = vunpack.c.l.b16 %v2120
  %v2320 = vunpack.c.l.b16 %v2121
  %v2321 = vunpack.c.l.b16 %v2122
  %v2322 = vunpack.c.l.b16 %v2123
  %v2323 = vunpack.c.l.b16 %v2124
  %v2324 = vunpack.c.l.b16 %v2125
  %v2325 = vunpack.c.l.b16 %v2126
  %v2326 = vunpack.c.l.b16 %v2127
  %v2327 = vunpack.c.l.b16 %v2128
  %v2328 = vunpack.c.l.b16 %v2129
  %v2329 = vunpack.c.l.b16 %v2130
  %v2330 = vunpack.c.l.b16 %v2131
  %v2331 = vunpack.c.l.b16 %v2132
  %v2332 = vunpack.c.l.b16 %v2133
  %v2333 = vunpack.c.l.b16 %v2134
  %v2334 = vunpack.c.l.b16 %v2135
  %v2335 = vunpack.c.l.b16 %v2136
  %v2336 = vunpack.c.l.b16 %v2137
  %v2337 = vunpack.c.l.b16 %v2138
  %v2338 = vunpack.c.l.b16 %v2139
  %v2339 = vunpack.c.l.b16 %v2140
  %v2340 = vunpack.c.l.b16 %v2141
  %v2341 = vunpack.c.l.b16 %v2142
  %v2342 = vunpack.c.l.b16 %v2143
  %v2343 = vunpack.c.l.b16 %v2144
  %v2344 = vunpack.c.l.b16 %v2145
  %v2345 = vunpack.c.l.b16 %v2146
  %v2346 = vunpack.c.l.b16 %v2147
  %v2347 = vunpack.c.l.b16 %v2148
  %v2348 = vunpack.c.l.b16 %v2149
  %v2349 = vunpack.c.l.b16 %v2150
  %v2350 = vunpack.c.l.b16 %v2151
  %v2351 = vunpack.c.l.b16 %v2152
  %v2352 = vunpack.c.l.b16 %v2153
  %v2353 = vunpack.c.l.b16 %v2154
  %v2354 = vunpack.c.l.b16 %v2155
  %v2355 = vunpack.c.l.b16 %v2156
  %v2356 = vunpack.c.l.b16 %v2157
  %v2357 = vunpack.c.l.b16 %v2158
  %v2358 = vunpack.c.l.b16 %v2159
  %v2359 = vunpack.c.l.b16 %v2160
  %v2360 = vunpack.c.l.b16 %v2161
  %v2361 = vunpack.c.l.b16 %v2162
  %v2362 = vunpack.c.l.b16 %v2163
  %v2363 = vunpack.c.l.b16 %v2164
  %v2364 = vunpack.c.l.b16 %v2165
  %v2365 = vunpack.c.l.b16 %v2166
  %v2366 = vunpack.c.l.b16 %v2167
  %v2367 = vunpack.c.l.b16 %v2168
  %v2368 = vunpack.c.l.b16 %v2169
  %v2369 = vunpack.c.l.b16 %v2170
  %v2370 = vunpack.c.l.b16 %v2171
  %v2371 = vunpack.c.l.b16 %v2172
  %v2372 = vunpack.c.l.b16 %v2173
  %v2373 = vunpack.c.l.b16 %v2174
  %v2374 = vunpack.c.l.b16 %v2175
  %v2375 = vunpack.c.l.b16 %v2176
  %v2376 = vunpack.c.l.b16 %v2177
  %v2377 = vunpack.c.l.b16 %v2178
  %v2378 = vunpack.c.l.b16 %v2179
  %v2379 = vunpack.c.l.b16 %v2180
  %v2380 = vunpack.c.l.b16 %v2181
  %v2381 = vunpack.c.l.b16 %v2182
  %v2382 = vunpack.c.l.b16 %v2183
  %v2383 = vunpack.c.l.b16 %v2184
  %v2384 = vunpack.c.l.b16 %v2185
  %v2385 = vunpack.c.l.b16 %v2186
  %v2386 = vunpack.c.l.b16 %v2187
  %v2387 = vunpack.c.l.b16 %v2188
  %v2388 = vunpack.c.l.b16 %v2189
  %v2389 = vunpack.c.l.b16 %v2190
  %v2390 = vunpack.c.l.b16 %v2191
  %v2391 = vunpack.c.l.b16 %v2192
  %v2392 = vunpack.c.l.b16 %v2193
  %v2393 = vunpack.c.l.b16 %v2194
  %v2394 = vunpack.c.l.b16 %v2195
  %v2395 = vunpack.c.l.b16 %v2196
  %v2396 = vunpack.c.l.b16 %v2197
  %v2397 = vunpack.c.l.b16 %v2198
  %v2398 = vunpack.c.l.b16 %v2199
  %v2399 = vunpack.c.l.b16 %v2200
  %v2400 = vunpack.c.l.b16 %v2201
  %v2401 = vunpack.c.l.b16 %v2202
  %v2402 = vunpack.c.l.b16 %v2203
  %v2403 = vunpack.c.l.b16 %v2204
  %v2404 = vunpack.c.l.b16 %v2205
  %v2405 = vunpack.c.l.b16 %v2206
  %v2406 = vunpack.c.l.b16 %v2207
  %v2407 = vunpack.c.l.b16 %v2208
  %v2408 = vpack.c.b16 %v2313, %v2312
  %v2409 = vpack.c.b16 %v2315, %v2314
  %v2410 = vpack.c.b16 %v2317, %v2316
  %v2411 = vpack.c.b16 %v2319, %v2318
  %v2412 = vpack.c.b16 %v2321, %v2320
  %v2413 = vpack.c.b16 %v2323, %v2322
  %v2414 = vpack.c.b16 %v2325, %v2324
  %v2415 = vpack.c.b16 %v2327, %v2326
  %v2416 = vpack.c.b16 %v2329, %v2328
  %v2417 = vpack.c.b16 %v2331, %v2330
  %v2418 = vpack.c.b16 %v2333, %v2332
  %v2419 = vpack.c.b16 %v2335, %v2334
  %v2420 = vpack.c.b16 %v2337, %v2336
  %v2421 = vpack.c.b16 %v2339, %v2338
  %v2422 = vpack.c.b16 %v2341, %v2340
  %v2423 = vpack.c.b16 %v2343, %v2342
  %v2424 = vpack.c.b16 %v2345, %v2344
  %v2425 = vpack.c.b16 %v2347, %v2346
  %v2426 = vpack.c.b16 %v2349, %v2348
  %v2427 = vpack.c.b16 %v2351, %v2350
  %v2428 = vpack.c.b16 %v2353, %v2352
  %v2429 = vpack.c.b16 %v2355, %v2354
  %v2430 = vpack.c.b16 %v2357, %v2356
  %v2431 = vpack.c.b16 %v2359, %v2358
  %v2432 = vpack.c.b16 %v2361, %v2360
  %v2433 = vpack.c.b16 %v2363, %v2362
  %v2434 = vpack.c.b16 %v2365, %v2364
  %v2435 = vpack.c.b16 %v2367, %v2366
  %v2436 = vpack.c.b16 %v2369, %v2368
  %v2437 = vpack.c.b16 %v2371, %v2370
  %v2438 = vpack.c.b16 %v2373, %v2372
  %v2439 = vpack.c.b16 %v2375, %v2374
  %v2440 = vpack.c.b16 %v2377, %v2376
  %v2441 = vpack.c.b16 %v2379, %v2378
  %v2442 = vpack.c.b16 %v2381, %v2380
  %v2443 = vpack.c.b16 %v2383, %v2382
  %v2444 = vpack.c.b16 %v2385, %v2384
  %v2445 = vpack.c.b16 %v2387, %v2386
  %v2446 = vpack.c.b16 %v2389, %v2388
  %v2447 = vpack.c.b16 %v2391, %v2390
  %v2448 = vpack.c.b16 %v2393, %v2392
  %v2449 = vpack.c.b16 %v2395, %v2394
  %v2450 = vpack.c.b16 %v2397, %v2396
  %v2451 = vpack.c.b16 %v2399, %v2398
  %v2452 = vpack.c.b16 %v2401, %v2400
  %v2453 = vpack.c.b16 %v2403, %v2402
  %v2454 = vpack.c.b16 %v2405, %v2404
  %v2455 = vpack.c.b16 %v2407, %v2406
  %2504 = vmatprep.subr.bf16.mxu0 0
  %2505 = vmatpush1.bf16.msra.mxu0 %v2415
  %2506 = vmatprep.subr.bf16.mxu0 0
  %2507 = vmatpush1.bf16.msra.mxu0 %v2414
  %2508 = vmatprep.subr.bf16.mxu0 0
  %2509 = vmatpush1.bf16.msra.mxu0 %v2413
  %2510 = vmatprep.subr.bf16.mxu0 0
  %2511 = vmatpush1.bf16.msra.mxu0 %v2412
  %2512 = vmatprep.subr.bf16.mxu0 0
  %2513 = vmatpush1.bf16.msra.mxu0 %v2411
  %2514 = vmatprep.subr.bf16.mxu0 0
  %2515 = vmatpush1.bf16.msra.mxu0 %v2410
  %2516 = vmatprep.subr.bf16.mxu0 0
  %2517 = vmatpush1.bf16.msra.mxu0 %v2409
  %2518 = vmatprep.subr.bf16.mxu0 0
  %2519 = vmatpush1.bf16.msra.mxu0 %v2408
  %2520 = vmatprep.subr.bf16.mxu0 0
  %2521 = vmatpush2.bf16.msra.mxu0 %v2423
  %2522 = vmatprep.subr.bf16.mxu0 0
  %2523 = vmatpush2.bf16.msra.mxu0 %v2422
  %2524 = vmatprep.subr.bf16.mxu0 0
  %2525 = vmatpush2.bf16.msra.mxu0 %v2421
  %2526 = vmatprep.subr.bf16.mxu0 0
  %2527 = vmatpush2.bf16.msra.mxu0 %v2420
  %2528 = vmatprep.subr.bf16.mxu0 0
  %2529 = vmatpush2.bf16.msra.mxu0 %v2419
  %2530 = vmatprep.subr.bf16.mxu0 0
  %2531 = vmatpush2.bf16.msra.mxu0 %v2418
  %2532 = vmatprep.subr.bf16.mxu0 0
  %2533 = vmatpush2.bf16.msra.mxu0 %v2417
  %2534 = vmatprep.subr.bf16.mxu0 0
  %2535 = vmatpush2.bf16.msra.mxu0 %v2416
  %2536 = vmatprep.mubr.bf16.mxu0 %v2108
  %2537 = vmatmul.mubr.bf16.gmra.mxu0 %v2107
  %v2538 = vpop.f32.mrf.mxu0
  %v2539 = vadd.f32 %v2214, %v2538
  %v2540 = vpop.f32.mrf.mxu0
  %v2541 = vpop.f32.mrf.mxu0
  %v2542 = vadd.f32 %v2214, %v2541
  %v2543 = vpop.f32.mrf.mxu0
  %2544 = vdwg.mxu0
  %2545 = vmatprep.subr.bf16.mxu0 0
  %2546 = vmatpush1.bf16.msra.mxu0 %v2431
  %2547 = vmatprep.subr.bf16.mxu0 0
  %2548 = vmatpush1.bf16.msra.mxu0 %v2430
  %2549 = vmatprep.subr.bf16.mxu0 0
  %2550 = vmatpush1.bf16.msra.mxu0 %v2429
  %2551 = vmatprep.subr.bf16.mxu0 0
  %2552 = vmatpush1.bf16.msra.mxu0 %v2428
  %2553 = vmatprep.subr.bf16.mxu0 0
  %2554 = vmatpush1.bf16.msra.mxu0 %v2427
  %2555 = vmatprep.subr.bf16.mxu0 0
  %2556 = vmatpush1.bf16.msra.mxu0 %v2426
  %2557 = vmatprep.subr.bf16.mxu0 0
  %2558 = vmatpush1.bf16.msra.mxu0 %v2425
  %2559 = vmatprep.subr.bf16.mxu0 0
  %2560 = vmatpush1.bf16.msra.mxu0 %v2424
  %2561 = vmatprep.subr.bf16.mxu0 0
  %2562 = vmatpush2.bf16.msra.mxu0 %v2439
  %2563 = vmatprep.subr.bf16.mxu0 0
  %2564 = vmatpush2.bf16.msra.mxu0 %v2438
  %2565 = vmatprep.subr.bf16.mxu0 0
  %2566 = vmatpush2.bf16.msra.mxu0 %v2437
  %2567 = vmatprep.subr.bf16.mxu0 0
  %2568 = vmatpush2.bf16.msra.mxu0 %v2436
  %2569 = vmatprep.subr.bf16.mxu0 0
  %2570 = vmatpush2.bf16.msra.mxu0 %v2435
  %2571 = vmatprep.subr.bf16.mxu0 0
  %2572 = vmatpush2.bf16.msra.mxu0 %v2434
  %2573 = vmatprep.subr.bf16.mxu0 0
  %2574 = vmatpush2.bf16.msra.mxu0 %v2433
  %2575 = vmatprep.subr.bf16.mxu0 0
  %2576 = vmatpush2.bf16.msra.mxu0 %v2432
  %2577 = vmatprep.mubr.bf16.mxu0 %v2110
  %2578 = vmatmul.mubr.bf16.gmra.mxu0 %v2109
  %v2579 = vpop.f32.mrf.mxu0
  %v2580 = vadd.f32 %v2539, %v2579
  %v2581 = vpop.f32.mrf.mxu0
  %v2582 = vpop.f32.mrf.mxu0
  %v2583 = vadd.f32 %v2542, %v2582
  %v2584 = vpop.f32.mrf.mxu0
  %2585 = vdwg.mxu0
  %2586 = vmatprep.subr.bf16.mxu0 0
  %2587 = vmatpush1.bf16.msra.mxu0 %v2447
  %2588 = vmatprep.subr.bf16.mxu0 0
  %2589 = vmatpush1.bf16.msra.mxu0 %v2446
  %2590 = vmatprep.subr.bf16.mxu0 0
  %2591 = vmatpush1.bf16.msra.mxu0 %v2445
  %2592 = vmatprep.subr.bf16.mxu0 0
  %2593 = vmatpush1.bf16.msra.mxu0 %v2444
  %2594 = vmatprep.subr.bf16.mxu0 0
  %2595 = vmatpush1.bf16.msra.mxu0 %v2443
  %2596 = vmatprep.subr.bf16.mxu0 0
  %2597 = vmatpush1.bf16.msra.mxu0 %v2442
  %2598 = vmatprep.subr.bf16.mxu0 0
  %2599 = vmatpush1.bf16.msra.mxu0 %v2441
  %2600 = vmatprep.subr.bf16.mxu0 0
  %2601 = vmatpush1.bf16.msra.mxu0 %v2440
  %2602 = vmatprep.subr.bf16.mxu0 0
  %2603 = vmatpush2.bf16.msra.mxu0 %v2455
  %2604 = vmatprep.subr.bf16.mxu0 0
  %2605 = vmatpush2.bf16.msra.mxu0 %v2454
  %2606 = vmatprep.subr.bf16.mxu0 0
  %2607 = vmatpush2.bf16.msra.mxu0 %v2453
  %2608 = vmatprep.subr.bf16.mxu0 0
  %2609 = vmatpush2.bf16.msra.mxu0 %v2452
  %2610 = vmatprep.subr.bf16.mxu0 0
  %2611 = vmatpush2.bf16.msra.mxu0 %v2451
  %2612 = vmatprep.subr.bf16.mxu0 0
  %2613 = vmatpush2.bf16.msra.mxu0 %v2450
  %2614 = vmatprep.subr.bf16.mxu0 0
  %2615 = vmatpush2.bf16.msra.mxu0 %v2449
  %2616 = vmatprep.subr.bf16.mxu0 0
  %2617 = vmatpush2.bf16.msra.mxu0 %v2448
  %2618 = vmatprep.mubr.bf16.mxu0 %v2112
  %2619 = vmatmul.mubr.bf16.gmra.mxu0 %v2111
  %v2620 = vpop.f32.mrf.mxu0
  %v2621 = vadd.f32 %v2580, %v2620
  %v2622 = vpop.f32.mrf.mxu0
  %v2623 = vpop.f32.mrf.mxu0
  %v2624 = vadd.f32 %v2583, %v2623
  %v2625 = vpop.f32.mrf.mxu0
  %2626 = vdwg.mxu0
  %v2627 = vmax.f32 %v2621, 0.0
  %v2628 = vmax.f32 %v2624, 0.0
  %v2629 = vsel %vm1399, %v2627, 0.0
  %v2630 = vrot.slane %v2629, 4
  %v2631 = vadd.f32 %v2629, %v2630
  %v2632 = vrot.slane %v2631, 2
  %v2633 = vadd.f32 %v2631, %v2632
  %v2634 = vrot.slane %v2633, 1
  %v2635 = vadd.f32 %v2633, %v2634
  %v2636 = vrcp.pop 6.0
  %v2637 = vmul.f32 %v2635, %v2636
  %vm2640 = vcmask 1041408
  %v2641 = vrot.slane %v2627, 6
  %v2642 = vrot.slane %v2628, 6
  %v2643 = vsel %vm2640, %v2641, %v2642
  %v2645 = vsel %vm1399, %v2643, 0.0
  %v2646 = vrot.slane %v2645, 4
  %v2647 = vadd.f32 %v2645, %v2646
  %v2648 = vrot.slane %v2647, 2
  %v2649 = vadd.f32 %v2647, %v2648
  %v2650 = vrot.slane %v2649, 1
  %v2651 = vadd.f32 %v2649, %v2650
  %v2652 = vmul.f32 %v2651, %v2636
  %s2653 = scalar_lea.vmem %s0, 220
  %v2654 = vld [vmem:[%s2653] sm:$0xff]
  %v2655 = vld [vmem:[%s2653 + $0x8] sm:$0xff]
  %v2656 = vld [vmem:[%s2653 + $0x10] sm:$0xf]
  %v2657 = vld [vmem:[%s2653 + $0x14] sm:$0xff]
  %v2658 = vld [vmem:[%s2653 + $0x1c] sm:$0xff]
  %v2659 = vld [vmem:[%s2653 + $0x24] sm:$0xf]
  %v2660 = vld [vmem:[%s2653 + $0x28] sm:$0xff]
  %v2661 = vld [vmem:[%s2653 + $0x30] sm:$0xff]
  %v2662 = vld [vmem:[%s2653 + $0x38] sm:$0xf]
  %v2663 = vld [vmem:[%s2653 + $0x3c] sm:$0xff]
  %v2664 = vld [vmem:[%s2653 + $0x44] sm:$0xff]
  %v2665 = vld [vmem:[%s2653 + $0x4c] sm:$0xf]
  %v2666 = vld [vmem:[%s2653 + $0x50] sm:$0xff]
  %v2667 = vld [vmem:[%s2653 + $0x58] sm:$0xff]
  %v2668 = vld [vmem:[%s2653 + $0x60] sm:$0xf]
  %v2669 = vld [vmem:[%s2653 + $0x64] sm:$0xff]
  %v2670 = vld [vmem:[%s2653 + $0x6c] sm:$0xff]
  %v2671 = vld [vmem:[%s2653 + $0x74] sm:$0xf]
  %v2672 = vld [vmem:[%s2653 + $0x78] sm:$0xff]
  %v2673 = vld [vmem:[%s2653 + $0x80] sm:$0xff]
  %v2674 = vld [vmem:[%s2653 + $0x88] sm:$0xf]
  %v2675 = vld [vmem:[%s2653 + $0x8c] sm:$0xff]
  %v2676 = vld [vmem:[%s2653 + $0x94] sm:$0xff]
  %v2677 = vld [vmem:[%s2653 + $0x9c] sm:$0xf]
  %v2678 = vld [vmem:[%s2653 + $0xa0] sm:$0xff]
  %v2679 = vld [vmem:[%s2653 + $0xa8] sm:$0xff]
  %v2680 = vld [vmem:[%s2653 + $0xb0] sm:$0xf]
  %v2681 = vld [vmem:[%s2653 + $0xb4] sm:$0xff]
  %v2682 = vld [vmem:[%s2653 + $0xbc] sm:$0xff]
  %v2683 = vld [vmem:[%s2653 + $0xc4] sm:$0xf]
  %v2684 = vld [vmem:[%s2653 + $0xc8] sm:$0x77]
  %v2685 = vld [vmem:[%s2653 + $0xd0] sm:$0x77]
  %v2686 = vld [vmem:[%s2653 + $0xd8] sm:$0x7]
  %s2687 = scalar_lea.vmem %s1, 288
  %v2688 = vld [vmem:[%s2687] sm:$0xf]
  %v2689 = vld [vmem:[%s2687 + $0x4] sm:$0xf]
  %v2690 = vld [vmem:[%s2687 + $0x8] sm:$0xf]
  %v2691 = vld [vmem:[%s2687 + $0xc] sm:$0xf]
  %v2692 = vld [vmem:[%s2687 + $0x10] sm:$0xf]
  %v2693 = vld [vmem:[%s2687 + $0x14] sm:$0xf]
  %v2694 = vld [vmem:[%s2687 + $0x18] sm:$0xf]
  %v2695 = vld [vmem:[%s2687 + $0x1c] sm:$0xf]
  %v2696 = vld [vmem:[%s2687 + $0x20] sm:$0xf]
  %v2697 = vld [vmem:[%s2687 + $0x24] sm:$0xf]
  %v2698 = vld [vmem:[%s2687 + $0x28] sm:$0xf]
  %v2699 = vld [vmem:[%s2687 + $0x2c] sm:$0xf]
  %v2700 = vld [vmem:[%s2687 + $0x30] sm:$0xf]
  %v2701 = vld [vmem:[%s2687 + $0x34] sm:$0xf]
  %v2702 = vld [vmem:[%s2687 + $0x38] sm:$0xf]
  %v2703 = vld [vmem:[%s2687 + $0x3c] sm:$0xf]
  %v2704 = vld [vmem:[%s2687 + $0x40] sm:$0xf]
  %v2705 = vld [vmem:[%s2687 + $0x44] sm:$0xf]
  %v2706 = vld [vmem:[%s2687 + $0x48] sm:$0xf]
  %v2707 = vld [vmem:[%s2687 + $0x4c] sm:$0xf]
  %v2708 = vld [vmem:[%s2687 + $0x50] sm:$0xf]
  %v2709 = vld [vmem:[%s2687 + $0x54] sm:$0xf]
  %v2710 = vld [vmem:[%s2687 + $0x58] sm:$0xf]
  %v2711 = vld [vmem:[%s2687 + $0x5c] sm:$0xf]
  %v2712 = vld [vmem:[%s2687 + $0x60] sm:$0xf]
  %v2713 = vld [vmem:[%s2687 + $0x64] sm:$0xf]
  %v2714 = vld [vmem:[%s2687 + $0x68] sm:$0xf]
  %v2715 = vld [vmem:[%s2687 + $0x6c] sm:$0xf]
  %v2716 = vld [vmem:[%s2687 + $0x70] sm:$0xf]
  %v2717 = vld [vmem:[%s2687 + $0x74] sm:$0xf]
  %v2718 = vld [vmem:[%s2687 + $0x78] sm:$0xf]
  %v2719 = vld [vmem:[%s2687 + $0x7c] sm:$0xf]
  %v2720 = vld [vmem:[%s2687 + $0x80] sm:$0xf]
  %v2721 = vld [vmem:[%s2687 + $0x84] sm:$0xf]
  %v2722 = vld [vmem:[%s2687 + $0x88] sm:$0xf]
  %v2723 = vld [vmem:[%s2687 + $0x8c] sm:$0xf]
  %v2724 = vld [vmem:[%s2687 + $0x90] sm:$0xf]
  %v2725 = vld [vmem:[%s2687 + $0x94] sm:$0xf]
  %v2726 = vld [vmem:[%s2687 + $0x98] sm:$0xf]
  %v2727 = vld [vmem:[%s2687 + $0x9c] sm:$0xf]
  %v2728 = vld [vmem:[%s2687 + $0xa0] sm:$0xf]
  %v2729 = vld [vmem:[%s2687 + $0xa4] sm:$0xf]
  %v2730 = vld [vmem:[%s2687 + $0xa8] sm:$0xf]
  %v2731 = vld [vmem:[%s2687 + $0xac] sm:$0xf]
  %v2732 = vld [vmem:[%s2687 + $0xb0] sm:$0xf]
  %v2733 = vld [vmem:[%s2687 + $0xb4] sm:$0xf]
  %v2734 = vld [vmem:[%s2687 + $0xb8] sm:$0xf]
  %v2735 = vld [vmem:[%s2687 + $0xbc] sm:$0xf]
  %v2736 = vld [vmem:[%s2687 + $0xc0] sm:$0xf]
  %v2737 = vld [vmem:[%s2687 + $0xc4] sm:$0xf]
  %v2738 = vld [vmem:[%s2687 + $0xc8] sm:$0xf]
  %v2739 = vld [vmem:[%s2687 + $0xcc] sm:$0xf]
  %v2740 = vld [vmem:[%s2687 + $0xd0] sm:$0xf]
  %v2741 = vld [vmem:[%s2687 + $0xd4] sm:$0xf]
  %v2742 = vld [vmem:[%s2687 + $0xd8] sm:$0xf]
  %v2743 = vld [vmem:[%s2687 + $0xdc] sm:$0xf]
  %v2744 = vld [vmem:[%s2687 + $0xe0] sm:$0xf]
  %v2745 = vld [vmem:[%s2687 + $0xe4] sm:$0xf]
  %v2746 = vld [vmem:[%s2687 + $0xe8] sm:$0xf]
  %v2747 = vld [vmem:[%s2687 + $0xec] sm:$0xf]
  %v2748 = vld [vmem:[%s2687 + $0xf0] sm:$0xf]
  %v2749 = vld [vmem:[%s2687 + $0xf4] sm:$0xf]
  %v2750 = vld [vmem:[%s2687 + $0xf8] sm:$0xf]
  %v2751 = vld [vmem:[%s2687 + $0xfc] sm:$0xf]
  %v2752 = vld [vmem:[%s2687 + $0x100] sm:$0xf]
  %v2753 = vld [vmem:[%s2687 + $0x104] sm:$0xf]
  %v2754 = vld [vmem:[%s2687 + $0x108] sm:$0xf]
  %v2755 = vld [vmem:[%s2687 + $0x10c] sm:$0xf]
  %v2756 = vld [vmem:[%s2687 + $0x110] sm:$0xf]
  %v2757 = vld [vmem:[%s2687 + $0x114] sm:$0xf]
  %v2758 = vld [vmem:[%s2687 + $0x118] sm:$0xf]
  %v2759 = vld [vmem:[%s2687 + $0x11c] sm:$0xf]
  %s2760 = scalar_lea.vmem %s2, 1
  %v2761 = vld [vmem:[%s2760] sm:$0x1]
  %v2763 = vlaneseq
  %v2764 = vshrl.u32 %v2763, 7
  %v2765 = vsub.s32 0, %v2764
  %v2766 = vrot.slane %v2761, %v2765
  %v2801 = vunpack.c.l.b16 %v2654
  %v2802 = vunpack.c.h.b16 %v2654
  %v2803 = vunpack.c.l.b16 %v2655
  %v2804 = vunpack.c.h.b16 %v2655
  %v2805 = vunpack.c.l.b16 %v2656
  %v2806 = vunpack.c.l.b16 %v2657
  %v2807 = vunpack.c.h.b16 %v2657
  %v2808 = vunpack.c.l.b16 %v2658
  %v2809 = vunpack.c.h.b16 %v2658
  %v2810 = vunpack.c.l.b16 %v2659
  %v2811 = vunpack.c.l.b16 %v2660
  %v2812 = vunpack.c.h.b16 %v2660
  %v2813 = vunpack.c.l.b16 %v2661
  %v2814 = vunpack.c.h.b16 %v2661
  %v2815 = vunpack.c.l.b16 %v2662
  %v2816 = vunpack.c.l.b16 %v2663
  %v2817 = vunpack.c.h.b16 %v2663
  %v2818 = vunpack.c.l.b16 %v2664
  %v2819 = vunpack.c.h.b16 %v2664
  %v2820 = vunpack.c.l.b16 %v2665
  %v2821 = vunpack.c.l.b16 %v2666
  %v2822 = vunpack.c.h.b16 %v2666
  %v2823 = vunpack.c.l.b16 %v2667
  %v2824 = vunpack.c.h.b16 %v2667
  %v2825 = vunpack.c.l.b16 %v2668
  %v2826 = vunpack.c.l.b16 %v2669
  %v2827 = vunpack.c.h.b16 %v2669
  %v2828 = vunpack.c.l.b16 %v2670
  %v2829 = vunpack.c.h.b16 %v2670
  %v2830 = vunpack.c.l.b16 %v2671
  %v2831 = vunpack.c.l.b16 %v2672
  %v2832 = vunpack.c.h.b16 %v2672
  %v2833 = vunpack.c.l.b16 %v2673
  %v2834 = vunpack.c.h.b16 %v2673
  %v2835 = vunpack.c.l.b16 %v2674
  %v2836 = vunpack.c.l.b16 %v2675
  %v2837 = vunpack.c.h.b16 %v2675
  %v2838 = vunpack.c.l.b16 %v2676
  %v2839 = vunpack.c.h.b16 %v2676
  %v2840 = vunpack.c.l.b16 %v2677
  %v2841 = vunpack.c.l.b16 %v2678
  %v2842 = vunpack.c.h.b16 %v2678
  %v2843 = vunpack.c.l.b16 %v2679
  %v2844 = vunpack.c.h.b16 %v2679
  %v2845 = vunpack.c.l.b16 %v2680
  %v2846 = vunpack.c.l.b16 %v2681
  %v2847 = vunpack.c.h.b16 %v2681
  %v2848 = vunpack.c.l.b16 %v2682
  %v2849 = vunpack.c.h.b16 %v2682
  %v2850 = vunpack.c.l.b16 %v2683
  %v2851 = vunpack.c.l.b16 %v2684
  %v2852 = vunpack.c.h.b16 %v2684
  %v2853 = vunpack.c.l.b16 %v2685
  %v2854 = vunpack.c.h.b16 %v2685
  %v2855 = vunpack.c.l.b16 %v2686
  %v2856 = vpack.c.b16 %v2806, %v2801
  %v2857 = vpack.c.b16 %v2807, %v2802
  %v2858 = vpack.c.b16 %v2808, %v2803
  %v2859 = vpack.c.b16 %v2809, %v2804
  %v2860 = vpack.c.b16 %v2810, %v2805
  %v2861 = vpack.c.b16 %v2816, %v2811
  %v2862 = vpack.c.b16 %v2817, %v2812
  %v2863 = vpack.c.b16 %v2818, %v2813
  %v2864 = vpack.c.b16 %v2819, %v2814
  %v2865 = vpack.c.b16 %v2820, %v2815
  %v2866 = vpack.c.b16 %v2826, %v2821
  %v2867 = vpack.c.b16 %v2827, %v2822
  %v2868 = vpack.c.b16 %v2828, %v2823
  %v2869 = vpack.c.b16 %v2829, %v2824
  %v2870 = vpack.c.b16 %v2830, %v2825
  %v2871 = vpack.c.b16 %v2836, %v2831
  %v2872 = vpack.c.b16 %v2837, %v2832
  %v2873 = vpack.c.b16 %v2838, %v2833
  %v2874 = vpack.c.b16 %v2839, %v2834
  %v2875 = vpack.c.b16 %v2840, %v2835
  %v2876 = vpack.c.b16 %v2846, %v2841
  %v2877 = vpack.c.b16 %v2847, %v2842
  %v2878 = vpack.c.b16 %v2848, %v2843
  %v2879 = vpack.c.b16 %v2849, %v2844
  %v2880 = vpack.c.b16 %v2850, %v2845
  %v2881 = vpack.c.b16 %v2851, %v2851
  %v2882 = vpack.c.b16 %v2852, %v2852
  %v2883 = vpack.c.b16 %v2853, %v2853
  %v2884 = vpack.c.b16 %v2854, %v2854
  %v2885 = vpack.c.b16 %v2855, %v2855
  %v2982 = vunpack.c.l.b16 %v2688
  %v2983 = vunpack.c.l.b16 %v2689
  %v2984 = vunpack.c.l.b16 %v2690
  %v2985 = vunpack.c.l.b16 %v2691
  %v2986 = vunpack.c.l.b16 %v2692
  %v2987 = vunpack.c.l.b16 %v2693
  %v2988 = vunpack.c.l.b16 %v2694
  %v2989 = vunpack.c.l.b16 %v2695
  %v2990 = vunpack.c.l.b16 %v2696
  %v2991 = vunpack.c.l.b16 %v2697
  %v2992 = vunpack.c.l.b16 %v2698
  %v2993 = vunpack.c.l.b16 %v2699
  %v2994 = vunpack.c.l.b16 %v2700
  %v2995 = vunpack.c.l.b16 %v2701
  %v2996 = vunpack.c.l.b16 %v2702
  %v2997 = vunpack.c.l.b16 %v2703
  %v2998 = vunpack.c.l.b16 %v2704
  %v2999 = vunpack.c.l.b16 %v2705
  %v3000 = vunpack.c.l.b16 %v2706
  %v3001 = vunpack.c.l.b16 %v2707
  %v3002 = vunpack.c.l.b16 %v2708
  %v3003 = vunpack.c.l.b16 %v2709
  %v3004 = vunpack.c.l.b16 %v2710
  %v3005 = vunpack.c.l.b16 %v2711
  %v3006 = vunpack.c.l.b16 %v2712
  %v3007 = vunpack.c.l.b16 %v2713
  %v3008 = vunpack.c.l.b16 %v2714
  %v3009 = vunpack.c.l.b16 %v2715
  %v3010 = vunpack.c.l.b16 %v2716
  %v3011 = vunpack.c.l.b16 %v2717
  %v3012 = vunpack.c.l.b16 %v2718
  %v3013 = vunpack.c.l.b16 %v2719
  %v3014 = vunpack.c.l.b16 %v2720
  %v3015 = vunpack.c.l.b16 %v2721
  %v3016 = vunpack.c.l.b16 %v2722
  %v3017 = vunpack.c.l.b16 %v2723
  %v3018 = vunpack.c.l.b16 %v2724
  %v3019 = vunpack.c.l.b16 %v2725
  %v3020 = vunpack.c.l.b16 %v2726
  %v3021 = vunpack.c.l.b16 %v2727
  %v3022 = vunpack.c.l.b16 %v2728
  %v3023 = vunpack.c.l.b16 %v2729
  %v3024 = vunpack.c.l.b16 %v2730
  %v3025 = vunpack.c.l.b16 %v2731
  %v3026 = vunpack.c.l.b16 %v2732
  %v3027 = vunpack.c.l.b16 %v2733
  %v3028 = vunpack.c.l.b16 %v2734
  %v3029 = vunpack.c.l.b16 %v2735
  %v3030 = vunpack.c.l.b16 %v2736
  %v3031 = vunpack.c.l.b16 %v2737
  %v3032 = vunpack.c.l.b16 %v2738
  %v3033 = vunpack.c.l.b16 %v2739
  %v3034 = vunpack.c.l.b16 %v2740
  %v3035 = vunpack.c.l.b16 %v2741
  %v3036 = vunpack.c.l.b16 %v2742
  %v3037 = vunpack.c.l.b16 %v2743
  %v3038 = vunpack.c.l.b16 %v2744
  %v3039 = vunpack.c.l.b16 %v2745
  %v3040 = vunpack.c.l.b16 %v2746
  %v3041 = vunpack.c.l.b16 %v2747
  %v3042 = vunpack.c.l.b16 %v2748
  %v3043 = vunpack.c.l.b16 %v2749
  %v3044 = vunpack.c.l.b16 %v2750
  %v3045 = vunpack.c.l.b16 %v2751
  %v3046 = vunpack.c.l.b16 %v2752
  %v3047 = vunpack.c.l.b16 %v2753
  %v3048 = vunpack.c.l.b16 %v2754
  %v3049 = vunpack.c.l.b16 %v2755
  %v3050 = vunpack.c.l.b16 %v2756
  %v3051 = vunpack.c.l.b16 %v2757
  %v3052 = vunpack.c.l.b16 %v2758
  %v3053 = vunpack.c.l.b16 %v2759
  %v3054 = vpack.c.b16 %v2983, %v2982
  %v3055 = vpack.c.b16 %v2985, %v2984
  %v3056 = vpack.c.b16 %v2987, %v2986
  %v3057 = vpack.c.b16 %v2989, %v2988
  %v3058 = vpack.c.b16 %v2991, %v2990
  %v3059 = vpack.c.b16 %v2993, %v2992
  %v3060 = vpack.c.b16 %v2995, %v2994
  %v3061 = vpack.c.b16 %v2997, %v2996
  %v3062 = vpack.c.b16 %v2999, %v2998
  %v3063 = vpack.c.b16 %v3001, %v3000
  %v3064 = vpack.c.b16 %v3003, %v3002
  %v3065 = vpack.c.b16 %v3005, %v3004
  %v3066 = vpack.c.b16 %v3007, %v3006
  %v3067 = vpack.c.b16 %v3009, %v3008
  %v3068 = vpack.c.b16 %v3011, %v3010
  %v3069 = vpack.c.b16 %v3013, %v3012
  %v3070 = vpack.c.b16 %v3015, %v3014
  %v3071 = vpack.c.b16 %v3017, %v3016
  %v3072 = vpack.c.b16 %v3019, %v3018
  %v3073 = vpack.c.b16 %v3021, %v3020
  %v3074 = vpack.c.b16 %v3023, %v3022
  %v3075 = vpack.c.b16 %v3025, %v3024
  %v3076 = vpack.c.b16 %v3027, %v3026
  %v3077 = vpack.c.b16 %v3029, %v3028
  %v3078 = vpack.c.b16 %v3031, %v3030
  %v3079 = vpack.c.b16 %v3033, %v3032
  %v3080 = vpack.c.b16 %v3035, %v3034
  %v3081 = vpack.c.b16 %v3037, %v3036
  %v3082 = vpack.c.b16 %v3039, %v3038
  %v3083 = vpack.c.b16 %v3041, %v3040
  %v3084 = vpack.c.b16 %v3043, %v3042
  %v3085 = vpack.c.b16 %v3045, %v3044
  %v3086 = vpack.c.b16 %v3047, %v3046
  %v3087 = vpack.c.b16 %v3049, %v3048
  %v3088 = vpack.c.b16 %v3051, %v3050
  %v3089 = vpack.c.b16 %v3053, %v3052
  %v3127 = vsel %vm39, %v2860, 0
  %v3130 = vsel %vm39, %v2865, 0
  %v3133 = vsel %vm39, %v2870, 0
  %v3136 = vsel %vm39, %v2875, 0
  %v3139 = vsel %vm39, %v2880, 0
  %v3142 = vsel %vm39, %v2885, 0
  %3144 = vmatprep.subr.bf16.mxu0 0
  %3145 = vmatpush1.bf16.msra.mxu0 %v3061
  %3146 = vmatprep.subr.bf16.mxu0 0
  %3147 = vmatpush1.bf16.msra.mxu0 %v3060
  %3148 = vmatprep.subr.bf16.mxu0 0
  %3149 = vmatpush1.bf16.msra.mxu0 %v3059
  %3150 = vmatprep.subr.bf16.mxu0 0
  %3151 = vmatpush1.bf16.msra.mxu0 %v3058
  %3152 = vmatprep.subr.bf16.mxu0 0
  %3153 = vmatpush1.bf16.msra.mxu0 %v3057
  %3154 = vmatprep.subr.bf16.mxu0 0
  %3155 = vmatpush1.bf16.msra.mxu0 %v3056
  %3156 = vmatprep.subr.bf16.mxu0 0
  %3157 = vmatpush1.bf16.msra.mxu0 %v3055
  %3158 = vmatprep.subr.bf16.mxu0 0
  %3159 = vmatpush1.bf16.msra.mxu0 %v3054
  %3160 = vmatprep.subr.bf16.mxu0 0
  %3161 = vmatpush2.bf16.msra.mxu0 %v3069
  %3162 = vmatprep.subr.bf16.mxu0 0
  %3163 = vmatpush2.bf16.msra.mxu0 %v3068
  %3164 = vmatprep.subr.bf16.mxu0 0
  %3165 = vmatpush2.bf16.msra.mxu0 %v3067
  %3166 = vmatprep.subr.bf16.mxu0 0
  %3167 = vmatpush2.bf16.msra.mxu0 %v3066
  %3168 = vmatprep.subr.bf16.mxu0 0
  %3169 = vmatpush2.bf16.msra.mxu0 %v3065
  %3170 = vmatprep.subr.bf16.mxu0 0
  %3171 = vmatpush2.bf16.msra.mxu0 %v3064
  %3172 = vmatprep.subr.bf16.mxu0 0
  %3173 = vmatpush2.bf16.msra.mxu0 %v3063
  %3174 = vmatprep.subr.bf16.mxu0 0
  %3175 = vmatpush2.bf16.msra.mxu0 %v3062
  %3176 = vmatprep.mubr.bf16.mxu0 %v2857
  %3177 = vmatmul.mubr.bf16.gmra.mxu0 %v2856
  %v3178 = vpop.f32.mrf.mxu0
  %v3179 = vadd.f32 %v2766, %v3178
  %v3180 = vpop.f32.mrf.mxu0
  %v3181 = vpop.f32.mrf.mxu0
  %v3182 = vadd.f32 %v2766, %v3181
  %v3183 = vpop.f32.mrf.mxu0
  %3184 = vmatprep.mubr.bf16.mxu0 %v2862
  %3185 = vmatmul.mubr.bf16.gmra.mxu0 %v2861
  %v3186 = vpop.f32.mrf.mxu0
  %v3187 = vadd.f32 %v2766, %v3186
  %v3188 = vpop.f32.mrf.mxu0
  %v3189 = vpop.f32.mrf.mxu0
  %v3190 = vadd.f32 %v2766, %v3189
  %v3191 = vpop.f32.mrf.mxu0
  %3192 = vmatprep.mubr.bf16.mxu0 %v2867
  %3193 = vmatmul.mubr.bf16.gmra.mxu0 %v2866
  %v3194 = vpop.f32.mrf.mxu0
  %v3195 = vadd.f32 %v2766, %v3194
  %v3196 = vpop.f32.mrf.mxu0
  %v3197 = vpop.f32.mrf.mxu0
  %v3198 = vadd.f32 %v2766, %v3197
  %v3199 = vpop.f32.mrf.mxu0
  %3200 = vmatprep.mubr.bf16.mxu0 %v2872
  %3201 = vmatmul.mubr.bf16.gmra.mxu0 %v2871
  %v3202 = vpop.f32.mrf.mxu0
  %v3203 = vadd.f32 %v2766, %v3202
  %v3204 = vpop.f32.mrf.mxu0
  %v3205 = vpop.f32.mrf.mxu0
  %v3206 = vadd.f32 %v2766, %v3205
  %v3207 = vpop.f32.mrf.mxu0
  %3208 = vmatprep.mubr.bf16.mxu0 %v2877
  %3209 = vmatmul.mubr.bf16.gmra.mxu0 %v2876
  %v3210 = vpop.f32.mrf.mxu0
  %v3211 = vadd.f32 %v2766, %v3210
  %v3212 = vpop.f32.mrf.mxu0
  %v3213 = vpop.f32.mrf.mxu0
  %v3214 = vadd.f32 %v2766, %v3213
  %v3215 = vpop.f32.mrf.mxu0
  %3216 = vmatprep.mubr.bf16.mxu0 %v2882
  %3217 = vmatmul.mubr.bf16.gmra.mxu0 %v2881
  %v3218 = vpop.f32.mrf.mxu0
  %v3219 = vadd.f32 %v2766, %v3218
  %v3220 = vpop.f32.mrf.mxu0
  %v3221 = vpop.f32.mrf.mxu0
  %v3222 = vpop.f32.mrf.mxu0
  %3223 = vdwg.mxu0
  %3224 = vmatprep.subr.bf16.mxu0 0
  %3225 = vmatpush1.bf16.msra.mxu0 %v3077
  %3226 = vmatprep.subr.bf16.mxu0 0
  %3227 = vmatpush1.bf16.msra.mxu0 %v3076
  %3228 = vmatprep.subr.bf16.mxu0 0
  %3229 = vmatpush1.bf16.msra.mxu0 %v3075
  %3230 = vmatprep.subr.bf16.mxu0 0
  %3231 = vmatpush1.bf16.msra.mxu0 %v3074
  %3232 = vmatprep.subr.bf16.mxu0 0
  %3233 = vmatpush1.bf16.msra.mxu0 %v3073
  %3234 = vmatprep.subr.bf16.mxu0 0
  %3235 = vmatpush1.bf16.msra.mxu0 %v3072
  %3236 = vmatprep.subr.bf16.mxu0 0
  %3237 = vmatpush1.bf16.msra.mxu0 %v3071
  %3238 = vmatprep.subr.bf16.mxu0 0
  %3239 = vmatpush1.bf16.msra.mxu0 %v3070
  %3240 = vmatprep.subr.bf16.mxu0 0
  %3241 = vmatpush2.bf16.msra.mxu0 %v3085
  %3242 = vmatprep.subr.bf16.mxu0 0
  %3243 = vmatpush2.bf16.msra.mxu0 %v3084
  %3244 = vmatprep.subr.bf16.mxu0 0
  %3245 = vmatpush2.bf16.msra.mxu0 %v3083
  %3246 = vmatprep.subr.bf16.mxu0 0
  %3247 = vmatpush2.bf16.msra.mxu0 %v3082
  %3248 = vmatprep.subr.bf16.mxu0 0
  %3249 = vmatpush2.bf16.msra.mxu0 %v3081
  %3250 = vmatprep.subr.bf16.mxu0 0
  %3251 = vmatpush2.bf16.msra.mxu0 %v3080
  %3252 = vmatprep.subr.bf16.mxu0 0
  %3253 = vmatpush2.bf16.msra.mxu0 %v3079
  %3254 = vmatprep.subr.bf16.mxu0 0
  %3255 = vmatpush2.bf16.msra.mxu0 %v3078
  %3256 = vmatprep.mubr.bf16.mxu0 %v2859
  %3257 = vmatmul.mubr.bf16.gmra.mxu0 %v2858
  %v3258 = vpop.f32.mrf.mxu0
  %v3259 = vadd.f32 %v3179, %v3258
  %v3260 = vpop.f32.mrf.mxu0
  %v3261 = vpop.f32.mrf.mxu0
  %v3262 = vadd.f32 %v3182, %v3261
  %v3263 = vpop.f32.mrf.mxu0
  %3264 = vmatprep.mubr.bf16.mxu0 %v2864
  %3265 = vmatmul.mubr.bf16.gmra.mxu0 %v2863
  %v3266 = vpop.f32.mrf.mxu0
  %v3267 = vadd.f32 %v3187, %v3266
  %v3268 = vpop.f32.mrf.mxu0
  %v3269 = vpop.f32.mrf.mxu0
  %v3270 = vadd.f32 %v3190, %v3269
  %v3271 = vpop.f32.mrf.mxu0
  %3272 = vmatprep.mubr.bf16.mxu0 %v2869
  %3273 = vmatmul.mubr.bf16.gmra.mxu0 %v2868
  %v3274 = vpop.f32.mrf.mxu0
  %v3275 = vadd.f32 %v3195, %v3274
  %v3276 = vpop.f32.mrf.mxu0
  %v3277 = vpop.f32.mrf.mxu0
  %v3278 = vadd.f32 %v3198, %v3277
  %v3279 = vpop.f32.mrf.mxu0
  %3280 = vmatprep.mubr.bf16.mxu0 %v2874
  %3281 = vmatmul.mubr.bf16.gmra.mxu0 %v2873
  %v3282 = vpop.f32.mrf.mxu0
  %v3283 = vadd.f32 %v3203, %v3282
  %v3284 = vpop.f32.mrf.mxu0
  %v3285 = vpop.f32.mrf.mxu0
  %v3286 = vadd.f32 %v3206, %v3285
  %v3287 = vpop.f32.mrf.mxu0
  %3288 = vmatprep.mubr.bf16.mxu0 %v2879
  %3289 = vmatmul.mubr.bf16.gmra.mxu0 %v2878
  %v3290 = vpop.f32.mrf.mxu0
  %v3291 = vadd.f32 %v3211, %v3290
  %v3292 = vpop.f32.mrf.mxu0
  %v3293 = vpop.f32.mrf.mxu0
  %v3294 = vadd.f32 %v3214, %v3293
  %v3295 = vpop.f32.mrf.mxu0
  %3296 = vmatprep.mubr.bf16.mxu0 %v2884
  %3297 = vmatmul.mubr.bf16.gmra.mxu0 %v2883
  %v3298 = vpop.f32.mrf.mxu0
  %v3299 = vadd.f32 %v3219, %v3298
  %v3300 = vpop.f32.mrf.mxu0
  %v3301 = vpop.f32.mrf.mxu0
  %v3302 = vpop.f32.mrf.mxu0
  %3303 = vdwg.mxu0
  %3304 = vmatprep.subr.bf16.mxu0 0
  %3305 = vmatpush1.bf16.msra.mxu0 0
  %3306 = vmatprep.subr.bf16.mxu0 0
  %3307 = vmatpush1.bf16.msra.mxu0 0
  %3308 = vmatprep.subr.bf16.mxu0 0
  %3309 = vmatpush1.bf16.msra.mxu0 0
  %3310 = vmatprep.subr.bf16.mxu0 0
  %3311 = vmatpush1.bf16.msra.mxu0 0
  %3312 = vmatprep.subr.bf16.mxu0 0
  %3313 = vmatpush1.bf16.msra.mxu0 %v3089
  %3314 = vmatprep.subr.bf16.mxu0 0
  %3315 = vmatpush1.bf16.msra.mxu0 %v3088
  %3316 = vmatprep.subr.bf16.mxu0 0
  %3317 = vmatpush1.bf16.msra.mxu0 %v3087
  %3318 = vmatprep.subr.bf16.mxu0 0
  %3319 = vmatpush1.bf16.msra.mxu0 %v3086
  %3320 = vmatprep.subr.bf16.mxu0 0
  %3321 = vmatpush2.bf16.msra.mxu0 0
  %3322 = vmatprep.subr.bf16.mxu0 0
  %3323 = vmatpush2.bf16.msra.mxu0 0
  %3324 = vmatprep.subr.bf16.mxu0 0
  %3325 = vmatpush2.bf16.msra.mxu0 0
  %3326 = vmatprep.subr.bf16.mxu0 0
  %3327 = vmatpush2.bf16.msra.mxu0 0
  %3328 = vmatprep.subr.bf16.mxu0 0
  %3329 = vmatpush2.bf16.msra.mxu0 0
  %3330 = vmatprep.subr.bf16.mxu0 0
  %3331 = vmatpush2.bf16.msra.mxu0 0
  %3332 = vmatprep.subr.bf16.mxu0 0
  %3333 = vmatpush2.bf16.msra.mxu0 0
  %3334 = vmatprep.subr.bf16.mxu0 0
  %3335 = vmatpush2.bf16.msra.mxu0 0
  %3336 = vmatprep.mubr.bf16.mxu0 0
  %3337 = vmatmul.mubr.bf16.gmra.mxu0 %v3127
  %v3338 = vpop.f32.mrf.mxu0
  %v3339 = vadd.f32 %v3259, %v3338
  %v3340 = vpop.f32.mrf.mxu0
  %v3341 = vpop.f32.mrf.mxu0
  %v3342 = vadd.f32 %v3262, %v3341
  %v3343 = vpop.f32.mrf.mxu0
  %3344 = vmatprep.mubr.bf16.mxu0 0
  %3345 = vmatmul.mubr.bf16.gmra.mxu0 %v3130
  %v3346 = vpop.f32.mrf.mxu0
  %v3347 = vadd.f32 %v3267, %v3346
  %v3348 = vpop.f32.mrf.mxu0
  %v3349 = vpop.f32.mrf.mxu0
  %v3350 = vadd.f32 %v3270, %v3349
  %v3351 = vpop.f32.mrf.mxu0
  %3352 = vmatprep.mubr.bf16.mxu0 0
  %3353 = vmatmul.mubr.bf16.gmra.mxu0 %v3133
  %v3354 = vpop.f32.mrf.mxu0
  %v3355 = vadd.f32 %v3275, %v3354
  %v3356 = vpop.f32.mrf.mxu0
  %v3357 = vpop.f32.mrf.mxu0
  %v3358 = vadd.f32 %v3278, %v3357
  %v3359 = vpop.f32.mrf.mxu0
  %3360 = vmatprep.mubr.bf16.mxu0 0
  %3361 = vmatmul.mubr.bf16.gmra.mxu0 %v3136
  %v3362 = vpop.f32.mrf.mxu0
  %v3363 = vadd.f32 %v3283, %v3362
  %v3364 = vpop.f32.mrf.mxu0
  %v3365 = vpop.f32.mrf.mxu0
  %v3366 = vadd.f32 %v3286, %v3365
  %v3367 = vpop.f32.mrf.mxu0
  %3368 = vmatprep.mubr.bf16.mxu0 0
  %3369 = vmatmul.mubr.bf16.gmra.mxu0 %v3139
  %v3370 = vpop.f32.mrf.mxu0
  %v3371 = vadd.f32 %v3291, %v3370
  %v3372 = vpop.f32.mrf.mxu0
  %v3373 = vpop.f32.mrf.mxu0
  %v3374 = vadd.f32 %v3294, %v3373
  %v3375 = vpop.f32.mrf.mxu0
  %3376 = vmatprep.mubr.bf16.mxu0 0
  %3377 = vmatmul.mubr.bf16.gmra.mxu0 %v3142
  %v3378 = vpop.f32.mrf.mxu0
  %v3379 = vadd.f32 %v3299, %v3378
  %v3380 = vpop.f32.mrf.mxu0
  %v3381 = vpop.f32.mrf.mxu0
  %v3382 = vpop.f32.mrf.mxu0
  %3383 = vdwg.mxu0
  %v3384 = vmax.f32 %v3339, 0.0
  %v3385 = vmax.f32 %v3342, 0.0
  %v3386 = vmax.f32 %v3347, 0.0
  %v3387 = vmax.f32 %v3350, 0.0
  %v3388 = vmax.f32 %v3355, 0.0
  %v3389 = vmax.f32 %v3358, 0.0
  %v3390 = vmax.f32 %v3363, 0.0
  %v3391 = vmax.f32 %v3366, 0.0
  %v3392 = vmax.f32 %v3371, 0.0
  %v3393 = vmax.f32 %v3374, 0.0
  %v3394 = vmax.f32 %v3379, 0.0
  %3395 = vst.msk [vmem:[#allocation2 + $0x4] sm:$0xff] %vm39, %v3384
  %3396 = vst.msk [vmem:[#allocation2 + $0xc] sm:$0xff] %vm39, %v3385
  %3397 = vst.msk [vmem:[#allocation2 + $0x14] sm:$0xff] %vm39, %v3386
  %3398 = vst.msk [vmem:[#allocation2 + $0x1c] sm:$0xff] %vm39, %v3387
  %3399 = vst.msk [vmem:[#allocation2 + $0x24] sm:$0xff] %vm39, %v3388
  %3400 = vst.msk [vmem:[#allocation2 + $0x2c] sm:$0x7] %vm806, %v3389
  %3401 = vst.msk [vmem:[#allocation2 + $0x34] sm:$0xf8] %vm808, %v3389
  %3402 = vst.msk [vmem:[#allocation2 + $0x3c] sm:$0xff] %vm39, %v3390
  %3403 = vst.msk [vmem:[#allocation2 + $0x44] sm:$0xff] %vm39, %v3391
  %3404 = vst.msk [vmem:[#allocation2 + $0x4c] sm:$0xff] %vm39, %v3392
  %3405 = vst.msk [vmem:[#allocation2 + $0x54] sm:$0xff] %vm39, %v3393
  %3406 = vst.msk [vmem:[#allocation2 + $0x5c] sm:$0x3f] %vm52, %v3394
  %v3407 = vld [vmem:[#allocation2] ss:$4 sm:$0xff]
  %v3408 = vld [vmem:[%s816] ss:$4 sm:$0x7]
  %v3409 = vld [vmem:[%s818] ss:$4 sm:$0xff]
  %v3410 = vld [vmem:[%s820] ss:$4 sm:$0x7]
  %v3411 = vld [vmem:[%s822] ss:$4 sm:$0xff]
  %v3412 = vld [vmem:[%s824] ss:$4 sm:$0x7]
  %v3413 = vld [vmem:[%s826] ss:$4 sm:$0xff]
  %v3414 = vld [vmem:[%s828] ss:$4 sm:$0x7]
  %v3415 = vld [vmem:[%s830] ss:$4 sm:$0xff]
  %v3416 = vld [vmem:[%s832] ss:$4 sm:$0x7]
  %v3417 = vld [vmem:[%s834] ss:$4 sm:$0xff]
  %v3418 = vld [vmem:[%s836] ss:$4 sm:$0x7]
  %v3419 = vld [vmem:[%s838] ss:$4 sm:$0xff]
  %v3420 = vld [vmem:[%s840] ss:$4 sm:$0x7]
  %v3421 = vld [vmem:[%s842] ss:$4 sm:$0xff]
  %v3422 = vld [vmem:[%s844] ss:$4 sm:$0x7]
  %3425 = vrot.lane.b32.xlu0 %v3409, 64
  %v3426 = vpop.permute.xlu0 %3425
  %3427 = vrot.lane.b32.xlu0 %v3410, 64
  %v3428 = vpop.permute.xlu0 %3427
  %3433 = vrot.lane.b32.xlu0 %v3413, 64
  %v3434 = vpop.permute.xlu0 %3433
  %3435 = vrot.lane.b32.xlu0 %v3414, 64
  %v3436 = vpop.permute.xlu0 %3435
  %3441 = vrot.lane.b32.xlu0 %v3417, 64
  %v3442 = vpop.permute.xlu0 %3441
  %3443 = vrot.lane.b32.xlu0 %v3418, 64
  %v3444 = vpop.permute.xlu0 %3443
  %3449 = vrot.lane.b32.xlu0 %v3421, 64
  %v3450 = vpop.permute.xlu0 %3449
  %3451 = vrot.lane.b32.xlu0 %v3422, 64
  %v3452 = vpop.permute.xlu0 %3451
  %v3455 = vsel %vm39, %v3407, %v3426
  %v3456 = vsel %vm39, %v3408, %v3428
  %v3457 = vsel %vm39, %v3411, %v3434
  %v3458 = vsel %vm39, %v3412, %v3436
  %v3459 = vsel %vm39, %v3415, %v3442
  %v3460 = vsel %vm39, %v3416, %v3444
  %v3461 = vsel %vm39, %v3419, %v3450
  %v3462 = vsel %vm39, %v3420, %v3452
  %v3463 = vld [vmem:[%s886] ss:$4 sm:$0xff]
  %v3464 = vld [vmem:[%s888] ss:$4 sm:$0x7]
  %v3465 = vld [vmem:[%s890] ss:$4 sm:$0xff]
  %v3466 = vld [vmem:[%s892] ss:$4 sm:$0x7]
  %v3467 = vld [vmem:[%s894] ss:$4 sm:$0xff]
  %v3468 = vld [vmem:[%s896] ss:$4 sm:$0x7]
  %v3469 = vld [vmem:[%s898] ss:$4 sm:$0xff]
  %v3470 = vld [vmem:[%s900] ss:$4 sm:$0x7]
  %v3471 = vld [vmem:[%s902] ss:$4 sm:$0xff]
  %v3472 = vld [vmem:[%s904] ss:$4 sm:$0x7]
  %v3473 = vld [vmem:[%s906] ss:$4 sm:$0xff]
  %v3474 = vld [vmem:[%s908] ss:$4 sm:$0x7]
  %v3475 = vld [vmem:[%s910] ss:$4 sm:$0xff]
  %v3476 = vld [vmem:[%s912] ss:$4 sm:$0x7]
  %v3477 = vld [vmem:[%s914] ss:$4 sm:$0xff]
  %v3478 = vld [vmem:[%s916] ss:$4 sm:$0x7]
  %3481 = vrot.lane.b32.xlu0 %v3465, 64
  %v3482 = vpop.permute.xlu0 %3481
  %3483 = vrot.lane.b32.xlu0 %v3466, 64
  %v3484 = vpop.permute.xlu0 %3483
  %3489 = vrot.lane.b32.xlu0 %v3469, 64
  %v3490 = vpop.permute.xlu0 %3489
  %3491 = vrot.lane.b32.xlu0 %v3470, 64
  %v3492 = vpop.permute.xlu0 %3491
  %3497 = vrot.lane.b32.xlu0 %v3473, 64
  %v3498 = vpop.permute.xlu0 %3497
  %3499 = vrot.lane.b32.xlu0 %v3474, 64
  %v3500 = vpop.permute.xlu0 %3499
  %3505 = vrot.lane.b32.xlu0 %v3477, 64
  %v3506 = vpop.permute.xlu0 %3505
  %3507 = vrot.lane.b32.xlu0 %v3478, 64
  %v3508 = vpop.permute.xlu0 %3507
  %v3511 = vsel %vm39, %v3463, %v3482
  %v3512 = vsel %vm39, %v3464, %v3484
  %v3513 = vsel %vm39, %v3467, %v3490
  %v3514 = vsel %vm39, %v3468, %v3492
  %v3515 = vsel %vm39, %v3471, %v3498
  %v3516 = vsel %vm39, %v3472, %v3500
  %v3517 = vsel %vm39, %v3475, %v3506
  %v3518 = vsel %vm39, %v3476, %v3508
  %v3527 = vrot.slane %v3511, 5
  %v3528 = vrot.slane %v3513, 5
  %v3529 = vrot.slane %v3515, 5
  %v3530 = vrot.slane %v3517, 5
  %v3531 = vrot.slane %v3512, 5
  %v3532 = vsel %vm966, %v3527, %v3531
  %v3533 = vrot.slane %v3514, 5
  %v3534 = vsel %vm966, %v3528, %v3533
  %v3535 = vrot.slane %v3516, 5
  %v3536 = vsel %vm966, %v3529, %v3535
  %v3537 = vrot.slane %v3518, 5
  %v3538 = vsel %vm966, %v3530, %v3537
  %v3547 = vsel %vm966, %v3456, %v3527
  %v3548 = vsel %vm966, %v3458, %v3528
  %v3549 = vsel %vm966, %v3460, %v3529
  %v3550 = vsel %vm966, %v3462, %v3530
  %v3551 = vpack.c.bf16 %v3547, %v3455
  %v3552 = vpack.c.bf16 %v3548, %v3457
  %v3553 = vpack.c.bf16 %v3549, %v3459
  %v3554 = vpack.c.bf16 %v3550, %v3461
  %v3555 = vpack.c.bf16 %v3532, %v3532
  %v3556 = vpack.c.bf16 %v3534, %v3534
  %v3557 = vpack.c.bf16 %v3536, %v3536
  %v3558 = vpack.c.bf16 %v3538, %v3538
  %s3559 = scalar_lea.vmem %s3, 256
  %v3560 = vld [vmem:[%s3559] sm:$0xf]
  %v3561 = vld [vmem:[%s3559 + $0x4] sm:$0xf]
  %v3562 = vld [vmem:[%s3559 + $0x8] sm:$0xf]
  %v3563 = vld [vmem:[%s3559 + $0xc] sm:$0xf]
  %v3564 = vld [vmem:[%s3559 + $0x10] sm:$0xf]
  %v3565 = vld [vmem:[%s3559 + $0x14] sm:$0xf]
  %v3566 = vld [vmem:[%s3559 + $0x18] sm:$0xf]
  %v3567 = vld [vmem:[%s3559 + $0x1c] sm:$0xf]
  %v3568 = vld [vmem:[%s3559 + $0x20] sm:$0xf]
  %v3569 = vld [vmem:[%s3559 + $0x24] sm:$0xf]
  %v3570 = vld [vmem:[%s3559 + $0x28] sm:$0xf]
  %v3571 = vld [vmem:[%s3559 + $0x2c] sm:$0xf]
  %v3572 = vld [vmem:[%s3559 + $0x30] sm:$0xf]
  %v3573 = vld [vmem:[%s3559 + $0x34] sm:$0xf]
  %v3574 = vld [vmem:[%s3559 + $0x38] sm:$0xf]
  %v3575 = vld [vmem:[%s3559 + $0x3c] sm:$0xf]
  %v3576 = vld [vmem:[%s3559 + $0x40] sm:$0xf]
  %v3577 = vld [vmem:[%s3559 + $0x44] sm:$0xf]
  %v3578 = vld [vmem:[%s3559 + $0x48] sm:$0xf]
  %v3579 = vld [vmem:[%s3559 + $0x4c] sm:$0xf]
  %v3580 = vld [vmem:[%s3559 + $0x50] sm:$0xf]
  %v3581 = vld [vmem:[%s3559 + $0x54] sm:$0xf]
  %v3582 = vld [vmem:[%s3559 + $0x58] sm:$0xf]
  %v3583 = vld [vmem:[%s3559 + $0x5c] sm:$0xf]
  %v3584 = vld [vmem:[%s3559 + $0x60] sm:$0xf]
  %v3585 = vld [vmem:[%s3559 + $0x64] sm:$0xf]
  %v3586 = vld [vmem:[%s3559 + $0x68] sm:$0xf]
  %v3587 = vld [vmem:[%s3559 + $0x6c] sm:$0xf]
  %v3588 = vld [vmem:[%s3559 + $0x70] sm:$0xf]
  %v3589 = vld [vmem:[%s3559 + $0x74] sm:$0xf]
  %v3590 = vld [vmem:[%s3559 + $0x78] sm:$0xf]
  %v3591 = vld [vmem:[%s3559 + $0x7c] sm:$0xf]
  %v3592 = vld [vmem:[%s3559 + $0x80] sm:$0xf]
  %v3593 = vld [vmem:[%s3559 + $0x84] sm:$0xf]
  %v3594 = vld [vmem:[%s3559 + $0x88] sm:$0xf]
  %v3595 = vld [vmem:[%s3559 + $0x8c] sm:$0xf]
  %v3596 = vld [vmem:[%s3559 + $0x90] sm:$0xf]
  %v3597 = vld [vmem:[%s3559 + $0x94] sm:$0xf]
  %v3598 = vld [vmem:[%s3559 + $0x98] sm:$0xf]
  %v3599 = vld [vmem:[%s3559 + $0x9c] sm:$0xf]
  %v3600 = vld [vmem:[%s3559 + $0xa0] sm:$0xf]
  %v3601 = vld [vmem:[%s3559 + $0xa4] sm:$0xf]
  %v3602 = vld [vmem:[%s3559 + $0xa8] sm:$0xf]
  %v3603 = vld [vmem:[%s3559 + $0xac] sm:$0xf]
  %v3604 = vld [vmem:[%s3559 + $0xb0] sm:$0xf]
  %v3605 = vld [vmem:[%s3559 + $0xb4] sm:$0xf]
  %v3606 = vld [vmem:[%s3559 + $0xb8] sm:$0xf]
  %v3607 = vld [vmem:[%s3559 + $0xbc] sm:$0xf]
  %v3608 = vld [vmem:[%s3559 + $0xc0] sm:$0xf]
  %v3609 = vld [vmem:[%s3559 + $0xc4] sm:$0xf]
  %v3610 = vld [vmem:[%s3559 + $0xc8] sm:$0xf]
  %v3611 = vld [vmem:[%s3559 + $0xcc] sm:$0xf]
  %v3612 = vld [vmem:[%s3559 + $0xd0] sm:$0xf]
  %v3613 = vld [vmem:[%s3559 + $0xd4] sm:$0xf]
  %v3614 = vld [vmem:[%s3559 + $0xd8] sm:$0xf]
  %v3615 = vld [vmem:[%s3559 + $0xdc] sm:$0xf]
  %v3616 = vld [vmem:[%s3559 + $0xe0] sm:$0xf]
  %v3617 = vld [vmem:[%s3559 + $0xe4] sm:$0xf]
  %v3618 = vld [vmem:[%s3559 + $0xe8] sm:$0xf]
  %v3619 = vld [vmem:[%s3559 + $0xec] sm:$0xf]
  %v3620 = vld [vmem:[%s3559 + $0xf0] sm:$0xf]
  %v3621 = vld [vmem:[%s3559 + $0xf4] sm:$0xf]
  %v3622 = vld [vmem:[%s3559 + $0xf8] sm:$0xf]
  %v3623 = vld [vmem:[%s3559 + $0xfc] sm:$0xf]
  %s3624 = scalar_lea.vmem %s4, 1
  %v3625 = vld [vmem:[%s3624] sm:$0x1]
  %v3627 = vlaneseq
  %v3628 = vshrl.u32 %v3627, 7
  %v3629 = vsub.s32 0, %v3628
  %v3630 = vrot.slane %v3625, %v3629
  %v3696 = vunpack.c.l.b16 %v3560
  %v3697 = vunpack.c.l.b16 %v3561
  %v3698 = vunpack.c.l.b16 %v3562
  %v3699 = vunpack.c.l.b16 %v3563
  %v3700 = vunpack.c.l.b16 %v3564
  %v3701 = vunpack.c.l.b16 %v3565
  %v3702 = vunpack.c.l.b16 %v3566
  %v3703 = vunpack.c.l.b16 %v3567
  %v3704 = vunpack.c.l.b16 %v3568
  %v3705 = vunpack.c.l.b16 %v3569
  %v3706 = vunpack.c.l.b16 %v3570
  %v3707 = vunpack.c.l.b16 %v3571
  %v3708 = vunpack.c.l.b16 %v3572
  %v3709 = vunpack.c.l.b16 %v3573
  %v3710 = vunpack.c.l.b16 %v3574
  %v3711 = vunpack.c.l.b16 %v3575
  %v3712 = vunpack.c.l.b16 %v3576
  %v3713 = vunpack.c.l.b16 %v3577
  %v3714 = vunpack.c.l.b16 %v3578
  %v3715 = vunpack.c.l.b16 %v3579
  %v3716 = vunpack.c.l.b16 %v3580
  %v3717 = vunpack.c.l.b16 %v3581
  %v3718 = vunpack.c.l.b16 %v3582
  %v3719 = vunpack.c.l.b16 %v3583
  %v3720 = vunpack.c.l.b16 %v3584
  %v3721 = vunpack.c.l.b16 %v3585
  %v3722 = vunpack.c.l.b16 %v3586
  %v3723 = vunpack.c.l.b16 %v3587
  %v3724 = vunpack.c.l.b16 %v3588
  %v3725 = vunpack.c.l.b16 %v3589
  %v3726 = vunpack.c.l.b16 %v3590
  %v3727 = vunpack.c.l.b16 %v3591
  %v3728 = vunpack.c.l.b16 %v3592
  %v3729 = vunpack.c.l.b16 %v3593
  %v3730 = vunpack.c.l.b16 %v3594
  %v3731 = vunpack.c.l.b16 %v3595
  %v3732 = vunpack.c.l.b16 %v3596
  %v3733 = vunpack.c.l.b16 %v3597
  %v3734 = vunpack.c.l.b16 %v3598
  %v3735 = vunpack.c.l.b16 %v3599
  %v3736 = vunpack.c.l.b16 %v3600
  %v3737 = vunpack.c.l.b16 %v3601
  %v3738 = vunpack.c.l.b16 %v3602
  %v3739 = vunpack.c.l.b16 %v3603
  %v3740 = vunpack.c.l.b16 %v3604
  %v3741 = vunpack.c.l.b16 %v3605
  %v3742 = vunpack.c.l.b16 %v3606
  %v3743 = vunpack.c.l.b16 %v3607
  %v3744 = vunpack.c.l.b16 %v3608
  %v3745 = vunpack.c.l.b16 %v3609
  %v3746 = vunpack.c.l.b16 %v3610
  %v3747 = vunpack.c.l.b16 %v3611
  %v3748 = vunpack.c.l.b16 %v3612
  %v3749 = vunpack.c.l.b16 %v3613
  %v3750 = vunpack.c.l.b16 %v3614
  %v3751 = vunpack.c.l.b16 %v3615
  %v3752 = vunpack.c.l.b16 %v3616
  %v3753 = vunpack.c.l.b16 %v3617
  %v3754 = vunpack.c.l.b16 %v3618
  %v3755 = vunpack.c.l.b16 %v3619
  %v3756 = vunpack.c.l.b16 %v3620
  %v3757 = vunpack.c.l.b16 %v3621
  %v3758 = vunpack.c.l.b16 %v3622
  %v3759 = vunpack.c.l.b16 %v3623
  %v3760 = vpack.c.b16 %v3697, %v3696
  %v3761 = vpack.c.b16 %v3699, %v3698
  %v3762 = vpack.c.b16 %v3701, %v3700
  %v3763 = vpack.c.b16 %v3703, %v3702
  %v3764 = vpack.c.b16 %v3705, %v3704
  %v3765 = vpack.c.b16 %v3707, %v3706
  %v3766 = vpack.c.b16 %v3709, %v3708
  %v3767 = vpack.c.b16 %v3711, %v3710
  %v3768 = vpack.c.b16 %v3713, %v3712
  %v3769 = vpack.c.b16 %v3715, %v3714
  %v3770 = vpack.c.b16 %v3717, %v3716
  %v3771 = vpack.c.b16 %v3719, %v3718
  %v3772 = vpack.c.b16 %v3721, %v3720
  %v3773 = vpack.c.b16 %v3723, %v3722
  %v3774 = vpack.c.b16 %v3725, %v3724
  %v3775 = vpack.c.b16 %v3727, %v3726
  %v3776 = vpack.c.b16 %v3729, %v3728
  %v3777 = vpack.c.b16 %v3731, %v3730
  %v3778 = vpack.c.b16 %v3733, %v3732
  %v3779 = vpack.c.b16 %v3735, %v3734
  %v3780 = vpack.c.b16 %v3737, %v3736
  %v3781 = vpack.c.b16 %v3739, %v3738
  %v3782 = vpack.c.b16 %v3741, %v3740
  %v3783 = vpack.c.b16 %v3743, %v3742
  %v3784 = vpack.c.b16 %v3745, %v3744
  %v3785 = vpack.c.b16 %v3747, %v3746
  %v3786 = vpack.c.b16 %v3749, %v3748
  %v3787 = vpack.c.b16 %v3751, %v3750
  %v3788 = vpack.c.b16 %v3753, %v3752
  %v3789 = vpack.c.b16 %v3755, %v3754
  %v3790 = vpack.c.b16 %v3757, %v3756
  %v3791 = vpack.c.b16 %v3759, %v3758
  %3824 = vmatprep.subr.bf16.mxu0 0
  %3825 = vmatpush1.bf16.msra.mxu0 %v3767
  %3826 = vmatprep.subr.bf16.mxu0 0
  %3827 = vmatpush1.bf16.msra.mxu0 %v3766
  %3828 = vmatprep.subr.bf16.mxu0 0
  %3829 = vmatpush1.bf16.msra.mxu0 %v3765
  %3830 = vmatprep.subr.bf16.mxu0 0
  %3831 = vmatpush1.bf16.msra.mxu0 %v3764
  %3832 = vmatprep.subr.bf16.mxu0 0
  %3833 = vmatpush1.bf16.msra.mxu0 %v3763
  %3834 = vmatprep.subr.bf16.mxu0 0
  %3835 = vmatpush1.bf16.msra.mxu0 %v3762
  %3836 = vmatprep.subr.bf16.mxu0 0
  %3837 = vmatpush1.bf16.msra.mxu0 %v3761
  %3838 = vmatprep.subr.bf16.mxu0 0
  %3839 = vmatpush1.bf16.msra.mxu0 %v3760
  %3840 = vmatprep.subr.bf16.mxu0 0
  %3841 = vmatpush2.bf16.msra.mxu0 %v3775
  %3842 = vmatprep.subr.bf16.mxu0 0
  %3843 = vmatpush2.bf16.msra.mxu0 %v3774
  %3844 = vmatprep.subr.bf16.mxu0 0
  %3845 = vmatpush2.bf16.msra.mxu0 %v3773
  %3846 = vmatprep.subr.bf16.mxu0 0
  %3847 = vmatpush2.bf16.msra.mxu0 %v3772
  %3848 = vmatprep.subr.bf16.mxu0 0
  %3849 = vmatpush2.bf16.msra.mxu0 %v3771
  %3850 = vmatprep.subr.bf16.mxu0 0
  %3851 = vmatpush2.bf16.msra.mxu0 %v3770
  %3852 = vmatprep.subr.bf16.mxu0 0
  %3853 = vmatpush2.bf16.msra.mxu0 %v3769
  %3854 = vmatprep.subr.bf16.mxu0 0
  %3855 = vmatpush2.bf16.msra.mxu0 %v3768
  %3856 = vmatprep.mubr.bf16.mxu0 %v3552
  %3857 = vmatmul.mubr.bf16.gmra.mxu0 %v3551
  %v3858 = vpop.f32.mrf.mxu0
  %v3859 = vadd.f32 %v3630, %v3858
  %v3860 = vpop.f32.mrf.mxu0
  %v3861 = vpop.f32.mrf.mxu0
  %v3862 = vadd.f32 %v3630, %v3861
  %v3863 = vpop.f32.mrf.mxu0
  %3864 = vmatprep.mubr.bf16.mxu0 %v3556
  %3865 = vmatmul.mubr.bf16.gmra.mxu0 %v3555
  %v3866 = vpop.f32.mrf.mxu0
  %v3867 = vadd.f32 %v3630, %v3866
  %v3868 = vpop.f32.mrf.mxu0
  %v3869 = vpop.f32.mrf.mxu0
  %v3870 = vpop.f32.mrf.mxu0
  %3871 = vdwg.mxu0
  %3872 = vmatprep.subr.bf16.mxu0 0
  %3873 = vmatpush1.bf16.msra.mxu0 %v3783
  %3874 = vmatprep.subr.bf16.mxu0 0
  %3875 = vmatpush1.bf16.msra.mxu0 %v3782
  %3876 = vmatprep.subr.bf16.mxu0 0
  %3877 = vmatpush1.bf16.msra.mxu0 %v3781
  %3878 = vmatprep.subr.bf16.mxu0 0
  %3879 = vmatpush1.bf16.msra.mxu0 %v3780
  %3880 = vmatprep.subr.bf16.mxu0 0
  %3881 = vmatpush1.bf16.msra.mxu0 %v3779
  %3882 = vmatprep.subr.bf16.mxu0 0
  %3883 = vmatpush1.bf16.msra.mxu0 %v3778
  %3884 = vmatprep.subr.bf16.mxu0 0
  %3885 = vmatpush1.bf16.msra.mxu0 %v3777
  %3886 = vmatprep.subr.bf16.mxu0 0
  %3887 = vmatpush1.bf16.msra.mxu0 %v3776
  %3888 = vmatprep.subr.bf16.mxu0 0
  %3889 = vmatpush2.bf16.msra.mxu0 %v3791
  %3890 = vmatprep.subr.bf16.mxu0 0
  %3891 = vmatpush2.bf16.msra.mxu0 %v3790
  %3892 = vmatprep.subr.bf16.mxu0 0
  %3893 = vmatpush2.bf16.msra.mxu0 %v3789
  %3894 = vmatprep.subr.bf16.mxu0 0
  %3895 = vmatpush2.bf16.msra.mxu0 %v3788
  %3896 = vmatprep.subr.bf16.mxu0 0
  %3897 = vmatpush2.bf16.msra.mxu0 %v3787
  %3898 = vmatprep.subr.bf16.mxu0 0
  %3899 = vmatpush2.bf16.msra.mxu0 %v3786
  %3900 = vmatprep.subr.bf16.mxu0 0
  %3901 = vmatpush2.bf16.msra.mxu0 %v3785
  %3902 = vmatprep.subr.bf16.mxu0 0
  %3903 = vmatpush2.bf16.msra.mxu0 %v3784
  %3904 = vmatprep.mubr.bf16.mxu0 %v3554
  %3905 = vmatmul.mubr.bf16.gmra.mxu0 %v3553
  %v3906 = vpop.f32.mrf.mxu0
  %v3907 = vadd.f32 %v3859, %v3906
  %v3908 = vpop.f32.mrf.mxu0
  %v3909 = vpop.f32.mrf.mxu0
  %v3910 = vadd.f32 %v3862, %v3909
  %v3911 = vpop.f32.mrf.mxu0
  %3912 = vmatprep.mubr.bf16.mxu0 %v3558
  %3913 = vmatmul.mubr.bf16.gmra.mxu0 %v3557
  %v3914 = vpop.f32.mrf.mxu0
  %v3915 = vadd.f32 %v3867, %v3914
  %v3916 = vpop.f32.mrf.mxu0
  %v3917 = vpop.f32.mrf.mxu0
  %v3918 = vpop.f32.mrf.mxu0
  %3919 = vdwg.mxu0
  %v3920 = vmax.f32 %v3907, 0.0
  %v3921 = vmax.f32 %v3910, 0.0
  %v3922 = vmax.f32 %v3915, 0.0
  %3923 = vst [vmem:[#allocation3 + $0x2] sm:$0xff] %v3920
  %3924 = vst [vmem:[#allocation3 + $0xa] sm:$0x7] %v3921
  %3925 = vst [vmem:[#allocation3 + $0xe] sm:$0xf8] %v3921
  %3926 = vst [vmem:[#allocation3 + $0x16] sm:$0x3f] %v3922
  %v3927 = vld [vmem:[#allocation3] ss:$2 sm:$0x3f]
  %v3928 = vld [vmem:[%s1366] ss:$2 sm:$0x3f]
  %v3929 = vld [vmem:[%s1368] ss:$2 sm:$0x3f]
  %v3930 = vld [vmem:[%s1370] ss:$2 sm:$0x3f]
  %v3931 = vld [vmem:[%s1372] ss:$2 sm:$0x3f]
  %v3932 = vld [vmem:[%s1374] ss:$2 sm:$0x3f]
  %v3933 = vld [vmem:[%s1376] ss:$2 sm:$0x3f]
  %v3934 = vld [vmem:[%s1378] ss:$2 sm:$0x3f]
  %v3935 = vld [vmem:[%s1380] ss:$2 sm:$0x3f]
  %v3936 = vld [vmem:[%s1382] ss:$2 sm:$0x3f]
  %v3942 = vrot.slane %v3932, 2
  %v3943 = vrot.slane %v3933, 2
  %v3944 = vrot.slane %v3934, 2
  %v3945 = vrot.slane %v3935, 2
  %v3946 = vrot.slane %v3936, 2
  %v3952 = vsel %vm1399, %v3927, %v3942
  %v3953 = vsel %vm1399, %v3928, %v3943
  %v3954 = vsel %vm1399, %v3929, %v3944
  %v3955 = vsel %vm1399, %v3930, %v3945
  %v3956 = vsel %vm1399, %v3931, %v3946
  %v3957 = vpack.c.bf16 %v3942, %v3952
  %v3958 = vpack.c.bf16 %v3943, %v3953
  %v3959 = vpack.c.bf16 %v3944, %v3954
  %v3960 = vpack.c.bf16 %v3945, %v3955
  %v3961 = vpack.c.bf16 %v3946, %v3956
  %s3962 = scalar_lea.vmem %s5, 640
  %v3963 = vld [vmem:[%s3962] sm:$0xff]
  %v3964 = vld [vmem:[%s3962 + $0x8] sm:$0xff]
  %v3965 = vld [vmem:[%s3962 + $0x10] sm:$0xff]
  %v3966 = vld [vmem:[%s3962 + $0x18] sm:$0xff]
  %v3967 = vld [vmem:[%s3962 + $0x20] sm:$0xff]
  %v3968 = vld [vmem:[%s3962 + $0x28] sm:$0xff]
  %v3969 = vld [vmem:[%s3962 + $0x30] sm:$0xff]
  %v3970 = vld [vmem:[%s3962 + $0x38] sm:$0xff]
  %v3971 = vld [vmem:[%s3962 + $0x40] sm:$0xff]
  %v3972 = vld [vmem:[%s3962 + $0x48] sm:$0xff]
  %v3973 = vld [vmem:[%s3962 + $0x50] sm:$0xff]
  %v3974 = vld [vmem:[%s3962 + $0x58] sm:$0xff]
  %v3975 = vld [vmem:[%s3962 + $0x60] sm:$0xff]
  %v3976 = vld [vmem:[%s3962 + $0x68] sm:$0xff]
  %v3977 = vld [vmem:[%s3962 + $0x70] sm:$0xff]
  %v3978 = vld [vmem:[%s3962 + $0x78] sm:$0xff]
  %v3979 = vld [vmem:[%s3962 + $0x80] sm:$0xff]
  %v3980 = vld [vmem:[%s3962 + $0x88] sm:$0xff]
  %v3981 = vld [vmem:[%s3962 + $0x90] sm:$0xff]
  %v3982 = vld [vmem:[%s3962 + $0x98] sm:$0xff]
  %v3983 = vld [vmem:[%s3962 + $0xa0] sm:$0xff]
  %v3984 = vld [vmem:[%s3962 + $0xa8] sm:$0xff]
  %v3985 = vld [vmem:[%s3962 + $0xb0] sm:$0xff]
  %v3986 = vld [vmem:[%s3962 + $0xb8] sm:$0xff]
  %v3987 = vld [vmem:[%s3962 + $0xc0] sm:$0xff]
  %v3988 = vld [vmem:[%s3962 + $0xc8] sm:$0xff]
  %v3989 = vld [vmem:[%s3962 + $0xd0] sm:$0xff]
  %v3990 = vld [vmem:[%s3962 + $0xd8] sm:$0xff]
  %v3991 = vld [vmem:[%s3962 + $0xe0] sm:$0xff]
  %v3992 = vld [vmem:[%s3962 + $0xe8] sm:$0xff]
  %v3993 = vld [vmem:[%s3962 + $0xf0] sm:$0xff]
  %v3994 = vld [vmem:[%s3962 + $0xf8] sm:$0xff]
  %v3995 = vld [vmem:[%s3962 + $0x100] sm:$0xff]
  %v3996 = vld [vmem:[%s3962 + $0x108] sm:$0xff]
  %v3997 = vld [vmem:[%s3962 + $0x110] sm:$0xff]
  %v3998 = vld [vmem:[%s3962 + $0x118] sm:$0xff]
  %v3999 = vld [vmem:[%s3962 + $0x120] sm:$0xff]
  %v4000 = vld [vmem:[%s3962 + $0x128] sm:$0xff]
  %v4001 = vld [vmem:[%s3962 + $0x130] sm:$0xff]
  %v4002 = vld [vmem:[%s3962 + $0x138] sm:$0xff]
  %v4003 = vld [vmem:[%s3962 + $0x140] sm:$0xff]
  %v4004 = vld [vmem:[%s3962 + $0x148] sm:$0xff]
  %v4005 = vld [vmem:[%s3962 + $0x150] sm:$0xff]
  %v4006 = vld [vmem:[%s3962 + $0x158] sm:$0xff]
  %v4007 = vld [vmem:[%s3962 + $0x160] sm:$0xff]
  %v4008 = vld [vmem:[%s3962 + $0x168] sm:$0xff]
  %v4009 = vld [vmem:[%s3962 + $0x170] sm:$0xff]
  %v4010 = vld [vmem:[%s3962 + $0x178] sm:$0xff]
  %v4011 = vld [vmem:[%s3962 + $0x180] sm:$0xff]
  %v4012 = vld [vmem:[%s3962 + $0x188] sm:$0xff]
  %v4013 = vld [vmem:[%s3962 + $0x190] sm:$0xff]
  %v4014 = vld [vmem:[%s3962 + $0x198] sm:$0xff]
  %v4015 = vld [vmem:[%s3962 + $0x1a0] sm:$0xff]
  %v4016 = vld [vmem:[%s3962 + $0x1a8] sm:$0xff]
  %v4017 = vld [vmem:[%s3962 + $0x1b0] sm:$0xff]
  %v4018 = vld [vmem:[%s3962 + $0x1b8] sm:$0xff]
  %v4019 = vld [vmem:[%s3962 + $0x1c0] sm:$0xff]
  %v4020 = vld [vmem:[%s3962 + $0x1c8] sm:$0xff]
  %v4021 = vld [vmem:[%s3962 + $0x1d0] sm:$0xff]
  %v4022 = vld [vmem:[%s3962 + $0x1d8] sm:$0xff]
  %v4023 = vld [vmem:[%s3962 + $0x1e0] sm:$0xff]
  %v4024 = vld [vmem:[%s3962 + $0x1e8] sm:$0xff]
  %v4025 = vld [vmem:[%s3962 + $0x1f0] sm:$0xff]
  %v4026 = vld [vmem:[%s3962 + $0x1f8] sm:$0xff]
  %v4027 = vld [vmem:[%s3962 + $0x200] sm:$0xff]
  %v4028 = vld [vmem:[%s3962 + $0x208] sm:$0xff]
  %v4029 = vld [vmem:[%s3962 + $0x210] sm:$0xff]
  %v4030 = vld [vmem:[%s3962 + $0x218] sm:$0xff]
  %v4031 = vld [vmem:[%s3962 + $0x220] sm:$0xff]
  %v4032 = vld [vmem:[%s3962 + $0x228] sm:$0xff]
  %v4033 = vld [vmem:[%s3962 + $0x230] sm:$0xff]
  %v4034 = vld [vmem:[%s3962 + $0x238] sm:$0xff]
  %v4035 = vld [vmem:[%s3962 + $0x240] sm:$0xff]
  %v4036 = vld [vmem:[%s3962 + $0x248] sm:$0xff]
  %v4037 = vld [vmem:[%s3962 + $0x250] sm:$0xff]
  %v4038 = vld [vmem:[%s3962 + $0x258] sm:$0xff]
  %v4039 = vld [vmem:[%s3962 + $0x260] sm:$0xff]
  %v4040 = vld [vmem:[%s3962 + $0x268] sm:$0xff]
  %v4041 = vld [vmem:[%s3962 + $0x270] sm:$0xff]
  %v4042 = vld [vmem:[%s3962 + $0x278] sm:$0xff]
  %s4043 = scalar_lea.vmem %s6, 2
  %v4044 = vld [vmem:[%s4043] sm:$0x3]
  %v4046 = vlaneseq
  %v4047 = vshrl.u32 %v4046, 7
  %v4048 = vsub.s32 0, %v4047
  %v4049 = vrot.slane %v4044, %v4048
  %v4050 = vlaneseq
  %v4051 = vshrl.u32 %v4050, 7
  %v4052 = vsub.s32 1, %v4051
  %v4053 = vrot.slane %v4044, %v4052
  %v4136 = vunpack.c.l.b16 %v3963
  %v4137 = vunpack.c.h.b16 %v3963
  %v4138 = vunpack.c.l.b16 %v3964
  %v4139 = vunpack.c.h.b16 %v3964
  %v4140 = vunpack.c.l.b16 %v3965
  %v4141 = vunpack.c.h.b16 %v3965
  %v4142 = vunpack.c.l.b16 %v3966
  %v4143 = vunpack.c.h.b16 %v3966
  %v4144 = vunpack.c.l.b16 %v3967
  %v4145 = vunpack.c.h.b16 %v3967
  %v4146 = vunpack.c.l.b16 %v3968
  %v4147 = vunpack.c.h.b16 %v3968
  %v4148 = vunpack.c.l.b16 %v3969
  %v4149 = vunpack.c.h.b16 %v3969
  %v4150 = vunpack.c.l.b16 %v3970
  %v4151 = vunpack.c.h.b16 %v3970
  %v4152 = vunpack.c.l.b16 %v3971
  %v4153 = vunpack.c.h.b16 %v3971
  %v4154 = vunpack.c.l.b16 %v3972
  %v4155 = vunpack.c.h.b16 %v3972
  %v4156 = vunpack.c.l.b16 %v3973
  %v4157 = vunpack.c.h.b16 %v3973
  %v4158 = vunpack.c.l.b16 %v3974
  %v4159 = vunpack.c.h.b16 %v3974
  %v4160 = vunpack.c.l.b16 %v3975
  %v4161 = vunpack.c.h.b16 %v3975
  %v4162 = vunpack.c.l.b16 %v3976
  %v4163 = vunpack.c.h.b16 %v3976
  %v4164 = vunpack.c.l.b16 %v3977
  %v4165 = vunpack.c.h.b16 %v3977
  %v4166 = vunpack.c.l.b16 %v3978
  %v4167 = vunpack.c.h.b16 %v3978
  %v4168 = vunpack.c.l.b16 %v3979
  %v4169 = vunpack.c.h.b16 %v3979
  %v4170 = vunpack.c.l.b16 %v3980
  %v4171 = vunpack.c.h.b16 %v3980
  %v4172 = vunpack.c.l.b16 %v3981
  %v4173 = vunpack.c.h.b16 %v3981
  %v4174 = vunpack.c.l.b16 %v3982
  %v4175 = vunpack.c.h.b16 %v3982
  %v4176 = vunpack.c.l.b16 %v3983
  %v4177 = vunpack.c.h.b16 %v3983
  %v4178 = vunpack.c.l.b16 %v3984
  %v4179 = vunpack.c.h.b16 %v3984
  %v4180 = vunpack.c.l.b16 %v3985
  %v4181 = vunpack.c.h.b16 %v3985
  %v4182 = vunpack.c.l.b16 %v3986
  %v4183 = vunpack.c.h.b16 %v3986
  %v4184 = vunpack.c.l.b16 %v3987
  %v4185 = vunpack.c.h.b16 %v3987
  %v4186 = vunpack.c.l.b16 %v3988
  %v4187 = vunpack.c.h.b16 %v3988
  %v4188 = vunpack.c.l.b16 %v3989
  %v4189 = vunpack.c.h.b16 %v3989
  %v4190 = vunpack.c.l.b16 %v3990
  %v4191 = vunpack.c.h.b16 %v3990
  %v4192 = vunpack.c.l.b16 %v3991
  %v4193 = vunpack.c.h.b16 %v3991
  %v4194 = vunpack.c.l.b16 %v3992
  %v4195 = vunpack.c.h.b16 %v3992
  %v4196 = vunpack.c.l.b16 %v3993
  %v4197 = vunpack.c.h.b16 %v3993
  %v4198 = vunpack.c.l.b16 %v3994
  %v4199 = vunpack.c.h.b16 %v3994
  %v4200 = vunpack.c.l.b16 %v3995
  %v4201 = vunpack.c.h.b16 %v3995
  %v4202 = vunpack.c.l.b16 %v3996
  %v4203 = vunpack.c.h.b16 %v3996
  %v4204 = vunpack.c.l.b16 %v3997
  %v4205 = vunpack.c.h.b16 %v3997
  %v4206 = vunpack.c.l.b16 %v3998
  %v4207 = vunpack.c.h.b16 %v3998
  %v4208 = vunpack.c.l.b16 %v3999
  %v4209 = vunpack.c.h.b16 %v3999
  %v4210 = vunpack.c.l.b16 %v4000
  %v4211 = vunpack.c.h.b16 %v4000
  %v4212 = vunpack.c.l.b16 %v4001
  %v4213 = vunpack.c.h.b16 %v4001
  %v4214 = vunpack.c.l.b16 %v4002
  %v4215 = vunpack.c.h.b16 %v4002
  %v4216 = vunpack.c.l.b16 %v4003
  %v4217 = vunpack.c.h.b16 %v4003
  %v4218 = vunpack.c.l.b16 %v4004
  %v4219 = vunpack.c.h.b16 %v4004
  %v4220 = vunpack.c.l.b16 %v4005
  %v4221 = vunpack.c.h.b16 %v4005
  %v4222 = vunpack.c.l.b16 %v4006
  %v4223 = vunpack.c.h.b16 %v4006
  %v4224 = vunpack.c.l.b16 %v4007
  %v4225 = vunpack.c.h.b16 %v4007
  %v4226 = vunpack.c.l.b16 %v4008
  %v4227 = vunpack.c.h.b16 %v4008
  %v4228 = vunpack.c.l.b16 %v4009
  %v4229 = vunpack.c.h.b16 %v4009
  %v4230 = vunpack.c.l.b16 %v4010
  %v4231 = vunpack.c.h.b16 %v4010
  %v4232 = vunpack.c.l.b16 %v4011
  %v4233 = vunpack.c.h.b16 %v4011
  %v4234 = vunpack.c.l.b16 %v4012
  %v4235 = vunpack.c.h.b16 %v4012
  %v4236 = vunpack.c.l.b16 %v4013
  %v4237 = vunpack.c.h.b16 %v4013
  %v4238 = vunpack.c.l.b16 %v4014
  %v4239 = vunpack.c.h.b16 %v4014
  %v4240 = vunpack.c.l.b16 %v4015
  %v4241 = vunpack.c.h.b16 %v4015
  %v4242 = vunpack.c.l.b16 %v4016
  %v4243 = vunpack.c.h.b16 %v4016
  %v4244 = vunpack.c.l.b16 %v4017
  %v4245 = vunpack.c.h.b16 %v4017
  %v4246 = vunpack.c.l.b16 %v4018
  %v4247 = vunpack.c.h.b16 %v4018
  %v4248 = vunpack.c.l.b16 %v4019
  %v4249 = vunpack.c.h.b16 %v4019
  %v4250 = vunpack.c.l.b16 %v4020
  %v4251 = vunpack.c.h.b16 %v4020
  %v4252 = vunpack.c.l.b16 %v4021
  %v4253 = vunpack.c.h.b16 %v4021
  %v4254 = vunpack.c.l.b16 %v4022
  %v4255 = vunpack.c.h.b16 %v4022
  %v4256 = vunpack.c.l.b16 %v4023
  %v4257 = vunpack.c.h.b16 %v4023
  %v4258 = vunpack.c.l.b16 %v4024
  %v4259 = vunpack.c.h.b16 %v4024
  %v4260 = vunpack.c.l.b16 %v4025
  %v4261 = vunpack.c.h.b16 %v4025
  %v4262 = vunpack.c.l.b16 %v4026
  %v4263 = vunpack.c.h.b16 %v4026
  %v4264 = vunpack.c.l.b16 %v4027
  %v4265 = vunpack.c.h.b16 %v4027
  %v4266 = vunpack.c.l.b16 %v4028
  %v4267 = vunpack.c.h.b16 %v4028
  %v4268 = vunpack.c.l.b16 %v4029
  %v4269 = vunpack.c.h.b16 %v4029
  %v4270 = vunpack.c.l.b16 %v4030
  %v4271 = vunpack.c.h.b16 %v4030
  %v4272 = vunpack.c.l.b16 %v4031
  %v4273 = vunpack.c.h.b16 %v4031
  %v4274 = vunpack.c.l.b16 %v4032
  %v4275 = vunpack.c.h.b16 %v4032
  %v4276 = vunpack.c.l.b16 %v4033
  %v4277 = vunpack.c.h.b16 %v4033
  %v4278 = vunpack.c.l.b16 %v4034
  %v4279 = vunpack.c.h.b16 %v4034
  %v4280 = vunpack.c.l.b16 %v4035
  %v4281 = vunpack.c.h.b16 %v4035
  %v4282 = vunpack.c.l.b16 %v4036
  %v4283 = vunpack.c.h.b16 %v4036
  %v4284 = vunpack.c.l.b16 %v4037
  %v4285 = vunpack.c.h.b16 %v4037
  %v4286 = vunpack.c.l.b16 %v4038
  %v4287 = vunpack.c.h.b16 %v4038
  %v4288 = vunpack.c.l.b16 %v4039
  %v4289 = vunpack.c.h.b16 %v4039
  %v4290 = vunpack.c.l.b16 %v4040
  %v4291 = vunpack.c.h.b16 %v4040
  %v4292 = vunpack.c.l.b16 %v4041
  %v4293 = vunpack.c.h.b16 %v4041
  %v4294 = vunpack.c.l.b16 %v4042
  %v4295 = vunpack.c.h.b16 %v4042
  %v4296 = vpack.c.b16 %v4138, %v4136
  %v4297 = vpack.c.b16 %v4139, %v4137
  %v4298 = vpack.c.b16 %v4142, %v4140
  %v4299 = vpack.c.b16 %v4143, %v4141
  %v4300 = vpack.c.b16 %v4146, %v4144
  %v4301 = vpack.c.b16 %v4147, %v4145
  %v4302 = vpack.c.b16 %v4150, %v4148
  %v4303 = vpack.c.b16 %v4151, %v4149
  %v4304 = vpack.c.b16 %v4154, %v4152
  %v4305 = vpack.c.b16 %v4155, %v4153
  %v4306 = vpack.c.b16 %v4158, %v4156
  %v4307 = vpack.c.b16 %v4159, %v4157
  %v4308 = vpack.c.b16 %v4162, %v4160
  %v4309 = vpack.c.b16 %v4163, %v4161
  %v4310 = vpack.c.b16 %v4166, %v4164
  %v4311 = vpack.c.b16 %v4167, %v4165
  %v4312 = vpack.c.b16 %v4170, %v4168
  %v4313 = vpack.c.b16 %v4171, %v4169
  %v4314 = vpack.c.b16 %v4174, %v4172
  %v4315 = vpack.c.b16 %v4175, %v4173
  %v4316 = vpack.c.b16 %v4178, %v4176
  %v4317 = vpack.c.b16 %v4179, %v4177
  %v4318 = vpack.c.b16 %v4182, %v4180
  %v4319 = vpack.c.b16 %v4183, %v4181
  %v4320 = vpack.c.b16 %v4186, %v4184
  %v4321 = vpack.c.b16 %v4187, %v4185
  %v4322 = vpack.c.b16 %v4190, %v4188
  %v4323 = vpack.c.b16 %v4191, %v4189
  %v4324 = vpack.c.b16 %v4194, %v4192
  %v4325 = vpack.c.b16 %v4195, %v4193
  %v4326 = vpack.c.b16 %v4198, %v4196
  %v4327 = vpack.c.b16 %v4199, %v4197
  %v4328 = vpack.c.b16 %v4202, %v4200
  %v4329 = vpack.c.b16 %v4203, %v4201
  %v4330 = vpack.c.b16 %v4206, %v4204
  %v4331 = vpack.c.b16 %v4207, %v4205
  %v4332 = vpack.c.b16 %v4210, %v4208
  %v4333 = vpack.c.b16 %v4211, %v4209
  %v4334 = vpack.c.b16 %v4214, %v4212
  %v4335 = vpack.c.b16 %v4215, %v4213
  %v4336 = vpack.c.b16 %v4218, %v4216
  %v4337 = vpack.c.b16 %v4219, %v4217
  %v4338 = vpack.c.b16 %v4222, %v4220
  %v4339 = vpack.c.b16 %v4223, %v4221
  %v4340 = vpack.c.b16 %v4226, %v4224
  %v4341 = vpack.c.b16 %v4227, %v4225
  %v4342 = vpack.c.b16 %v4230, %v4228
  %v4343 = vpack.c.b16 %v4231, %v4229
  %v4344 = vpack.c.b16 %v4234, %v4232
  %v4345 = vpack.c.b16 %v4235, %v4233
  %v4346 = vpack.c.b16 %v4238, %v4236
  %v4347 = vpack.c.b16 %v4239, %v4237
  %v4348 = vpack.c.b16 %v4242, %v4240
  %v4349 = vpack.c.b16 %v4243, %v4241
  %v4350 = vpack.c.b16 %v4246, %v4244
  %v4351 = vpack.c.b16 %v4247, %v4245
  %v4352 = vpack.c.b16 %v4250, %v4248
  %v4353 = vpack.c.b16 %v4251, %v4249
  %v4354 = vpack.c.b16 %v4254, %v4252
  %v4355 = vpack.c.b16 %v4255, %v4253
  %v4356 = vpack.c.b16 %v4258, %v4256
  %v4357 = vpack.c.b16 %v4259, %v4257
  %v4358 = vpack.c.b16 %v4262, %v4260
  %v4359 = vpack.c.b16 %v4263, %v4261
  %v4360 = vpack.c.b16 %v4266, %v4264
  %v4361 = vpack.c.b16 %v4267, %v4265
  %v4362 = vpack.c.b16 %v4270, %v4268
  %v4363 = vpack.c.b16 %v4271, %v4269
  %v4364 = vpack.c.b16 %v4274, %v4272
  %v4365 = vpack.c.b16 %v4275, %v4273
  %v4366 = vpack.c.b16 %v4278, %v4276
  %v4367 = vpack.c.b16 %v4279, %v4277
  %v4368 = vpack.c.b16 %v4282, %v4280
  %v4369 = vpack.c.b16 %v4283, %v4281
  %v4370 = vpack.c.b16 %v4286, %v4284
  %v4371 = vpack.c.b16 %v4287, %v4285
  %v4372 = vpack.c.b16 %v4290, %v4288
  %v4373 = vpack.c.b16 %v4291, %v4289
  %v4374 = vpack.c.b16 %v4294, %v4292
  %v4375 = vpack.c.b16 %v4295, %v4293
  %4456 = vmatprep.subr.bf16.mxu0 %v4311
  %4457 = vmatpush1.bf16.msra.mxu0 %v4310
  %4458 = vmatprep.subr.bf16.mxu0 %v4309
  %4459 = vmatpush1.bf16.msra.mxu0 %v4308
  %4460 = vmatprep.subr.bf16.mxu0 %v4307
  %4461 = vmatpush1.bf16.msra.mxu0 %v4306
  %4462 = vmatprep.subr.bf16.mxu0 %v4305
  %4463 = vmatpush1.bf16.msra.mxu0 %v4304
  %4464 = vmatprep.subr.bf16.mxu0 %v4303
  %4465 = vmatpush1.bf16.msra.mxu0 %v4302
  %4466 = vmatprep.subr.bf16.mxu0 %v4301
  %4467 = vmatpush1.bf16.msra.mxu0 %v4300
  %4468 = vmatprep.subr.bf16.mxu0 %v4299
  %4469 = vmatpush1.bf16.msra.mxu0 %v4298
  %4470 = vmatprep.subr.bf16.mxu0 %v4297
  %4471 = vmatpush1.bf16.msra.mxu0 %v4296
  %4472 = vmatprep.subr.bf16.mxu0 %v4327
  %4473 = vmatpush2.bf16.msra.mxu0 %v4326
  %4474 = vmatprep.subr.bf16.mxu0 %v4325
  %4475 = vmatpush2.bf16.msra.mxu0 %v4324
  %4476 = vmatprep.subr.bf16.mxu0 %v4323
  %4477 = vmatpush2.bf16.msra.mxu0 %v4322
  %4478 = vmatprep.subr.bf16.mxu0 %v4321
  %4479 = vmatpush2.bf16.msra.mxu0 %v4320
  %4480 = vmatprep.subr.bf16.mxu0 %v4319
  %4481 = vmatpush2.bf16.msra.mxu0 %v4318
  %4482 = vmatprep.subr.bf16.mxu0 %v4317
  %4483 = vmatpush2.bf16.msra.mxu0 %v4316
  %4484 = vmatprep.subr.bf16.mxu0 %v4315
  %4485 = vmatpush2.bf16.msra.mxu0 %v4314
  %4486 = vmatprep.subr.bf16.mxu0 %v4313
  %4487 = vmatpush2.bf16.msra.mxu0 %v4312
  %4488 = vmatprep.mubr.bf16.mxu0 %v3958
  %4489 = vmatmul.mubr.bf16.gmra.mxu0 %v3957
  %v4490 = vpop.f32.mrf.mxu0
  %v4491 = vadd.f32 %v4049, %v4490
  %v4492 = vpop.f32.mrf.mxu0
  %v4493 = vadd.f32 %v4053, %v4492
  %v4494 = vpop.f32.mrf.mxu0
  %v4495 = vadd.f32 %v4049, %v4494
  %v4496 = vpop.f32.mrf.mxu0
  %v4497 = vadd.f32 %v4053, %v4496
  %4498 = vdwg.mxu0
  %4499 = vmatprep.subr.bf16.mxu0 %v4343
  %4500 = vmatpush1.bf16.msra.mxu0 %v4342
  %4501 = vmatprep.subr.bf16.mxu0 %v4341
  %4502 = vmatpush1.bf16.msra.mxu0 %v4340
  %4503 = vmatprep.subr.bf16.mxu0 %v4339
  %4504 = vmatpush1.bf16.msra.mxu0 %v4338
  %4505 = vmatprep.subr.bf16.mxu0 %v4337
  %4506 = vmatpush1.bf16.msra.mxu0 %v4336
  %4507 = vmatprep.subr.bf16.mxu0 %v4335
  %4508 = vmatpush1.bf16.msra.mxu0 %v4334
  %4509 = vmatprep.subr.bf16.mxu0 %v4333
  %4510 = vmatpush1.bf16.msra.mxu0 %v4332
  %4511 = vmatprep.subr.bf16.mxu0 %v4331
  %4512 = vmatpush1.bf16.msra.mxu0 %v4330
  %4513 = vmatprep.subr.bf16.mxu0 %v4329
  %4514 = vmatpush1.bf16.msra.mxu0 %v4328
  %4515 = vmatprep.subr.bf16.mxu0 %v4359
  %4516 = vmatpush2.bf16.msra.mxu0 %v4358
  %4517 = vmatprep.subr.bf16.mxu0 %v4357
  %4518 = vmatpush2.bf16.msra.mxu0 %v4356
  %4519 = vmatprep.subr.bf16.mxu0 %v4355
  %4520 = vmatpush2.bf16.msra.mxu0 %v4354
  %4521 = vmatprep.subr.bf16.mxu0 %v4353
  %4522 = vmatpush2.bf16.msra.mxu0 %v4352
  %4523 = vmatprep.subr.bf16.mxu0 %v4351
  %4524 = vmatpush2.bf16.msra.mxu0 %v4350
  %4525 = vmatprep.subr.bf16.mxu0 %v4349
  %4526 = vmatpush2.bf16.msra.mxu0 %v4348
  %4527 = vmatprep.subr.bf16.mxu0 %v4347
  %4528 = vmatpush2.bf16.msra.mxu0 %v4346
  %4529 = vmatprep.subr.bf16.mxu0 %v4345
  %4530 = vmatpush2.bf16.msra.mxu0 %v4344
  %4531 = vmatprep.mubr.bf16.mxu0 %v3960
  %4532 = vmatmul.mubr.bf16.gmra.mxu0 %v3959
  %v4533 = vpop.f32.mrf.mxu0
  %v4534 = vadd.f32 %v4491, %v4533
  %v4535 = vpop.f32.mrf.mxu0
  %v4536 = vadd.f32 %v4493, %v4535
  %v4537 = vpop.f32.mrf.mxu0
  %v4538 = vadd.f32 %v4495, %v4537
  %v4539 = vpop.f32.mrf.mxu0
  %v4540 = vadd.f32 %v4497, %v4539
  %4541 = vdwg.mxu0
  %4542 = vmatprep.subr.bf16.mxu0 %v4375
  %4543 = vmatpush1.bf16.msra.mxu0 %v4374
  %4544 = vmatprep.subr.bf16.mxu0 %v4373
  %4545 = vmatpush1.bf16.msra.mxu0 %v4372
  %4546 = vmatprep.subr.bf16.mxu0 %v4371
  %4547 = vmatpush1.bf16.msra.mxu0 %v4370
  %4548 = vmatprep.subr.bf16.mxu0 %v4369
  %4549 = vmatpush1.bf16.msra.mxu0 %v4368
  %4550 = vmatprep.subr.bf16.mxu0 %v4367
  %4551 = vmatpush1.bf16.msra.mxu0 %v4366
  %4552 = vmatprep.subr.bf16.mxu0 %v4365
  %4553 = vmatpush1.bf16.msra.mxu0 %v4364
  %4554 = vmatprep.subr.bf16.mxu0 %v4363
  %4555 = vmatpush1.bf16.msra.mxu0 %v4362
  %4556 = vmatprep.subr.bf16.mxu0 %v4361
  %4557 = vmatpush1.bf16.msra.mxu0 %v4360
  %4558 = vmatprep.subr.bf16.mxu0 0
  %4559 = vmatpush2.bf16.msra.mxu0 0
  %4560 = vmatprep.subr.bf16.mxu0 0
  %4561 = vmatpush2.bf16.msra.mxu0 0
  %4562 = vmatprep.subr.bf16.mxu0 0
  %4563 = vmatpush2.bf16.msra.mxu0 0
  %4564 = vmatprep.subr.bf16.mxu0 0
  %4565 = vmatpush2.bf16.msra.mxu0 0
  %4566 = vmatprep.subr.bf16.mxu0 0
  %4567 = vmatpush2.bf16.msra.mxu0 0
  %4568 = vmatprep.subr.bf16.mxu0 0
  %4569 = vmatpush2.bf16.msra.mxu0 0
  %4570 = vmatprep.subr.bf16.mxu0 0
  %4571 = vmatpush2.bf16.msra.mxu0 0
  %4572 = vmatprep.subr.bf16.mxu0 0
  %4573 = vmatpush2.bf16.msra.mxu0 0
  %4574 = vmatprep.mubr.bf16.mxu0 0
  %4575 = vmatmul.mubr.bf16.gmra.mxu0 %v3961
  %v4576 = vpop.f32.mrf.mxu0
  %v4577 = vadd.f32 %v4534, %v4576
  %v4578 = vpop.f32.mrf.mxu0
  %v4579 = vadd.f32 %v4536, %v4578
  %v4580 = vpop.f32.mrf.mxu0
  %v4581 = vadd.f32 %v4538, %v4580
  %v4582 = vpop.f32.mrf.mxu0
  %v4583 = vadd.f32 %v4540, %v4582
  %4584 = vdwg.mxu0
  %v4585 = vmax.f32 %v4577, 0.0
  %v4586 = vmax.f32 %v4579, 0.0
  %v4587 = vmax.f32 %v4581, 0.0
  %v4588 = vmax.f32 %v4583, 0.0
  %v4591 = vrot.slane %v4585, 7
  %v4592 = vrot.slane %v4586, 7
  %4595 = vst [vmem:[#allocation4] sm:$0x7e] %v4591
  %4596 = vst [vmem:[#allocation4 + $0x8] sm:$0x7e] %v4592
  %v4599 = vrot.slane %v4585, 5
  %v4600 = vrot.slane %v4587, 5
  %v4601 = vsel %vm966, %v4599, %v4600
  %v4602 = vrot.slane %v4586, 5
  %v4603 = vrot.slane %v4588, 5
  %v4604 = vsel %vm966, %v4602, %v4603
  %4607 = vst [vmem:[#allocation4 + $0x10] sm:$0x7e] %v4601
  %4608 = vst [vmem:[#allocation4 + $0x18] sm:$0x7e] %v4604
  %v4609 = vld [vmem:[#allocation4] sm:$0x3f]
  %v4610 = vld [vmem:[#allocation4 + $0x8] sm:$0x3f]
  %v4611 = vld [vmem:[#allocation4] sm:$0x7e]
  %v4612 = vld [vmem:[#allocation4 + $0x8] sm:$0x7e]
  %v4613 = vld [vmem:[#allocation4] sm:$0xfc]
  %v4614 = vld [vmem:[#allocation4 + $0x8] sm:$0xfc]
  %v4617 = vrot.slane %v4611, 1
  %v4618 = vrot.slane %v4612, 1
  %v4623 = vrot.slane %v4613, 2
  %v4624 = vrot.slane %v4614, 2
  %v4627 = vld [vmem:[#allocation4 + $0x10] sm:$0x3f]
  %v4628 = vld [vmem:[#allocation4 + $0x18] sm:$0x3f]
  %v4629 = vld [vmem:[#allocation4 + $0x10] sm:$0x7e]
  %v4630 = vld [vmem:[#allocation4 + $0x18] sm:$0x7e]
  %v4631 = vld [vmem:[#allocation4 + $0x10] sm:$0xfc]
  %v4632 = vld [vmem:[#allocation4 + $0x18] sm:$0xfc]
  %v4635 = vrot.slane %v4629, 1
  %v4636 = vrot.slane %v4630, 1
  %v4639 = vrot.slane %v4631, 2
  %v4640 = vrot.slane %v4632, 2
  %v4643 = vrot.slane %v4627, 2
  %v4644 = vrot.slane %v4628, 2
  %v4645 = vrot.slane %v4635, 2
  %v4646 = vrot.slane %v4636, 2
  %v4647 = vrot.slane %v4639, 2
  %v4648 = vrot.slane %v4640, 2
  %v4655 = vsel %vm1399, %v4609, %v4643
  %v4656 = vsel %vm1399, %v4610, %v4644
  %v4657 = vsel %vm1399, %v4617, %v4645
  %v4658 = vsel %vm1399, %v4618, %v4646
  %v4659 = vsel %vm1399, %v4623, %v4647
  %v4660 = vsel %vm1399, %v4624, %v4648
  %v4661 = vpack.c.bf16 %v4643, %v4655
  %v4662 = vpack.c.bf16 %v4644, %v4656
  %v4663 = vpack.c.bf16 %v4645, %v4657
  %v4664 = vpack.c.bf16 %v4646, %v4658
  %v4665 = vpack.c.bf16 %v4647, %v4659
  %v4666 = vpack.c.bf16 %v4648, %v4660
  %s4667 = scalar_lea.vmem %s7, 384
  %v4668 = vld [vmem:[%s4667] sm:$0xf]
  %v4669 = vld [vmem:[%s4667 + $0x4] sm:$0xf]
  %v4670 = vld [vmem:[%s4667 + $0x8] sm:$0xf]
  %v4671 = vld [vmem:[%s4667 + $0xc] sm:$0xf]
  %v4672 = vld [vmem:[%s4667 + $0x10] sm:$0xf]
  %v4673 = vld [vmem:[%s4667 + $0x14] sm:$0xf]
  %v4674 = vld [vmem:[%s4667 + $0x18] sm:$0xf]
  %v4675 = vld [vmem:[%s4667 + $0x1c] sm:$0xf]
  %v4676 = vld [vmem:[%s4667 + $0x20] sm:$0xf]
  %v4677 = vld [vmem:[%s4667 + $0x24] sm:$0xf]
  %v4678 = vld [vmem:[%s4667 + $0x28] sm:$0xf]
  %v4679 = vld [vmem:[%s4667 + $0x2c] sm:$0xf]
  %v4680 = vld [vmem:[%s4667 + $0x30] sm:$0xf]
  %v4681 = vld [vmem:[%s4667 + $0x34] sm:$0xf]
  %v4682 = vld [vmem:[%s4667 + $0x38] sm:$0xf]
  %v4683 = vld [vmem:[%s4667 + $0x3c] sm:$0xf]
  %v4684 = vld [vmem:[%s4667 + $0x40] sm:$0xf]
  %v4685 = vld [vmem:[%s4667 + $0x44] sm:$0xf]
  %v4686 = vld [vmem:[%s4667 + $0x48] sm:$0xf]
  %v4687 = vld [vmem:[%s4667 + $0x4c] sm:$0xf]
  %v4688 = vld [vmem:[%s4667 + $0x50] sm:$0xf]
  %v4689 = vld [vmem:[%s4667 + $0x54] sm:$0xf]
  %v4690 = vld [vmem:[%s4667 + $0x58] sm:$0xf]
  %v4691 = vld [vmem:[%s4667 + $0x5c] sm:$0xf]
  %v4692 = vld [vmem:[%s4667 + $0x60] sm:$0xf]
  %v4693 = vld [vmem:[%s4667 + $0x64] sm:$0xf]
  %v4694 = vld [vmem:[%s4667 + $0x68] sm:$0xf]
  %v4695 = vld [vmem:[%s4667 + $0x6c] sm:$0xf]
  %v4696 = vld [vmem:[%s4667 + $0x70] sm:$0xf]
  %v4697 = vld [vmem:[%s4667 + $0x74] sm:$0xf]
  %v4698 = vld [vmem:[%s4667 + $0x78] sm:$0xf]
  %v4699 = vld [vmem:[%s4667 + $0x7c] sm:$0xf]
  %v4700 = vld [vmem:[%s4667 + $0x80] sm:$0xf]
  %v4701 = vld [vmem:[%s4667 + $0x84] sm:$0xf]
  %v4702 = vld [vmem:[%s4667 + $0x88] sm:$0xf]
  %v4703 = vld [vmem:[%s4667 + $0x8c] sm:$0xf]
  %v4704 = vld [vmem:[%s4667 + $0x90] sm:$0xf]
  %v4705 = vld [vmem:[%s4667 + $0x94] sm:$0xf]
  %v4706 = vld [vmem:[%s4667 + $0x98] sm:$0xf]
  %v4707 = vld [vmem:[%s4667 + $0x9c] sm:$0xf]
  %v4708 = vld [vmem:[%s4667 + $0xa0] sm:$0xf]
  %v4709 = vld [vmem:[%s4667 + $0xa4] sm:$0xf]
  %v4710 = vld [vmem:[%s4667 + $0xa8] sm:$0xf]
  %v4711 = vld [vmem:[%s4667 + $0xac] sm:$0xf]
  %v4712 = vld [vmem:[%s4667 + $0xb0] sm:$0xf]
  %v4713 = vld [vmem:[%s4667 + $0xb4] sm:$0xf]
  %v4714 = vld [vmem:[%s4667 + $0xb8] sm:$0xf]
  %v4715 = vld [vmem:[%s4667 + $0xbc] sm:$0xf]
  %v4716 = vld [vmem:[%s4667 + $0xc0] sm:$0xf]
  %v4717 = vld [vmem:[%s4667 + $0xc4] sm:$0xf]
  %v4718 = vld [vmem:[%s4667 + $0xc8] sm:$0xf]
  %v4719 = vld [vmem:[%s4667 + $0xcc] sm:$0xf]
  %v4720 = vld [vmem:[%s4667 + $0xd0] sm:$0xf]
  %v4721 = vld [vmem:[%s4667 + $0xd4] sm:$0xf]
  %v4722 = vld [vmem:[%s4667 + $0xd8] sm:$0xf]
  %v4723 = vld [vmem:[%s4667 + $0xdc] sm:$0xf]
  %v4724 = vld [vmem:[%s4667 + $0xe0] sm:$0xf]
  %v4725 = vld [vmem:[%s4667 + $0xe4] sm:$0xf]
  %v4726 = vld [vmem:[%s4667 + $0xe8] sm:$0xf]
  %v4727 = vld [vmem:[%s4667 + $0xec] sm:$0xf]
  %v4728 = vld [vmem:[%s4667 + $0xf0] sm:$0xf]
  %v4729 = vld [vmem:[%s4667 + $0xf4] sm:$0xf]
  %v4730 = vld [vmem:[%s4667 + $0xf8] sm:$0xf]
  %v4731 = vld [vmem:[%s4667 + $0xfc] sm:$0xf]
  %v4732 = vld [vmem:[%s4667 + $0x100] sm:$0xf]
  %v4733 = vld [vmem:[%s4667 + $0x104] sm:$0xf]
  %v4734 = vld [vmem:[%s4667 + $0x108] sm:$0xf]
  %v4735 = vld [vmem:[%s4667 + $0x10c] sm:$0xf]
  %v4736 = vld [vmem:[%s4667 + $0x110] sm:$0xf]
  %v4737 = vld [vmem:[%s4667 + $0x114] sm:$0xf]
  %v4738 = vld [vmem:[%s4667 + $0x118] sm:$0xf]
  %v4739 = vld [vmem:[%s4667 + $0x11c] sm:$0xf]
  %v4740 = vld [vmem:[%s4667 + $0x120] sm:$0xf]
  %v4741 = vld [vmem:[%s4667 + $0x124] sm:$0xf]
  %v4742 = vld [vmem:[%s4667 + $0x128] sm:$0xf]
  %v4743 = vld [vmem:[%s4667 + $0x12c] sm:$0xf]
  %v4744 = vld [vmem:[%s4667 + $0x130] sm:$0xf]
  %v4745 = vld [vmem:[%s4667 + $0x134] sm:$0xf]
  %v4746 = vld [vmem:[%s4667 + $0x138] sm:$0xf]
  %v4747 = vld [vmem:[%s4667 + $0x13c] sm:$0xf]
  %v4748 = vld [vmem:[%s4667 + $0x140] sm:$0xf]
  %v4749 = vld [vmem:[%s4667 + $0x144] sm:$0xf]
  %v4750 = vld [vmem:[%s4667 + $0x148] sm:$0xf]
  %v4751 = vld [vmem:[%s4667 + $0x14c] sm:$0xf]
  %v4752 = vld [vmem:[%s4667 + $0x150] sm:$0xf]
  %v4753 = vld [vmem:[%s4667 + $0x154] sm:$0xf]
  %v4754 = vld [vmem:[%s4667 + $0x158] sm:$0xf]
  %v4755 = vld [vmem:[%s4667 + $0x15c] sm:$0xf]
  %v4756 = vld [vmem:[%s4667 + $0x160] sm:$0xf]
  %v4757 = vld [vmem:[%s4667 + $0x164] sm:$0xf]
  %v4758 = vld [vmem:[%s4667 + $0x168] sm:$0xf]
  %v4759 = vld [vmem:[%s4667 + $0x16c] sm:$0xf]
  %v4760 = vld [vmem:[%s4667 + $0x170] sm:$0xf]
  %v4761 = vld [vmem:[%s4667 + $0x174] sm:$0xf]
  %v4762 = vld [vmem:[%s4667 + $0x178] sm:$0xf]
  %v4763 = vld [vmem:[%s4667 + $0x17c] sm:$0xf]
  %s4764 = scalar_lea.vmem %s8, 1
  %v4765 = vld [vmem:[%s4764] sm:$0x1]
  %v4767 = vlaneseq
  %v4768 = vshrl.u32 %v4767, 7
  %v4769 = vsub.s32 0, %v4768
  %v4770 = vrot.slane %v4765, %v4769
  %v4868 = vunpack.c.l.b16 %v4668
  %v4869 = vunpack.c.l.b16 %v4669
  %v4870 = vunpack.c.l.b16 %v4670
  %v4871 = vunpack.c.l.b16 %v4671
  %v4872 = vunpack.c.l.b16 %v4672
  %v4873 = vunpack.c.l.b16 %v4673
  %v4874 = vunpack.c.l.b16 %v4674
  %v4875 = vunpack.c.l.b16 %v4675
  %v4876 = vunpack.c.l.b16 %v4676
  %v4877 = vunpack.c.l.b16 %v4677
  %v4878 = vunpack.c.l.b16 %v4678
  %v4879 = vunpack.c.l.b16 %v4679
  %v4880 = vunpack.c.l.b16 %v4680
  %v4881 = vunpack.c.l.b16 %v4681
  %v4882 = vunpack.c.l.b16 %v4682
  %v4883 = vunpack.c.l.b16 %v4683
  %v4884 = vunpack.c.l.b16 %v4684
  %v4885 = vunpack.c.l.b16 %v4685
  %v4886 = vunpack.c.l.b16 %v4686
  %v4887 = vunpack.c.l.b16 %v4687
  %v4888 = vunpack.c.l.b16 %v4688
  %v4889 = vunpack.c.l.b16 %v4689
  %v4890 = vunpack.c.l.b16 %v4690
  %v4891 = vunpack.c.l.b16 %v4691
  %v4892 = vunpack.c.l.b16 %v4692
  %v4893 = vunpack.c.l.b16 %v4693
  %v4894 = vunpack.c.l.b16 %v4694
  %v4895 = vunpack.c.l.b16 %v4695
  %v4896 = vunpack.c.l.b16 %v4696
  %v4897 = vunpack.c.l.b16 %v4697
  %v4898 = vunpack.c.l.b16 %v4698
  %v4899 = vunpack.c.l.b16 %v4699
  %v4900 = vunpack.c.l.b16 %v4700
  %v4901 = vunpack.c.l.b16 %v4701
  %v4902 = vunpack.c.l.b16 %v4702
  %v4903 = vunpack.c.l.b16 %v4703
  %v4904 = vunpack.c.l.b16 %v4704
  %v4905 = vunpack.c.l.b16 %v4705
  %v4906 = vunpack.c.l.b16 %v4706
  %v4907 = vunpack.c.l.b16 %v4707
  %v4908 = vunpack.c.l.b16 %v4708
  %v4909 = vunpack.c.l.b16 %v4709
  %v4910 = vunpack.c.l.b16 %v4710
  %v4911 = vunpack.c.l.b16 %v4711
  %v4912 = vunpack.c.l.b16 %v4712
  %v4913 = vunpack.c.l.b16 %v4713
  %v4914 = vunpack.c.l.b16 %v4714
  %v4915 = vunpack.c.l.b16 %v4715
  %v4916 = vunpack.c.l.b16 %v4716
  %v4917 = vunpack.c.l.b16 %v4717
  %v4918 = vunpack.c.l.b16 %v4718
  %v4919 = vunpack.c.l.b16 %v4719
  %v4920 = vunpack.c.l.b16 %v4720
  %v4921 = vunpack.c.l.b16 %v4721
  %v4922 = vunpack.c.l.b16 %v4722
  %v4923 = vunpack.c.l.b16 %v4723
  %v4924 = vunpack.c.l.b16 %v4724
  %v4925 = vunpack.c.l.b16 %v4725
  %v4926 = vunpack.c.l.b16 %v4726
  %v4927 = vunpack.c.l.b16 %v4727
  %v4928 = vunpack.c.l.b16 %v4728
  %v4929 = vunpack.c.l.b16 %v4729
  %v4930 = vunpack.c.l.b16 %v4730
  %v4931 = vunpack.c.l.b16 %v4731
  %v4932 = vunpack.c.l.b16 %v4732
  %v4933 = vunpack.c.l.b16 %v4733
  %v4934 = vunpack.c.l.b16 %v4734
  %v4935 = vunpack.c.l.b16 %v4735
  %v4936 = vunpack.c.l.b16 %v4736
  %v4937 = vunpack.c.l.b16 %v4737
  %v4938 = vunpack.c.l.b16 %v4738
  %v4939 = vunpack.c.l.b16 %v4739
  %v4940 = vunpack.c.l.b16 %v4740
  %v4941 = vunpack.c.l.b16 %v4741
  %v4942 = vunpack.c.l.b16 %v4742
  %v4943 = vunpack.c.l.b16 %v4743
  %v4944 = vunpack.c.l.b16 %v4744
  %v4945 = vunpack.c.l.b16 %v4745
  %v4946 = vunpack.c.l.b16 %v4746
  %v4947 = vunpack.c.l.b16 %v4747
  %v4948 = vunpack.c.l.b16 %v4748
  %v4949 = vunpack.c.l.b16 %v4749
  %v4950 = vunpack.c.l.b16 %v4750
  %v4951 = vunpack.c.l.b16 %v4751
  %v4952 = vunpack.c.l.b16 %v4752
  %v4953 = vunpack.c.l.b16 %v4753
  %v4954 = vunpack.c.l.b16 %v4754
  %v4955 = vunpack.c.l.b16 %v4755
  %v4956 = vunpack.c.l.b16 %v4756
  %v4957 = vunpack.c.l.b16 %v4757
  %v4958 = vunpack.c.l.b16 %v4758
  %v4959 = vunpack.c.l.b16 %v4759
  %v4960 = vunpack.c.l.b16 %v4760
  %v4961 = vunpack.c.l.b16 %v4761
  %v4962 = vunpack.c.l.b16 %v4762
  %v4963 = vunpack.c.l.b16 %v4763
  %v4964 = vpack.c.b16 %v4869, %v4868
  %v4965 = vpack.c.b16 %v4871, %v4870
  %v4966 = vpack.c.b16 %v4873, %v4872
  %v4967 = vpack.c.b16 %v4875, %v4874
  %v4968 = vpack.c.b16 %v4877, %v4876
  %v4969 = vpack.c.b16 %v4879, %v4878
  %v4970 = vpack.c.b16 %v4881, %v4880
  %v4971 = vpack.c.b16 %v4883, %v4882
  %v4972 = vpack.c.b16 %v4885, %v4884
  %v4973 = vpack.c.b16 %v4887, %v4886
  %v4974 = vpack.c.b16 %v4889, %v4888
  %v4975 = vpack.c.b16 %v4891, %v4890
  %v4976 = vpack.c.b16 %v4893, %v4892
  %v4977 = vpack.c.b16 %v4895, %v4894
  %v4978 = vpack.c.b16 %v4897, %v4896
  %v4979 = vpack.c.b16 %v4899, %v4898
  %v4980 = vpack.c.b16 %v4901, %v4900
  %v4981 = vpack.c.b16 %v4903, %v4902
  %v4982 = vpack.c.b16 %v4905, %v4904
  %v4983 = vpack.c.b16 %v4907, %v4906
  %v4984 = vpack.c.b16 %v4909, %v4908
  %v4985 = vpack.c.b16 %v4911, %v4910
  %v4986 = vpack.c.b16 %v4913, %v4912
  %v4987 = vpack.c.b16 %v4915, %v4914
  %v4988 = vpack.c.b16 %v4917, %v4916
  %v4989 = vpack.c.b16 %v4919, %v4918
  %v4990 = vpack.c.b16 %v4921, %v4920
  %v4991 = vpack.c.b16 %v4923, %v4922
  %v4992 = vpack.c.b16 %v4925, %v4924
  %v4993 = vpack.c.b16 %v4927, %v4926
  %v4994 = vpack.c.b16 %v4929, %v4928
  %v4995 = vpack.c.b16 %v4931, %v4930
  %v4996 = vpack.c.b16 %v4933, %v4932
  %v4997 = vpack.c.b16 %v4935, %v4934
  %v4998 = vpack.c.b16 %v4937, %v4936
  %v4999 = vpack.c.b16 %v4939, %v4938
  %v5000 = vpack.c.b16 %v4941, %v4940
  %v5001 = vpack.c.b16 %v4943, %v4942
  %v5002 = vpack.c.b16 %v4945, %v4944
  %v5003 = vpack.c.b16 %v4947, %v4946
  %v5004 = vpack.c.b16 %v4949, %v4948
  %v5005 = vpack.c.b16 %v4951, %v4950
  %v5006 = vpack.c.b16 %v4953, %v4952
  %v5007 = vpack.c.b16 %v4955, %v4954
  %v5008 = vpack.c.b16 %v4957, %v4956
  %v5009 = vpack.c.b16 %v4959, %v4958
  %v5010 = vpack.c.b16 %v4961, %v4960
  %v5011 = vpack.c.b16 %v4963, %v4962
  %5060 = vmatprep.subr.bf16.mxu0 0
  %5061 = vmatpush1.bf16.msra.mxu0 %v4971
  %5062 = vmatprep.subr.bf16.mxu0 0
  %5063 = vmatpush1.bf16.msra.mxu0 %v4970
  %5064 = vmatprep.subr.bf16.mxu0 0
  %5065 = vmatpush1.bf16.msra.mxu0 %v4969
  %5066 = vmatprep.subr.bf16.mxu0 0
  %5067 = vmatpush1.bf16.msra.mxu0 %v4968
  %5068 = vmatprep.subr.bf16.mxu0 0
  %5069 = vmatpush1.bf16.msra.mxu0 %v4967
  %5070 = vmatprep.subr.bf16.mxu0 0
  %5071 = vmatpush1.bf16.msra.mxu0 %v4966
  %5072 = vmatprep.subr.bf16.mxu0 0
  %5073 = vmatpush1.bf16.msra.mxu0 %v4965
  %5074 = vmatprep.subr.bf16.mxu0 0
  %5075 = vmatpush1.bf16.msra.mxu0 %v4964
  %5076 = vmatprep.subr.bf16.mxu0 0
  %5077 = vmatpush2.bf16.msra.mxu0 %v4979
  %5078 = vmatprep.subr.bf16.mxu0 0
  %5079 = vmatpush2.bf16.msra.mxu0 %v4978
  %5080 = vmatprep.subr.bf16.mxu0 0
  %5081 = vmatpush2.bf16.msra.mxu0 %v4977
  %5082 = vmatprep.subr.bf16.mxu0 0
  %5083 = vmatpush2.bf16.msra.mxu0 %v4976
  %5084 = vmatprep.subr.bf16.mxu0 0
  %5085 = vmatpush2.bf16.msra.mxu0 %v4975
  %5086 = vmatprep.subr.bf16.mxu0 0
  %5087 = vmatpush2.bf16.msra.mxu0 %v4974
  %5088 = vmatprep.subr.bf16.mxu0 0
  %5089 = vmatpush2.bf16.msra.mxu0 %v4973
  %5090 = vmatprep.subr.bf16.mxu0 0
  %5091 = vmatpush2.bf16.msra.mxu0 %v4972
  %5092 = vmatprep.mubr.bf16.mxu0 %v4662
  %5093 = vmatmul.mubr.bf16.gmra.mxu0 %v4661
  %v5094 = vpop.f32.mrf.mxu0
  %v5095 = vadd.f32 %v4770, %v5094
  %v5096 = vpop.f32.mrf.mxu0
  %v5097 = vpop.f32.mrf.mxu0
  %v5098 = vadd.f32 %v4770, %v5097
  %v5099 = vpop.f32.mrf.mxu0
  %5100 = vdwg.mxu0
  %5101 = vmatprep.subr.bf16.mxu0 0
  %5102 = vmatpush1.bf16.msra.mxu0 %v4987
  %5103 = vmatprep.subr.bf16.mxu0 0
  %5104 = vmatpush1.bf16.msra.mxu0 %v4986
  %5105 = vmatprep.subr.bf16.mxu0 0
  %5106 = vmatpush1.bf16.msra.mxu0 %v4985
  %5107 = vmatprep.subr.bf16.mxu0 0
  %5108 = vmatpush1.bf16.msra.mxu0 %v4984
  %5109 = vmatprep.subr.bf16.mxu0 0
  %5110 = vmatpush1.bf16.msra.mxu0 %v4983
  %5111 = vmatprep.subr.bf16.mxu0 0
  %5112 = vmatpush1.bf16.msra.mxu0 %v4982
  %5113 = vmatprep.subr.bf16.mxu0 0
  %5114 = vmatpush1.bf16.msra.mxu0 %v4981
  %5115 = vmatprep.subr.bf16.mxu0 0
  %5116 = vmatpush1.bf16.msra.mxu0 %v4980
  %5117 = vmatprep.subr.bf16.mxu0 0
  %5118 = vmatpush2.bf16.msra.mxu0 %v4995
  %5119 = vmatprep.subr.bf16.mxu0 0
  %5120 = vmatpush2.bf16.msra.mxu0 %v4994
  %5121 = vmatprep.subr.bf16.mxu0 0
  %5122 = vmatpush2.bf16.msra.mxu0 %v4993
  %5123 = vmatprep.subr.bf16.mxu0 0
  %5124 = vmatpush2.bf16.msra.mxu0 %v4992
  %5125 = vmatprep.subr.bf16.mxu0 0
  %5126 = vmatpush2.bf16.msra.mxu0 %v4991
  %5127 = vmatprep.subr.bf16.mxu0 0
  %5128 = vmatpush2.bf16.msra.mxu0 %v4990
  %5129 = vmatprep.subr.bf16.mxu0 0
  %5130 = vmatpush2.bf16.msra.mxu0 %v4989
  %5131 = vmatprep.subr.bf16.mxu0 0
  %5132 = vmatpush2.bf16.msra.mxu0 %v4988
  %5133 = vmatprep.mubr.bf16.mxu0 %v4664
  %5134 = vmatmul.mubr.bf16.gmra.mxu0 %v4663
  %v5135 = vpop.f32.mrf.mxu0
  %v5136 = vadd.f32 %v5095, %v5135
  %v5137 = vpop.f32.mrf.mxu0
  %v5138 = vpop.f32.mrf.mxu0
  %v5139 = vadd.f32 %v5098, %v5138
  %v5140 = vpop.f32.mrf.mxu0
  %5141 = vdwg.mxu0
  %5142 = vmatprep.subr.bf16.mxu0 0
  %5143 = vmatpush1.bf16.msra.mxu0 %v5003
  %5144 = vmatprep.subr.bf16.mxu0 0
  %5145 = vmatpush1.bf16.msra.mxu0 %v5002
  %5146 = vmatprep.subr.bf16.mxu0 0
  %5147 = vmatpush1.bf16.msra.mxu0 %v5001
  %5148 = vmatprep.subr.bf16.mxu0 0
  %5149 = vmatpush1.bf16.msra.mxu0 %v5000
  %5150 = vmatprep.subr.bf16.mxu0 0
  %5151 = vmatpush1.bf16.msra.mxu0 %v4999
  %5152 = vmatprep.subr.bf16.mxu0 0
  %5153 = vmatpush1.bf16.msra.mxu0 %v4998
  %5154 = vmatprep.subr.bf16.mxu0 0
  %5155 = vmatpush1.bf16.msra.mxu0 %v4997
  %5156 = vmatprep.subr.bf16.mxu0 0
  %5157 = vmatpush1.bf16.msra.mxu0 %v4996
  %5158 = vmatprep.subr.bf16.mxu0 0
  %5159 = vmatpush2.bf16.msra.mxu0 %v5011
  %5160 = vmatprep.subr.bf16.mxu0 0
  %5161 = vmatpush2.bf16.msra.mxu0 %v5010
  %5162 = vmatprep.subr.bf16.mxu0 0
  %5163 = vmatpush2.bf16.msra.mxu0 %v5009
  %5164 = vmatprep.subr.bf16.mxu0 0
  %5165 = vmatpush2.bf16.msra.mxu0 %v5008
  %5166 = vmatprep.subr.bf16.mxu0 0
  %5167 = vmatpush2.bf16.msra.mxu0 %v5007
  %5168 = vmatprep.subr.bf16.mxu0 0
  %5169 = vmatpush2.bf16.msra.mxu0 %v5006
  %5170 = vmatprep.subr.bf16.mxu0 0
  %5171 = vmatpush2.bf16.msra.mxu0 %v5005
  %5172 = vmatprep.subr.bf16.mxu0 0
  %5173 = vmatpush2.bf16.msra.mxu0 %v5004
  %5174 = vmatprep.mubr.bf16.mxu0 %v4666
  %5175 = vmatmul.mubr.bf16.gmra.mxu0 %v4665
  %v5176 = vpop.f32.mrf.mxu0
  %v5177 = vadd.f32 %v5136, %v5176
  %v5178 = vpop.f32.mrf.mxu0
  %v5179 = vpop.f32.mrf.mxu0
  %v5180 = vadd.f32 %v5139, %v5179
  %v5181 = vpop.f32.mrf.mxu0
  %5182 = vdwg.mxu0
  %v5183 = vmax.f32 %v5177, 0.0
  %v5184 = vmax.f32 %v5180, 0.0
  %v5185 = vsel %vm1399, %v5183, 0.0
  %v5186 = vrot.slane %v5185, 4
  %v5187 = vadd.f32 %v5185, %v5186
  %v5188 = vrot.slane %v5187, 2
  %v5189 = vadd.f32 %v5187, %v5188
  %v5190 = vrot.slane %v5189, 1
  %v5191 = vadd.f32 %v5189, %v5190
  %v5192 = vmul.f32 %v5191, %v2636
  %v5195 = vrot.slane %v5183, 6
  %v5196 = vrot.slane %v5184, 6
  %v5197 = vsel %vm2640, %v5195, %v5196
  %v5199 = vsel %vm1399, %v5197, 0.0
  %v5200 = vrot.slane %v5199, 4
  %v5201 = vadd.f32 %v5199, %v5200
  %v5202 = vrot.slane %v5201, 2
  %v5203 = vadd.f32 %v5201, %v5202
  %v5204 = vrot.slane %v5203, 1
  %v5205 = vadd.f32 %v5203, %v5204
  %v5206 = vmul.f32 %v5205, %v2636
  %vm5207 = vcmask 1040384
  %v5208 = vsel %vm5207, %v2637, %v2652
  %v5209 = vsel %vm2640, %v5208, %v5192
  %v5210 = vsel %vm966, %v5209, %v5206
  %v5211 = vpack.c.bf16 %v5210, %v5210
  %v5212 = vld [vmem:[%s9] sm:$0xf]
  %v5213 = vld [vmem:[%s9 + $0x4] sm:$0xf]
  %v5214 = vld [vmem:[%s9 + $0x8] sm:$0xf]
  %v5215 = vld [vmem:[%s9 + $0xc] sm:$0xf]
  %v5216 = vld [vmem:[%s9 + $0x10] sm:$0xf]
  %v5217 = vld [vmem:[%s9 + $0x14] sm:$0xf]
  %v5218 = vld [vmem:[%s9 + $0x18] sm:$0xf]
  %v5219 = vld [vmem:[%s9 + $0x1c] sm:$0xf]
  %v5220 = vld [vmem:[%s9 + $0x20] sm:$0xf]
  %v5221 = vld [vmem:[%s9 + $0x24] sm:$0xf]
  %v5222 = vld [vmem:[%s9 + $0x28] sm:$0xf]
  %v5223 = vld [vmem:[%s9 + $0x2c] sm:$0xf]
  %v5224 = vld [vmem:[%s9 + $0x30] sm:$0xf]
  %v5225 = vld [vmem:[%s9 + $0x34] sm:$0xf]
  %v5226 = vld [vmem:[%s9 + $0x38] sm:$0xf]
  %v5227 = vld [vmem:[%s9 + $0x3c] sm:$0xf]
  %v5244 = vunpack.c.l.b16 %v5212
  %v5245 = vunpack.c.l.b16 %v5213
  %v5246 = vunpack.c.l.b16 %v5214
  %v5247 = vunpack.c.l.b16 %v5215
  %v5248 = vunpack.c.l.b16 %v5216
  %v5249 = vunpack.c.l.b16 %v5217
  %v5250 = vunpack.c.l.b16 %v5218
  %v5251 = vunpack.c.l.b16 %v5219
  %v5252 = vunpack.c.l.b16 %v5220
  %v5253 = vunpack.c.l.b16 %v5221
  %v5254 = vunpack.c.l.b16 %v5222
  %v5255 = vunpack.c.l.b16 %v5223
  %v5256 = vunpack.c.l.b16 %v5224
  %v5257 = vunpack.c.l.b16 %v5225
  %v5258 = vunpack.c.l.b16 %v5226
  %v5259 = vunpack.c.l.b16 %v5227
  %v5260 = vpack.c.b16 %v5245, %v5244
  %v5261 = vpack.c.b16 %v5247, %v5246
  %v5262 = vpack.c.b16 %v5249, %v5248
  %v5263 = vpack.c.b16 %v5251, %v5250
  %v5264 = vpack.c.b16 %v5253, %v5252
  %v5265 = vpack.c.b16 %v5255, %v5254
  %v5266 = vpack.c.b16 %v5257, %v5256
  %v5267 = vpack.c.b16 %v5259, %v5258
  %5276 = vmatprep.subr.bf16.mxu0 0
  %5277 = vmatpush1.bf16.msra.mxu0 %v5267
  %5278 = vmatprep.subr.bf16.mxu0 0
  %5279 = vmatpush1.bf16.msra.mxu0 %v5266
  %5280 = vmatprep.subr.bf16.mxu0 0
  %5281 = vmatpush1.bf16.msra.mxu0 %v5265
  %5282 = vmatprep.subr.bf16.mxu0 0
  %5283 = vmatpush1.bf16.msra.mxu0 %v5264
  %5284 = vmatprep.subr.bf16.mxu0 0
  %5285 = vmatpush1.bf16.msra.mxu0 %v5263
  %5286 = vmatprep.subr.bf16.mxu0 0
  %5287 = vmatpush1.bf16.msra.mxu0 %v5262
  %5288 = vmatprep.subr.bf16.mxu0 0
  %5289 = vmatpush1.bf16.msra.mxu0 %v5261
  %5290 = vmatprep.subr.bf16.mxu0 0
  %5291 = vmatpush1.bf16.msra.mxu0 %v5260
  %5292 = vmatprep.subr.bf16.mxu0 0
  %5293 = vmatpush2.bf16.msra.mxu0 0
  %5294 = vmatprep.subr.bf16.mxu0 0
  %5295 = vmatpush2.bf16.msra.mxu0 0
  %5296 = vmatprep.subr.bf16.mxu0 0
  %5297 = vmatpush2.bf16.msra.mxu0 0
  %5298 = vmatprep.subr.bf16.mxu0 0
  %5299 = vmatpush2.bf16.msra.mxu0 0
  %5300 = vmatprep.subr.bf16.mxu0 0
  %5301 = vmatpush2.bf16.msra.mxu0 0
  %5302 = vmatprep.subr.bf16.mxu0 0
  %5303 = vmatpush2.bf16.msra.mxu0 0
  %5304 = vmatprep.subr.bf16.mxu0 0
  %5305 = vmatpush2.bf16.msra.mxu0 0
  %5306 = vmatprep.subr.bf16.mxu0 0
  %5307 = vmatpush2.bf16.msra.mxu0 0
  %5308 = vmatprep.mubr.bf16.mxu0 0
  %5309 = vmatmul.mubr.bf16.gmra.mxu0 %v5211
  %v5310 = vpop.f32.mrf.mxu0
  %v5311 = vadd.f32 0.0, %v5310
  %v5312 = vpop.f32.mrf.mxu0
  %v5313 = vpop.f32.mrf.mxu0
  %v5314 = vpop.f32.mrf.mxu0
  %5315 = vdwg.mxu0
  %v5316 = vmax.f32 %v5311, 0.0
  %v5317 = vpack.c.bf16 %v5316, %v5316
  %v5318 = vld [vmem:[%s10] sm:$0xf]
  %vm5319 = vcmask 64512
  %v5321 = vsel %vm5319, %v5317, 0
  %vm5323 = vcmask 1043456
  %v5325 = vsel %vm5323, %v5318, 0
  %5327 = vmatprep.subr.bf16.mxu0 0
  %5328 = vmatpush1.bf16.msra.mxu0 0
  %5329 = vmatprep.subr.bf16.mxu0 0
  %5330 = vmatpush1.bf16.msra.mxu0 0
  %5331 = vmatprep.subr.bf16.mxu0 0
  %5332 = vmatpush1.bf16.msra.mxu0 0
  %5333 = vmatprep.subr.bf16.mxu0 0
  %5334 = vmatpush1.bf16.msra.mxu0 0
  %5335 = vmatprep.subr.bf16.mxu0 0
  %5336 = vmatpush1.bf16.msra.mxu0 0
  %5337 = vmatprep.subr.bf16.mxu0 0
  %5338 = vmatpush1.bf16.msra.mxu0 0
  %5339 = vmatprep.subr.bf16.mxu0 0
  %5340 = vmatpush1.bf16.msra.mxu0 0
  %5341 = vmatprep.subr.bf16.mxu0 0
  %5342 = vmatpush1.bf16.msra.mxu0 %v5325
  %5343 = vmatprep.subr.bf16.mxu0 0
  %5344 = vmatpush2.bf16.msra.mxu0 0
  %5345 = vmatprep.subr.bf16.mxu0 0
  %5346 = vmatpush2.bf16.msra.mxu0 0
  %5347 = vmatprep.subr.bf16.mxu0 0
  %5348 = vmatpush2.bf16.msra.mxu0 0
  %5349 = vmatprep.subr.bf16.mxu0 0
  %5350 = vmatpush2.bf16.msra.mxu0 0
  %5351 = vmatprep.subr.bf16.mxu0 0
  %5352 = vmatpush2.bf16.msra.mxu0 0
  %5353 = vmatprep.subr.bf16.mxu0 0
  %5354 = vmatpush2.bf16.msra.mxu0 0
  %5355 = vmatprep.subr.bf16.mxu0 0
  %5356 = vmatpush2.bf16.msra.mxu0 0
  %5357 = vmatprep.subr.bf16.mxu0 0
  %5358 = vmatpush2.bf16.msra.mxu0 0
  %5359 = vmatprep.mubr.bf16.mxu0 0
  %5360 = vmatmul.mubr.bf16.gmra.mxu0 %v5321
  %v5361 = vpop.f32.mrf.mxu0
  %v5362 = vadd.f32 0.0, %v5361
  %v5363 = vpop.f32.mrf.mxu0
  %v5364 = vpop.f32.mrf.mxu0
  %v5365 = vpop.f32.mrf.mxu0
  %5366 = vdwg.mxu0
  %v5367 = vxor.u32 %v5362, 2147483648
  %v5368 = vmul.f32 %v5367, 1.442695
  %v5369 = vpow.pop %v5368
  %v5370 = vadd.f32 %v5369, 1.0
  %v5371 = vrcp.pop %v5370
  %v5372 = vmul.f32 1.0, %v5371
  %v5373 = vlaneseq
  %v5374 = vshrl.u32 %v5373, 7
  %v5375 = vsub.s32 0, %v5374
  %v5376 = vrot.slane %v5372, %v5375
  %v5377 = vmul.f32 %v2627, %v5376
  %v5378 = vsel %vm1399, %v5377, -inf
  %v5379 = vrot.slane %v5378, 4
  %v5380 = vmax.f32 %v5378, %v5379
  %v5381 = vrot.slane %v5380, 2
  %v5382 = vmax.f32 %v5380, %v5381
  %v5383 = vrot.slane %v5382, 1
  %v5384 = vmax.f32 %v5382, %v5383
  %v5385 = vlaneseq
  %v5386 = vshrl.u32 %v5385, 7
  %v5387 = vsub.s32 2, %v5386
  %v5388 = vrot.slane %v5372, %v5387
  %v5389 = vmul.f32 %v5183, %v5388
  %v5390 = vsel %vm1399, %v5389, -inf
  %v5391 = vrot.slane %v5390, 4
  %v5392 = vmax.f32 %v5390, %v5391
  %v5393 = vrot.slane %v5392, 2
  %v5394 = vmax.f32 %v5392, %v5393
  %v5395 = vrot.slane %v5394, 1
  %v5396 = vmax.f32 %v5394, %v5395
  %v5397 = vlaneseq
  %v5398 = vshrl.u32 %v5397, 7
  %v5399 = vsub.s32 1, %v5398
  %v5400 = vrot.slane %v5372, %v5399
  %v5401 = vmul.f32 %v2627, %v5400
  %v5402 = vmul.f32 %v2628, %v5400
  %vm5403 = vcmask 1047558
  %v5404 = vsel %vm5403, %v5401, -inf
  %v5405 = vsel %vm5323, %v5402, -inf
  %v5406 = vmax.f32 %v5404, %v5405
  %v5407 = vrot.slane %v5406, 4
  %v5408 = vmax.f32 %v5406, %v5407
  %v5409 = vrot.slane %v5408, 2
  %v5410 = vmax.f32 %v5408, %v5409
  %v5411 = vrot.slane %v5410, 1
  %v5412 = vmax.f32 %v5410, %v5411
  %v5413 = vlaneseq
  %v5414 = vshrl.u32 %v5413, 7
  %v5415 = vsub.s32 3, %v5414
  %v5416 = vrot.slane %v5372, %v5415
  %v5417 = vmul.f32 %v5183, %v5416
  %v5418 = vmul.f32 %v5184, %v5416
  %v5419 = vsel %vm5403, %v5417, -inf
  %v5420 = vsel %vm5323, %v5418, -inf
  %v5421 = vmax.f32 %v5419, %v5420
  %v5422 = vrot.slane %v5421, 4
  %v5423 = vmax.f32 %v5421, %v5422
  %v5424 = vrot.slane %v5423, 2
  %v5425 = vmax.f32 %v5423, %v5424
  %v5426 = vrot.slane %v5425, 1
  %v5427 = vmax.f32 %v5425, %v5426
  %v5430 = vrot.slane %v5412, 7
  %v5431 = vrot.slane %v5427, 7
  %v5434 = vsel %vm5207, %v5384, %v5430
  %v5435 = vsel %vm5207, %v5396, %v5431
  %v5438 = vcombine.low %v5434, %v5435
  %v5440 = vunpack.c.l.s4 1983009808
  %v5441 = vunpack.c.0.s8 %v5440
  %v5442 = vlaneseq
  %v5443 = vshrl.u32 %v5442, 7
  %v5444 = vsub.s32 %v5441, %v5443
  %v5445 = vrot.slane %v5438, %v5444
  %5447 = vst [vmem:[%s11] sm:$0xf] %v5445
  // Predicated region
  $region46: #{mimsfcn_sea_forward.1} parent=0 // pred_check
    _
  $region47: #{mimsfcn_sea_forward.1} parent=0 // pred_check_branch
    %5449 = sbr.rel (0) target = $region49
  $region48: #{mimsfcn_sea_forward.1} parent=0 // pred_region
    _
  $region49: #{mimsfcn_sea_forward.1} parent=0 // pred_fallthru
    _
  // Predicated region
  $region50: #{mimsfcn_sea_forward.1} parent=0 // pred_check
    _
  $region51: #{mimsfcn_sea_forward.1} parent=0 // pred_check_branch
    %5451 = sbr.rel (0) target = $region53
  $region52: #{mimsfcn_sea_forward.1} parent=0 // pred_region
    _
  $region53: #{mimsfcn_sea_forward.1} parent=0 // pred_fallthru
    _

</llo_original>
